<compile_context>
chip_gen: v7x
topology: tpu7x:2x2x1
jax: 0.10.0
libtpu: 0.0.40
codegen_flags: <defaults>
</compile_context>

<pallas_src>
import functools

import jax
import jax.numpy as jnp
import numpy as np
from jax.experimental import pallas as pl
from jax.experimental.pallas import tpu as pltpu


def _round_up(v, m):
    return (v + m - 1) // m * m


def _edgeconv_kernel(xt_ref, xf_ref, sqf_ref, wd_ref, w1b_ref, b1_ref, w2_ref,
                     b2_ref, o_ref, *, k, n_valid):
    # xt_ref : (1, T, Cp)    target-node tile for this grid step
    # xf_ref : (1, Np, Cp)   all nodes of this batch element
    # sqf_ref: (1, 1, Np)    ||x_j||^2 for all nodes (lane-dense)
    # wd_ref : (Cp, Cop)     W1a - W1b   (acts on x_i)
    # w1b_ref: (Cp, Cop)     W1b         (acts on x_j)
    # b1_ref : (1, Cop)
    # w2_ref : (Cop, Cop)
    # b2_ref : (1, Cop)
    # o_ref  : (1, T, Cop)
    xt = xt_ref[0].astype(jnp.float32)                    # [T, Cp]
    xf = xf_ref[0].astype(jnp.float32)                    # [Np, Cp]
    T = xt.shape[0]
    Np = xf.shape[0]

    # --- pairwise (row-shifted) squared distances for the whole tile: one MXU matmul
    gram = jax.lax.dot_general(
        xt, xf, (((1,), (1,)), ((), ())),
        preferred_element_type=jnp.float32)               # [T, Np] = x_i . x_j
    d = sqf_ref[0].astype(jnp.float32) - 2.0 * gram       # [T, Np]

    col_ids = jax.lax.broadcasted_iota(jnp.int32, (T, Np), 1)
    if n_valid < Np:                                      # mask padded source nodes
        d = jnp.where(col_ids < n_valid, d, jnp.inf)

    # --- hoisted matmuls (out of the k rounds)
    b1 = b1_ref[...].astype(jnp.float32)
    b2 = b2_ref[...].astype(jnp.float32)
    w2 = w2_ref[...].astype(jnp.float32)
    a_t = jnp.dot(xt, wd_ref[...].astype(jnp.float32),
                  preferred_element_type=jnp.float32) + b1          # [T, Cop]
    b_f = jnp.dot(xf, w1b_ref[...].astype(jnp.float32),
                  preferred_element_type=jnp.float32)               # [Np, Cop]

    # --- k selection rounds, fully vectorized across the T targets
    out = jnp.zeros(a_t.shape, jnp.float32)   # messages are post-ReLU (>= 0)
    dw = d
    for _ in range(k):
        dmin = jnp.min(dw, axis=1, keepdims=True)                   # [T, 1]
        amin = jnp.min(jnp.where(dw <= dmin, col_ids, Np),
                       axis=1, keepdims=True)                       # [T, 1]
        sel = col_ids == amin                                       # [T, Np] one-hot
        dw = jnp.where(sel, jnp.inf, dw)
        # one-hot gather of the selected neighbor's (x_j @ W1b) row via the MXU
        b_sel = jnp.dot(sel.astype(jnp.float32), b_f,
                        preferred_element_type=jnp.float32)         # [T, Cop]
        h = jnp.maximum(a_t + b_sel, 0.0)
        m = jnp.maximum(
            jnp.dot(h, w2, preferred_element_type=jnp.float32) + b2, 0.0)
        out = jnp.maximum(out, m)                                   # max-aggregation

    o_ref[0] = out.astype(o_ref.dtype)


def plain_dyn_block2d_forward(x, w1, b1, w2, b2, *, k=9):
    """x: [B, C, N, 1] -> [B, Cout, N, 1] (Cout == C for PlainDynBlock2d)."""
    B, C, N, _ = x.shape
    Cout = w2.shape[1]

    Cp = _round_up(C, 128)
    Cop = _round_up(Cout, 128)
    if N <= 128:
        T, N_pad = N, N
    else:
        T, N_pad = 128, _round_up(N, 128)

    x_bnc = jnp.transpose(x[..., 0], (0, 2, 1)).astype(jnp.float32)   # [B, N, C]
    x_p = jnp.pad(x_bnc, ((0, 0), (0, N_pad - N), (0, Cp - C)))       # [B, Np, Cp]
    sq_f = jnp.sum(x_p * x_p, axis=-1)[:, None, :]                    # [B, 1, Np]

    w1f = w1.astype(jnp.float32)
    wd = w1f[:C, :] - w1f[C:, :]        # acts on x_i
    w1b = w1f[C:, :]                    # acts on x_j
    pad_c = ((0, Cp - C), (0, Cop - Cout))
    wd_p = jnp.pad(wd, pad_c)
    w1b_p = jnp.pad(w1b, pad_c)
    b1_p = jnp.pad(b1.astype(jnp.float32), ((0, 0), (0, Cop - Cout)))
    w2_p = jnp.pad(w2.astype(jnp.float32), ((0, Cop - Cout), (0, Cop - Cout)))
    b2_p = jnp.pad(b2.astype(jnp.float32), ((0, 0), (0, Cop - Cout)))

    out = pl.pallas_call(
        functools.partial(_edgeconv_kernel, k=k, n_valid=N),
        out_shape=jax.ShapeDtypeStruct((B, N_pad, Cop), x_bnc.dtype),
        grid_spec=pltpu.PrefetchScalarGridSpec(
            num_scalar_prefetch=0,
            grid=(B, N_pad // T),
            in_specs=[
                pl.BlockSpec((1, T, Cp), lambda b, t: (b, t, 0)),       # target tile
                pl.BlockSpec((1, N_pad, Cp), lambda b, t: (b, 0, 0)),   # full nodes
                pl.BlockSpec((1, 1, N_pad), lambda b, t: (b, 0, 0)),    # ||x_j||^2
                pl.BlockSpec((Cp, Cop), lambda b, t: (0, 0)),           # wd
                pl.BlockSpec((Cp, Cop), lambda b, t: (0, 0)),           # w1b
                pl.BlockSpec((1, Cop), lambda b, t: (0, 0)),            # b1
                pl.BlockSpec((Cop, Cop), lambda b, t: (0, 0)),          # w2
                pl.BlockSpec((1, Cop), lambda b, t: (0, 0)),            # b2
            ],
            out_specs=pl.BlockSpec((1, T, Cop), lambda b, t: (b, t, 0)),
        ),
        compiler_params=pltpu.CompilerParams(
            dimension_semantics=("parallel", "parallel")),
    )(x_p, x_p, sq_f, wd_p, w1b_p, b1_p, w2_p, b2_p)

    out = out[:, :N, :Cout]                               # strip padding
    return jnp.transpose(out, (0, 2, 1))[..., None]       # [B, Cout, N, 1]


def reference_forward(x, w1, b1, w2, b2, *, k=9):
    """Pure-JAX reference of DynamicEdgeConvLayer.forward (norm=None, aggr='max')."""
    x_bnc = jnp.transpose(x[..., 0], (0, 2, 1))            # [B, N, C]

    def per_batch(xb):
        sq = jnp.sum(xb * xb, axis=-1)
        dist = sq[:, None] + sq[None, :] - 2.0 * (xb @ xb.T)
        idx = jnp.argsort(dist, axis=-1)[:, :k]            # [N, k] (self included)
        xj = xb[idx]                                       # [N, k, C]
        xi = jnp.broadcast_to(xb[:, None, :], xj.shape)
        e = jnp.concatenate([xi, xj - xi], axis=-1)        # [N, k, 2C]
        h = jax.nn.relu(e @ w1 + b1[0])
        m = jax.nn.relu(h @ w2 + b2[0])
        return jnp.max(m, axis=1)                          # [N, Cout]

    out = jax.vmap(per_batch)(x_bnc)                       # [B, N, Cout]
    return jnp.transpose(out, (0, 2, 1))[..., None]


if __name__ == "__main__":
    B, C, N = 2, 4, 16        # in_channels = out_channels = C
    K = 9                     # kernel_size default of PlainDynBlock2d

    key = jax.random.PRNGKey(0)
    kx, k1, k2, k3, k4 = jax.random.split(key, 5)

    x = jax.random.normal(kx, (B, C, N, 1), dtype=jnp.float32)

    # Deterministic synthetic params for:
    #   nn.Linear(2C, C, bias=True) -> ReLU -> nn.Linear(C, C, bias=True) -> ReLU
    w1 = jax.random.normal(k1, (2 * C, C), dtype=jnp.float32) * 0.3   # = torch weight.T
    b1 = jax.random.normal(k2, (1, C), dtype=jnp.float32) * 0.1
    w2 = jax.random.normal(k3, (C, C), dtype=jnp.float32) * 0.3
    b2 = jax.random.normal(k4, (1, C), dtype=jnp.float32) * 0.1

    out = jax.jit(functools.partial(plain_dyn_block2d_forward, k=K))(x, w1, b1, w2, b2)
    out = jax.block_until_ready(out)

    ref = reference_forward(x, w1, b1, w2, b2, k=K)

    assert out.shape == (B, C, N, 1), out.shape
    np.testing.assert_allclose(np.asarray(out), np.asarray(ref), rtol=1e-4, atol=1e-4)
    print("KERNEL_OK")
</pallas_src>

<mosaic_0001>
module attributes {stable_mosaic.version = 11 : i64} {
  func.func @_edgeconv_kernel(%arg0: i32, %arg1: i32, %arg2: memref<1x16x128xf32, #tpu.memory_space<vmem>>, %arg3: memref<1x16x128xf32, #tpu.memory_space<vmem>>, %arg4: memref<1x1x16xf32, #tpu.memory_space<vmem>>, %arg5: memref<128x128xf32, #tpu.memory_space<vmem>>, %arg6: memref<128x128xf32, #tpu.memory_space<vmem>>, %arg7: memref<1x128xf32, #tpu.memory_space<vmem>>, %arg8: memref<128x128xf32, #tpu.memory_space<vmem>>, %arg9: memref<1x128xf32, #tpu.memory_space<vmem>>, %arg10: memref<1x16x128xf32, #tpu.memory_space<vmem>>) attributes {dimension_semantics = [#tpu.dimension_semantics<parallel>, #tpu.dimension_semantics<parallel>], iteration_bounds = array<i64: 2, 1>, scalar_prefetch = 0 : i64, scratch_operands = 0 : i64, tpu.core_type = #tpu.core_type<tc>, window_params = [{transform_indices = @transform_0, window_bounds = array<i64: 1, 16, 128>}, {transform_indices = @transform_1, window_bounds = array<i64: 1, 16, 128>}, {transform_indices = @transform_2, window_bounds = array<i64: 1, 1, 16>}, {pipeline_mode = #tpu.pipeline_mode<synchronous>, transform_indices = @transform_3, window_bounds = array<i64: 128, 128>}, {pipeline_mode = #tpu.pipeline_mode<synchronous>, transform_indices = @transform_4, window_bounds = array<i64: 128, 128>}, {pipeline_mode = #tpu.pipeline_mode<synchronous>, transform_indices = @transform_5, window_bounds = array<i64: 1, 128>}, {pipeline_mode = #tpu.pipeline_mode<synchronous>, transform_indices = @transform_6, window_bounds = array<i64: 128, 128>}, {pipeline_mode = #tpu.pipeline_mode<synchronous>, transform_indices = @transform_7, window_bounds = array<i64: 1, 128>}, {transform_indices = @transform_8, window_bounds = array<i64: 1, 16, 128>}]} {
    %c0 = arith.constant 0 : index
    %c0_0 = arith.constant 0 : index
    %c0_1 = arith.constant 0 : index
    %0 = vector.load %arg2[%c0, %c0_0, %c0_1] : memref<1x16x128xf32, #tpu.memory_space<vmem>>, vector<1x16x128xf32>
    %1 = vector.shape_cast %0 : vector<1x16x128xf32> to vector<16x128xf32>
    %c0_2 = arith.constant 0 : index
    %c0_3 = arith.constant 0 : index
    %c0_4 = arith.constant 0 : index
    %2 = vector.load %arg3[%c0_2, %c0_3, %c0_4] : memref<1x16x128xf32, #tpu.memory_space<vmem>>, vector<1x16x128xf32>
    %3 = vector.shape_cast %2 : vector<1x16x128xf32> to vector<16x128xf32>
    %cst = arith.constant dense<0.000000e+00> : vector<16x16xf32>
    %4 = tpu.matmul %1, %3, %cst {dimension_numbers = #tpu.dot_dimension_numbers<[1], [1], [0], [0], [0, 0, 1, 0], [], []>} : vector<16x128xf32>, vector<16x128xf32>, vector<16x16xf32> -> vector<16x16xf32>
    %c0_5 = arith.constant 0 : index
    %c0_6 = arith.constant 0 : index
    %c0_7 = arith.constant 0 : index
    %5 = vector.load %arg4[%c0_5, %c0_6, %c0_7] : memref<1x1x16xf32, #tpu.memory_space<vmem>>, vector<1x1x16xf32>
    %6 = vector.shape_cast %5 : vector<1x1x16xf32> to vector<1x16xf32>
    %cst_8 = arith.constant 2.000000e+00 : f32
    %7 = vector.broadcast %cst_8 : f32 to vector<16x16xf32>
    %8 = arith.mulf %7, %4 : vector<16x16xf32>
    %9 = vector.broadcast %6 : vector<1x16xf32> to vector<16x16xf32>
    %10 = arith.subf %9, %8 : vector<16x16xf32>
    %11 = tpu.iota {dimensions = array<i32: 1>} : vector<16x16xi32>
    %c0_9 = arith.constant 0 : index
    %c0_10 = arith.constant 0 : index
    %12 = vector.load %arg7[%c0_9, %c0_10] : memref<1x128xf32, #tpu.memory_space<vmem>>, vector<1x128xf32>
    %c0_11 = arith.constant 0 : index
    %c0_12 = arith.constant 0 : index
    %13 = vector.load %arg9[%c0_11, %c0_12] : memref<1x128xf32, #tpu.memory_space<vmem>>, vector<1x128xf32>
    %c0_13 = arith.constant 0 : index
    %c0_14 = arith.constant 0 : index
    %14 = vector.load %arg8[%c0_13, %c0_14] : memref<128x128xf32, #tpu.memory_space<vmem>>, vector<128x128xf32>
    %c0_15 = arith.constant 0 : index
    %c0_16 = arith.constant 0 : index
    %15 = vector.load %arg5[%c0_15, %c0_16] : memref<128x128xf32, #tpu.memory_space<vmem>>, vector<128x128xf32>
    %cst_17 = arith.constant dense<0.000000e+00> : vector<16x128xf32>
    %16 = tpu.matmul %1, %15, %cst_17 {dimension_numbers = #tpu.dot_dimension_numbers<[1], [0], [0], [1], [0, 0, 1, 1], [], []>} : vector<16x128xf32>, vector<128x128xf32>, vector<16x128xf32> -> vector<16x128xf32>
    %17 = vector.broadcast %12 : vector<1x128xf32> to vector<16x128xf32>
    %18 = arith.addf %16, %17 : vector<16x128xf32>
    %c0_18 = arith.constant 0 : index
    %c0_19 = arith.constant 0 : index
    %19 = vector.load %arg6[%c0_18, %c0_19] : memref<128x128xf32, #tpu.memory_space<vmem>>, vector<128x128xf32>
    %cst_20 = arith.constant dense<0.000000e+00> : vector<16x128xf32>
    %20 = tpu.matmul %3, %19, %cst_20 {dimension_numbers = #tpu.dot_dimension_numbers<[1], [0], [0], [1], [0, 0, 1, 1], [], []>} : vector<16x128xf32>, vector<128x128xf32>, vector<16x128xf32> -> vector<16x128xf32>
    %cst_21 = arith.constant 0.000000e+00 : f32
    %21 = vector.broadcast %cst_21 : f32 to vector<16x128xf32>
    %cst_22 = arith.constant dense<0x7F800000> : vector<16xf32>
    %22 = vector.multi_reduction <minimumf>, %10, %cst_22 [1] : vector<16x16xf32> to vector<16xf32>
    %23 = vector.shape_cast %22 : vector<16xf32> to vector<16x1xf32>
    %24 = vector.broadcast %23 : vector<16x1xf32> to vector<16x16xf32>
    %25 = arith.cmpf ole, %10, %24 : vector<16x16xf32>
    %c16_i32 = arith.constant 16 : i32
    %26 = vector.broadcast %c16_i32 : i32 to vector<16x16xi32>
    %27 = arith.select %25, %11, %26 : vector<16x16xi1>, vector<16x16xi32>
    %cst_23 = arith.constant dense<2147483647> : vector<16xi32>
    %28 = vector.multi_reduction <minsi>, %27, %cst_23 [1] : vector<16x16xi32> to vector<16xi32>
    %29 = vector.shape_cast %28 : vector<16xi32> to vector<16x1xi32>
    %30 = vector.broadcast %29 : vector<16x1xi32> to vector<16x16xi32>
    %31 = arith.cmpi eq, %11, %30 : vector<16x16xi32>
    %cst_24 = arith.constant 0x7F800000 : f32
    %32 = vector.broadcast %cst_24 : f32 to vector<16x16xf32>
    %33 = arith.select %31, %32, %10 : vector<16x16xi1>, vector<16x16xf32>
    %34 = arith.extui %31 : vector<16x16xi1> to vector<16x16xi32>
    %35 = arith.sitofp %34 : vector<16x16xi32> to vector<16x16xf32>
    %cst_25 = arith.constant dense<0.000000e+00> : vector<16x128xf32>
    %36 = tpu.matmul %35, %20, %cst_25 {dimension_numbers = #tpu.dot_dimension_numbers<[1], [0], [0], [1], [0, 0, 1, 1], [], []>} : vector<16x16xf32>, vector<16x128xf32>, vector<16x128xf32> -> vector<16x128xf32>
    %37 = arith.addf %18, %36 : vector<16x128xf32>
    %cst_26 = arith.constant 0.000000e+00 : f32
    %38 = vector.broadcast %cst_26 : f32 to vector<16x128xf32>
    %39 = arith.maximumf %37, %38 : vector<16x128xf32>
    %cst_27 = arith.constant dense<0.000000e+00> : vector<16x128xf32>
    %40 = tpu.matmul %39, %14, %cst_27 {dimension_numbers = #tpu.dot_dimension_numbers<[1], [0], [0], [1], [0, 0, 1, 1], [], []>} : vector<16x128xf32>, vector<128x128xf32>, vector<16x128xf32> -> vector<16x128xf32>
    %41 = vector.broadcast %13 : vector<1x128xf32> to vector<16x128xf32>
    %42 = arith.addf %40, %41 : vector<16x128xf32>
    %cst_28 = arith.constant 0.000000e+00 : f32
    %43 = vector.broadcast %cst_28 : f32 to vector<16x128xf32>
    %44 = arith.maximumf %42, %43 : vector<16x128xf32>
    %45 = arith.maximumf %21, %44 : vector<16x128xf32>
    %cst_29 = arith.constant dense<0x7F800000> : vector<16xf32>
    %46 = vector.multi_reduction <minimumf>, %33, %cst_29 [1] : vector<16x16xf32> to vector<16xf32>
    %47 = vector.shape_cast %46 : vector<16xf32> to vector<16x1xf32>
    %48 = vector.broadcast %47 : vector<16x1xf32> to vector<16x16xf32>
    %49 = arith.cmpf ole, %33, %48 : vector<16x16xf32>
    %c16_i32_30 = arith.constant 16 : i32
    %50 = vector.broadcast %c16_i32_30 : i32 to vector<16x16xi32>
    %51 = arith.select %49, %11, %50 : vector<16x16xi1>, vector<16x16xi32>
    %cst_31 = arith.constant dense<2147483647> : vector<16xi32>
    %52 = vector.multi_reduction <minsi>, %51, %cst_31 [1] : vector<16x16xi32> to vector<16xi32>
    %53 = vector.shape_cast %52 : vector<16xi32> to vector<16x1xi32>
    %54 = vector.broadcast %53 : vector<16x1xi32> to vector<16x16xi32>
    %55 = arith.cmpi eq, %11, %54 : vector<16x16xi32>
    %cst_32 = arith.constant 0x7F800000 : f32
    %56 = vector.broadcast %cst_32 : f32 to vector<16x16xf32>
    %57 = arith.select %55, %56, %33 : vector<16x16xi1>, vector<16x16xf32>
    %58 = arith.extui %55 : vector<16x16xi1> to vector<16x16xi32>
    %59 = arith.sitofp %58 : vector<16x16xi32> to vector<16x16xf32>
    %cst_33 = arith.constant dense<0.000000e+00> : vector<16x128xf32>
    %60 = tpu.matmul %59, %20, %cst_33 {dimension_numbers = #tpu.dot_dimension_numbers<[1], [0], [0], [1], [0, 0, 1, 1], [], []>} : vector<16x16xf32>, vector<16x128xf32>, vector<16x128xf32> -> vector<16x128xf32>
    %61 = arith.addf %18, %60 : vector<16x128xf32>
    %cst_34 = arith.constant 0.000000e+00 : f32
    %62 = vector.broadcast %cst_34 : f32 to vector<16x128xf32>
    %63 = arith.maximumf %61, %62 : vector<16x128xf32>
    %cst_35 = arith.constant dense<0.000000e+00> : vector<16x128xf32>
    %64 = tpu.matmul %63, %14, %cst_35 {dimension_numbers = #tpu.dot_dimension_numbers<[1], [0], [0], [1], [0, 0, 1, 1], [], []>} : vector<16x128xf32>, vector<128x128xf32>, vector<16x128xf32> -> vector<16x128xf32>
    %65 = vector.broadcast %13 : vector<1x128xf32> to vector<16x128xf32>
    %66 = arith.addf %64, %65 : vector<16x128xf32>
    %cst_36 = arith.constant 0.000000e+00 : f32
    %67 = vector.broadcast %cst_36 : f32 to vector<16x128xf32>
    %68 = arith.maximumf %66, %67 : vector<16x128xf32>
    %69 = arith.maximumf %45, %68 : vector<16x128xf32>
    %cst_37 = arith.constant dense<0x7F800000> : vector<16xf32>
    %70 = vector.multi_reduction <minimumf>, %57, %cst_37 [1] : vector<16x16xf32> to vector<16xf32>
    %71 = vector.shape_cast %70 : vector<16xf32> to vector<16x1xf32>
    %72 = vector.broadcast %71 : vector<16x1xf32> to vector<16x16xf32>
    %73 = arith.cmpf ole, %57, %72 : vector<16x16xf32>
    %c16_i32_38 = arith.constant 16 : i32
    %74 = vector.broadcast %c16_i32_38 : i32 to vector<16x16xi32>
    %75 = arith.select %73, %11, %74 : vector<16x16xi1>, vector<16x16xi32>
    %cst_39 = arith.constant dense<2147483647> : vector<16xi32>
    %76 = vector.multi_reduction <minsi>, %75, %cst_39 [1] : vector<16x16xi32> to vector<16xi32>
    %77 = vector.shape_cast %76 : vector<16xi32> to vector<16x1xi32>
    %78 = vector.broadcast %77 : vector<16x1xi32> to vector<16x16xi32>
    %79 = arith.cmpi eq, %11, %78 : vector<16x16xi32>
    %cst_40 = arith.constant 0x7F800000 : f32
    %80 = vector.broadcast %cst_40 : f32 to vector<16x16xf32>
    %81 = arith.select %79, %80, %57 : vector<16x16xi1>, vector<16x16xf32>
    %82 = arith.extui %79 : vector<16x16xi1> to vector<16x16xi32>
    %83 = arith.sitofp %82 : vector<16x16xi32> to vector<16x16xf32>
    %cst_41 = arith.constant dense<0.000000e+00> : vector<16x128xf32>
    %84 = tpu.matmul %83, %20, %cst_41 {dimension_numbers = #tpu.dot_dimension_numbers<[1], [0], [0], [1], [0, 0, 1, 1], [], []>} : vector<16x16xf32>, vector<16x128xf32>, vector<16x128xf32> -> vector<16x128xf32>
    %85 = arith.addf %18, %84 : vector<16x128xf32>
    %cst_42 = arith.constant 0.000000e+00 : f32
    %86 = vector.broadcast %cst_42 : f32 to vector<16x128xf32>
    %87 = arith.maximumf %85, %86 : vector<16x128xf32>
    %cst_43 = arith.constant dense<0.000000e+00> : vector<16x128xf32>
    %88 = tpu.matmul %87, %14, %cst_43 {dimension_numbers = #tpu.dot_dimension_numbers<[1], [0], [0], [1], [0, 0, 1, 1], [], []>} : vector<16x128xf32>, vector<128x128xf32>, vector<16x128xf32> -> vector<16x128xf32>
    %89 = vector.broadcast %13 : vector<1x128xf32> to vector<16x128xf32>
    %90 = arith.addf %88, %89 : vector<16x128xf32>
    %cst_44 = arith.constant 0.000000e+00 : f32
    %91 = vector.broadcast %cst_44 : f32 to vector<16x128xf32>
    %92 = arith.maximumf %90, %91 : vector<16x128xf32>
    %93 = arith.maximumf %69, %92 : vector<16x128xf32>
    %cst_45 = arith.constant dense<0x7F800000> : vector<16xf32>
    %94 = vector.multi_reduction <minimumf>, %81, %cst_45 [1] : vector<16x16xf32> to vector<16xf32>
    %95 = vector.shape_cast %94 : vector<16xf32> to vector<16x1xf32>
    %96 = vector.broadcast %95 : vector<16x1xf32> to vector<16x16xf32>
    %97 = arith.cmpf ole, %81, %96 : vector<16x16xf32>
    %c16_i32_46 = arith.constant 16 : i32
    %98 = vector.broadcast %c16_i32_46 : i32 to vector<16x16xi32>
    %99 = arith.select %97, %11, %98 : vector<16x16xi1>, vector<16x16xi32>
    %cst_47 = arith.constant dense<2147483647> : vector<16xi32>
    %100 = vector.multi_reduction <minsi>, %99, %cst_47 [1] : vector<16x16xi32> to vector<16xi32>
    %101 = vector.shape_cast %100 : vector<16xi32> to vector<16x1xi32>
    %102 = vector.broadcast %101 : vector<16x1xi32> to vector<16x16xi32>
    %103 = arith.cmpi eq, %11, %102 : vector<16x16xi32>
    %cst_48 = arith.constant 0x7F800000 : f32
    %104 = vector.broadcast %cst_48 : f32 to vector<16x16xf32>
    %105 = arith.select %103, %104, %81 : vector<16x16xi1>, vector<16x16xf32>
    %106 = arith.extui %103 : vector<16x16xi1> to vector<16x16xi32>
    %107 = arith.sitofp %106 : vector<16x16xi32> to vector<16x16xf32>
    %cst_49 = arith.constant dense<0.000000e+00> : vector<16x128xf32>
    %108 = tpu.matmul %107, %20, %cst_49 {dimension_numbers = #tpu.dot_dimension_numbers<[1], [0], [0], [1], [0, 0, 1, 1], [], []>} : vector<16x16xf32>, vector<16x128xf32>, vector<16x128xf32> -> vector<16x128xf32>
    %109 = arith.addf %18, %108 : vector<16x128xf32>
    %cst_50 = arith.constant 0.000000e+00 : f32
    %110 = vector.broadcast %cst_50 : f32 to vector<16x128xf32>
    %111 = arith.maximumf %109, %110 : vector<16x128xf32>
    %cst_51 = arith.constant dense<0.000000e+00> : vector<16x128xf32>
    %112 = tpu.matmul %111, %14, %cst_51 {dimension_numbers = #tpu.dot_dimension_numbers<[1], [0], [0], [1], [0, 0, 1, 1], [], []>} : vector<16x128xf32>, vector<128x128xf32>, vector<16x128xf32> -> vector<16x128xf32>
    %113 = vector.broadcast %13 : vector<1x128xf32> to vector<16x128xf32>
    %114 = arith.addf %112, %113 : vector<16x128xf32>
    %cst_52 = arith.constant 0.000000e+00 : f32
    %115 = vector.broadcast %cst_52 : f32 to vector<16x128xf32>
    %116 = arith.maximumf %114, %115 : vector<16x128xf32>
    %117 = arith.maximumf %93, %116 : vector<16x128xf32>
    %cst_53 = arith.constant dense<0x7F800000> : vector<16xf32>
    %118 = vector.multi_reduction <minimumf>, %105, %cst_53 [1] : vector<16x16xf32> to vector<16xf32>
    %119 = vector.shape_cast %118 : vector<16xf32> to vector<16x1xf32>
    %120 = vector.broadcast %119 : vector<16x1xf32> to vector<16x16xf32>
    %121 = arith.cmpf ole, %105, %120 : vector<16x16xf32>
    %c16_i32_54 = arith.constant 16 : i32
    %122 = vector.broadcast %c16_i32_54 : i32 to vector<16x16xi32>
    %123 = arith.select %121, %11, %122 : vector<16x16xi1>, vector<16x16xi32>
    %cst_55 = arith.constant dense<2147483647> : vector<16xi32>
    %124 = vector.multi_reduction <minsi>, %123, %cst_55 [1] : vector<16x16xi32> to vector<16xi32>
    %125 = vector.shape_cast %124 : vector<16xi32> to vector<16x1xi32>
    %126 = vector.broadcast %125 : vector<16x1xi32> to vector<16x16xi32>
    %127 = arith.cmpi eq, %11, %126 : vector<16x16xi32>
    %cst_56 = arith.constant 0x7F800000 : f32
    %128 = vector.broadcast %cst_56 : f32 to vector<16x16xf32>
    %129 = arith.select %127, %128, %105 : vector<16x16xi1>, vector<16x16xf32>
    %130 = arith.extui %127 : vector<16x16xi1> to vector<16x16xi32>
    %131 = arith.sitofp %130 : vector<16x16xi32> to vector<16x16xf32>
    %cst_57 = arith.constant dense<0.000000e+00> : vector<16x128xf32>
    %132 = tpu.matmul %131, %20, %cst_57 {dimension_numbers = #tpu.dot_dimension_numbers<[1], [0], [0], [1], [0, 0, 1, 1], [], []>} : vector<16x16xf32>, vector<16x128xf32>, vector<16x128xf32> -> vector<16x128xf32>
    %133 = arith.addf %18, %132 : vector<16x128xf32>
    %cst_58 = arith.constant 0.000000e+00 : f32
    %134 = vector.broadcast %cst_58 : f32 to vector<16x128xf32>
    %135 = arith.maximumf %133, %134 : vector<16x128xf32>
    %cst_59 = arith.constant dense<0.000000e+00> : vector<16x128xf32>
    %136 = tpu.matmul %135, %14, %cst_59 {dimension_numbers = #tpu.dot_dimension_numbers<[1], [0], [0], [1], [0, 0, 1, 1], [], []>} : vector<16x128xf32>, vector<128x128xf32>, vector<16x128xf32> -> vector<16x128xf32>
    %137 = vector.broadcast %13 : vector<1x128xf32> to vector<16x128xf32>
    %138 = arith.addf %136, %137 : vector<16x128xf32>
    %cst_60 = arith.constant 0.000000e+00 : f32
    %139 = vector.broadcast %cst_60 : f32 to vector<16x128xf32>
    %140 = arith.maximumf %138, %139 : vector<16x128xf32>
    %141 = arith.maximumf %117, %140 : vector<16x128xf32>
    %cst_61 = arith.constant dense<0x7F800000> : vector<16xf32>
    %142 = vector.multi_reduction <minimumf>, %129, %cst_61 [1] : vector<16x16xf32> to vector<16xf32>
    %143 = vector.shape_cast %142 : vector<16xf32> to vector<16x1xf32>
    %144 = vector.broadcast %143 : vector<16x1xf32> to vector<16x16xf32>
    %145 = arith.cmpf ole, %129, %144 : vector<16x16xf32>
    %c16_i32_62 = arith.constant 16 : i32
    %146 = vector.broadcast %c16_i32_62 : i32 to vector<16x16xi32>
    %147 = arith.select %145, %11, %146 : vector<16x16xi1>, vector<16x16xi32>
    %cst_63 = arith.constant dense<2147483647> : vector<16xi32>
    %148 = vector.multi_reduction <minsi>, %147, %cst_63 [1] : vector<16x16xi32> to vector<16xi32>
    %149 = vector.shape_cast %148 : vector<16xi32> to vector<16x1xi32>
    %150 = vector.broadcast %149 : vector<16x1xi32> to vector<16x16xi32>
    %151 = arith.cmpi eq, %11, %150 : vector<16x16xi32>
    %cst_64 = arith.constant 0x7F800000 : f32
    %152 = vector.broadcast %cst_64 : f32 to vector<16x16xf32>
    %153 = arith.select %151, %152, %129 : vector<16x16xi1>, vector<16x16xf32>
    %154 = arith.extui %151 : vector<16x16xi1> to vector<16x16xi32>
    %155 = arith.sitofp %154 : vector<16x16xi32> to vector<16x16xf32>
    %cst_65 = arith.constant dense<0.000000e+00> : vector<16x128xf32>
    %156 = tpu.matmul %155, %20, %cst_65 {dimension_numbers = #tpu.dot_dimension_numbers<[1], [0], [0], [1], [0, 0, 1, 1], [], []>} : vector<16x16xf32>, vector<16x128xf32>, vector<16x128xf32> -> vector<16x128xf32>
    %157 = arith.addf %18, %156 : vector<16x128xf32>
    %cst_66 = arith.constant 0.000000e+00 : f32
    %158 = vector.broadcast %cst_66 : f32 to vector<16x128xf32>
    %159 = arith.maximumf %157, %158 : vector<16x128xf32>
    %cst_67 = arith.constant dense<0.000000e+00> : vector<16x128xf32>
    %160 = tpu.matmul %159, %14, %cst_67 {dimension_numbers = #tpu.dot_dimension_numbers<[1], [0], [0], [1], [0, 0, 1, 1], [], []>} : vector<16x128xf32>, vector<128x128xf32>, vector<16x128xf32> -> vector<16x128xf32>
    %161 = vector.broadcast %13 : vector<1x128xf32> to vector<16x128xf32>
    %162 = arith.addf %160, %161 : vector<16x128xf32>
    %cst_68 = arith.constant 0.000000e+00 : f32
    %163 = vector.broadcast %cst_68 : f32 to vector<16x128xf32>
    %164 = arith.maximumf %162, %163 : vector<16x128xf32>
    %165 = arith.maximumf %141, %164 : vector<16x128xf32>
    %cst_69 = arith.constant dense<0x7F800000> : vector<16xf32>
    %166 = vector.multi_reduction <minimumf>, %153, %cst_69 [1] : vector<16x16xf32> to vector<16xf32>
    %167 = vector.shape_cast %166 : vector<16xf32> to vector<16x1xf32>
    %168 = vector.broadcast %167 : vector<16x1xf32> to vector<16x16xf32>
    %169 = arith.cmpf ole, %153, %168 : vector<16x16xf32>
    %c16_i32_70 = arith.constant 16 : i32
    %170 = vector.broadcast %c16_i32_70 : i32 to vector<16x16xi32>
    %171 = arith.select %169, %11, %170 : vector<16x16xi1>, vector<16x16xi32>
    %cst_71 = arith.constant dense<2147483647> : vector<16xi32>
    %172 = vector.multi_reduction <minsi>, %171, %cst_71 [1] : vector<16x16xi32> to vector<16xi32>
    %173 = vector.shape_cast %172 : vector<16xi32> to vector<16x1xi32>
    %174 = vector.broadcast %173 : vector<16x1xi32> to vector<16x16xi32>
    %175 = arith.cmpi eq, %11, %174 : vector<16x16xi32>
    %cst_72 = arith.constant 0x7F800000 : f32
    %176 = vector.broadcast %cst_72 : f32 to vector<16x16xf32>
    %177 = arith.select %175, %176, %153 : vector<16x16xi1>, vector<16x16xf32>
    %178 = arith.extui %175 : vector<16x16xi1> to vector<16x16xi32>
    %179 = arith.sitofp %178 : vector<16x16xi32> to vector<16x16xf32>
    %cst_73 = arith.constant dense<0.000000e+00> : vector<16x128xf32>
    %180 = tpu.matmul %179, %20, %cst_73 {dimension_numbers = #tpu.dot_dimension_numbers<[1], [0], [0], [1], [0, 0, 1, 1], [], []>} : vector<16x16xf32>, vector<16x128xf32>, vector<16x128xf32> -> vector<16x128xf32>
    %181 = arith.addf %18, %180 : vector<16x128xf32>
    %cst_74 = arith.constant 0.000000e+00 : f32
    %182 = vector.broadcast %cst_74 : f32 to vector<16x128xf32>
    %183 = arith.maximumf %181, %182 : vector<16x128xf32>
    %cst_75 = arith.constant dense<0.000000e+00> : vector<16x128xf32>
    %184 = tpu.matmul %183, %14, %cst_75 {dimension_numbers = #tpu.dot_dimension_numbers<[1], [0], [0], [1], [0, 0, 1, 1], [], []>} : vector<16x128xf32>, vector<128x128xf32>, vector<16x128xf32> -> vector<16x128xf32>
    %185 = vector.broadcast %13 : vector<1x128xf32> to vector<16x128xf32>
    %186 = arith.addf %184, %185 : vector<16x128xf32>
    %cst_76 = arith.constant 0.000000e+00 : f32
    %187 = vector.broadcast %cst_76 : f32 to vector<16x128xf32>
    %188 = arith.maximumf %186, %187 : vector<16x128xf32>
    %189 = arith.maximumf %165, %188 : vector<16x128xf32>
    %cst_77 = arith.constant dense<0x7F800000> : vector<16xf32>
    %190 = vector.multi_reduction <minimumf>, %177, %cst_77 [1] : vector<16x16xf32> to vector<16xf32>
    %191 = vector.shape_cast %190 : vector<16xf32> to vector<16x1xf32>
    %192 = vector.broadcast %191 : vector<16x1xf32> to vector<16x16xf32>
    %193 = arith.cmpf ole, %177, %192 : vector<16x16xf32>
    %c16_i32_78 = arith.constant 16 : i32
    %194 = vector.broadcast %c16_i32_78 : i32 to vector<16x16xi32>
    %195 = arith.select %193, %11, %194 : vector<16x16xi1>, vector<16x16xi32>
    %cst_79 = arith.constant dense<2147483647> : vector<16xi32>
    %196 = vector.multi_reduction <minsi>, %195, %cst_79 [1] : vector<16x16xi32> to vector<16xi32>
    %197 = vector.shape_cast %196 : vector<16xi32> to vector<16x1xi32>
    %198 = vector.broadcast %197 : vector<16x1xi32> to vector<16x16xi32>
    %199 = arith.cmpi eq, %11, %198 : vector<16x16xi32>
    %cst_80 = arith.constant 0x7F800000 : f32
    %200 = vector.broadcast %cst_80 : f32 to vector<16x16xf32>
    %201 = arith.select %199, %200, %177 : vector<16x16xi1>, vector<16x16xf32>
    %202 = arith.extui %199 : vector<16x16xi1> to vector<16x16xi32>
    %203 = arith.sitofp %202 : vector<16x16xi32> to vector<16x16xf32>
    %cst_81 = arith.constant dense<0.000000e+00> : vector<16x128xf32>
    %204 = tpu.matmul %203, %20, %cst_81 {dimension_numbers = #tpu.dot_dimension_numbers<[1], [0], [0], [1], [0, 0, 1, 1], [], []>} : vector<16x16xf32>, vector<16x128xf32>, vector<16x128xf32> -> vector<16x128xf32>
    %205 = arith.addf %18, %204 : vector<16x128xf32>
    %cst_82 = arith.constant 0.000000e+00 : f32
    %206 = vector.broadcast %cst_82 : f32 to vector<16x128xf32>
    %207 = arith.maximumf %205, %206 : vector<16x128xf32>
    %cst_83 = arith.constant dense<0.000000e+00> : vector<16x128xf32>
    %208 = tpu.matmul %207, %14, %cst_83 {dimension_numbers = #tpu.dot_dimension_numbers<[1], [0], [0], [1], [0, 0, 1, 1], [], []>} : vector<16x128xf32>, vector<128x128xf32>, vector<16x128xf32> -> vector<16x128xf32>
    %209 = vector.broadcast %13 : vector<1x128xf32> to vector<16x128xf32>
    %210 = arith.addf %208, %209 : vector<16x128xf32>
    %cst_84 = arith.constant 0.000000e+00 : f32
    %211 = vector.broadcast %cst_84 : f32 to vector<16x128xf32>
    %212 = arith.maximumf %210, %211 : vector<16x128xf32>
    %213 = arith.maximumf %189, %212 : vector<16x128xf32>
    %cst_85 = arith.constant dense<0x7F800000> : vector<16xf32>
    %214 = vector.multi_reduction <minimumf>, %201, %cst_85 [1] : vector<16x16xf32> to vector<16xf32>
    %215 = vector.shape_cast %214 : vector<16xf32> to vector<16x1xf32>
    %216 = vector.broadcast %215 : vector<16x1xf32> to vector<16x16xf32>
    %217 = arith.cmpf ole, %201, %216 : vector<16x16xf32>
    %c16_i32_86 = arith.constant 16 : i32
    %218 = vector.broadcast %c16_i32_86 : i32 to vector<16x16xi32>
    %219 = arith.select %217, %11, %218 : vector<16x16xi1>, vector<16x16xi32>
    %cst_87 = arith.constant dense<2147483647> : vector<16xi32>
    %220 = vector.multi_reduction <minsi>, %219, %cst_87 [1] : vector<16x16xi32> to vector<16xi32>
    %221 = vector.shape_cast %220 : vector<16xi32> to vector<16x1xi32>
    %222 = vector.broadcast %221 : vector<16x1xi32> to vector<16x16xi32>
    %223 = arith.cmpi eq, %11, %222 : vector<16x16xi32>
    %224 = arith.extui %223 : vector<16x16xi1> to vector<16x16xi32>
    %225 = arith.sitofp %224 : vector<16x16xi32> to vector<16x16xf32>
    %cst_88 = arith.constant dense<0.000000e+00> : vector<16x128xf32>
    %226 = tpu.matmul %225, %20, %cst_88 {dimension_numbers = #tpu.dot_dimension_numbers<[1], [0], [0], [1], [0, 0, 1, 1], [], []>} : vector<16x16xf32>, vector<16x128xf32>, vector<16x128xf32> -> vector<16x128xf32>
    %227 = arith.addf %18, %226 : vector<16x128xf32>
    %cst_89 = arith.constant 0.000000e+00 : f32
    %228 = vector.broadcast %cst_89 : f32 to vector<16x128xf32>
    %229 = arith.maximumf %227, %228 : vector<16x128xf32>
    %cst_90 = arith.constant dense<0.000000e+00> : vector<16x128xf32>
    %230 = tpu.matmul %229, %14, %cst_90 {dimension_numbers = #tpu.dot_dimension_numbers<[1], [0], [0], [1], [0, 0, 1, 1], [], []>} : vector<16x128xf32>, vector<128x128xf32>, vector<16x128xf32> -> vector<16x128xf32>
    %231 = vector.broadcast %13 : vector<1x128xf32> to vector<16x128xf32>
    %232 = arith.addf %230, %231 : vector<16x128xf32>
    %cst_91 = arith.constant 0.000000e+00 : f32
    %233 = vector.broadcast %cst_91 : f32 to vector<16x128xf32>
    %234 = arith.maximumf %232, %233 : vector<16x128xf32>
    %235 = arith.maximumf %213, %234 : vector<16x128xf32>
    %c0_92 = arith.constant 0 : index
    %c0_93 = arith.constant 0 : index
    %c0_94 = arith.constant 0 : index
    %236 = vector.load %arg10[%c0_92, %c0_93, %c0_94] : memref<1x16x128xf32, #tpu.memory_space<vmem>>, vector<1x16x128xf32>
    %237 = vector.shape_cast %236 : vector<1x16x128xf32> to vector<16x128xf32>
    %238 = vector.shape_cast %235 : vector<16x128xf32> to vector<1x16x128xf32>
    tpu.vector_store %arg10[%c0_92, %c0_93, %c0_94], %238 {strides = array<i32>} : memref<1x16x128xf32, #tpu.memory_space<vmem>>, vector<1x16x128xf32>,
    return
  }
  func.func @transform_0(%arg0: i32, %arg1: i32) -> (i32, i32, i32) {
    %c0_i32 = arith.constant 0 : i32
    %c0_i32_0 = arith.constant 0 : i32
    return %arg0, %arg1, %c0_i32 : i32, i32, i32
  }
  func.func @transform_1(%arg0: i32, %arg1: i32) -> (i32, i32, i32) {
    %c0_i32 = arith.constant 0 : i32
    %c0_i32_0 = arith.constant 0 : i32
    %c0_i32_1 = arith.constant 0 : i32
    return %arg0, %c0_i32, %c0_i32_0 : i32, i32, i32
  }
  func.func @transform_2(%arg0: i32, %arg1: i32) -> (i32, i32, i32) {
    %c0_i32 = arith.constant 0 : i32
    %c0_i32_0 = arith.constant 0 : i32
    %c0_i32_1 = arith.constant 0 : i32
    return %arg0, %c0_i32, %c0_i32_0 : i32, i32, i32
  }
  func.func @transform_3(%arg0: i32, %arg1: i32) -> (i32, i32) {
    %c0_i32 = arith.constant 0 : i32
    %c0_i32_0 = arith.constant 0 : i32
    %c0_i32_1 = arith.constant 0 : i32
    return %c0_i32, %c0_i32_0 : i32, i32
  }
  func.func @transform_4(%arg0: i32, %arg1: i32) -> (i32, i32) {
    %c0_i32 = arith.constant 0 : i32
    %c0_i32_0 = arith.constant 0 : i32
    %c0_i32_1 = arith.constant 0 : i32
    return %c0_i32, %c0_i32_0 : i32, i32
  }
  func.func @transform_5(%arg0: i32, %arg1: i32) -> (i32, i32) {
    %c0_i32 = arith.constant 0 : i32
    %c0_i32_0 = arith.constant 0 : i32
    %c0_i32_1 = arith.constant 0 : i32
    return %c0_i32, %c0_i32_0 : i32, i32
  }
  func.func @transform_6(%arg0: i32, %arg1: i32) -> (i32, i32) {
    %c0_i32 = arith.constant 0 : i32
    %c0_i32_0 = arith.constant 0 : i32
    %c0_i32_1 = arith.constant 0 : i32
    return %c0_i32, %c0_i32_0 : i32, i32
  }
  func.func @transform_7(%arg0: i32, %arg1: i32) -> (i32, i32) {
    %c0_i32 = arith.constant 0 : i32
    %c0_i32_0 = arith.constant 0 : i32
    %c0_i32_1 = arith.constant 0 : i32
    return %c0_i32, %c0_i32_0 : i32, i32
  }
  func.func @transform_8(%arg0: i32, %arg1: i32) -> (i32, i32, i32) {
    %c0_i32 = arith.constant 0 : i32
    %c0_i32_0 = arith.constant 0 : i32
    return %arg0, %arg1, %c0_i32 : i32, i32, i32
  }
}

</mosaic_0001>

<llo_original>
// kernel: sub.1
$region0: #{sub.1}
  #allocation0 [shape = 's32[1]{0}', space=sflag, size = 0x4, scoped, tag = 'scoped memory for sub.1']
  %s0 = inlined_call_operand.vmem [shape: f32[4,4], index: 0, kind: input, shape index: {}]
  %s1 = inlined_call_operand.vmem [shape: f32[4,4], index: 1, kind: input, shape index: {}]
  %s2 = inlined_call_operand.vmem [shape: f32[4,4], index: 2, kind: output, shape index: {}]
  %v3 = vld [vmem:[%s0] sm:$0xf]
  %v4 = vld [vmem:[%s1] sm:$0xf]
  %5 = xla_tuple %v3, %v4
  %6 = xla_tuple %5
  %v7 = vsub.f32 %v3, %v4
  %8 = xla_tuple %v7
  %9 = vst [vmem:[%s2] sm:$0xf] %v7

// kernel: plain_dyn_block2d_forward.1
$region0: #{plain_dyn_block2d_forward.1}
  #allocation0 [shape = 'u32[]', space=smem, size = 0x4, offset = 0x4, fixed_abs, tag = 'smem constant byte address 0x4 - core index']
  #allocation1 [shape = 'u32[144,128]{1,0:T(1,128)}', space=vmem, size = 0x12000, scoped, tag = 'internal scratch']
  %s0 = inlined_call_operand.vmem [shape: f32[2,16,128], index: 0, kind: input, shape index: {}, may-alias: {0,1}]
  %s1 = inlined_call_operand.vmem [shape: f32[2,16,128], index: 1, kind: input, shape index: {}, may-alias: {0,1}]
  %s2 = inlined_call_operand.vmem [shape: f32[2,1,16], index: 2, kind: input, shape index: {}]
  %s3 = inlined_call_operand.vmem [shape: f32[128,128], index: 3, kind: input, shape index: {}]
  %s4 = inlined_call_operand.vmem [shape: f32[128,128], index: 4, kind: input, shape index: {}]
  %s5 = inlined_call_operand.vmem [shape: f32[1,128], index: 5, kind: input, shape index: {}]
  %s6 = inlined_call_operand.vmem [shape: f32[128,128], index: 6, kind: input, shape index: {}]
  %s7 = inlined_call_operand.vmem [shape: f32[1,128], index: 7, kind: input, shape index: {}]
  %s8 = inlined_call_operand.vmem [shape: f32[2,16,128], index: 8, kind: output, shape index: {}]
  %s9 = sld [smem:[#allocation0]]
  $region65: #{plain_dyn_block2d_forward.1} parent=0
    _
  %s11 = ssub.s32 1, %s9
  %s12 = scalar_select 0, %s11, %s9
  loop: start=0, step=1, limit=4
  $region2: #{plain_dyn_block2d_forward.1} parent=0 // loop_pre_header
    _
  $region3: #{plain_dyn_block2d_forward.1} parent=0 // loop_header
    %s14 = sphi 0, %s18
    %p15 = scmp.ge.s32.totalorder %s14, 4
    %s21 = sphi 0, %s33
    %s22 = sphi 0, %s29
    %s23 = sphi 0, %s21
    %s24 = sphi 0, %s22
    %s25 = sphi 0, %s23
    %s26 = sphi 0, %s24
    %s38 = sphi 0, %s40
    %s41 = sphi 0, %s38
    %s42 = sphi 0, %s41
    %s58 = sphi 0, %s42
    %s64 = sphi 0, %s66
    %s67 = sphi 0, %s64
    %s68 = sphi 0, %s67
    %s84 = sphi 0, %s68
    %s90 = sphi 0, %s92
    %s93 = sphi 0, %s90
    %s94 = sphi 0, %s93
    %s110 = sphi 0, %s94
    %s114 = sphi 0, %s114
    %s116 = sphi 0, %s114
    %s117 = sphi 0, %s116
    %s131 = sphi 0, %s117
    %s135 = sphi 0, %s135
    %s137 = sphi 0, %s135
    %s138 = sphi 0, %s137
    %s152 = sphi 0, %s138
    %s156 = sphi 0, %s156
    %s158 = sphi 0, %s156
    %s159 = sphi 0, %s158
    %s173 = sphi 0, %s159
    %s177 = sphi 0, %s177
    %s179 = sphi 0, %s177
    %s180 = sphi 0, %s179
    %s194 = sphi 0, %s180
    %s198 = sphi 0, %s198
    %s200 = sphi 0, %s198
    %s201 = sphi 0, %s200
    %s215 = sphi 0, %s201
    %s223 = sphi 0, %s225
    %s226 = sphi 0, %s223
    %s227 = sphi 0, %s226
    %s243 = sphi 0, %s227
  $region4: #{plain_dyn_block2d_forward.1} parent=0 // loop_header_branch
    %17 = sbr.rel (%p15) target = $region8
  $region5: #{plain_dyn_block2d_forward.1} parent=0 // loop_body
    %s19 = ssub.s32 %s14, 1
    %s20 = ssub.s32 %s14, 2
    %s27 = sadd.s32 1, %s22
    %p28 = scmp.ge.s32.totalorder %s27, 1
    %s29 = scalar_select %p28, 0, %s27
    %s30 = sadd.s32 1, %s21
    %s31 = scalar_select %p28, %s30, %s21
    %p32 = scmp.ge.s32.totalorder %s31, 2
    %s33 = scalar_select %p32, 0, %s31
    %s34 = ssub.s32 %s21, %s33
    %s35 = ssub.s32 %s22, %s29
    %s36 = sor.u32 %s34, %s35
    %p37 = scmp.eq.s32.totalorder %s36, 0
    %s39 = sadd.s32 %s38, 1
    %s40 = scalar_select %p37, %s38, %s39
    %p43 = pneg %p37
    %p44 = scmp.eq.s32.totalorder %s14, 1
    %p45 = por %p43, %p44
    %p46 = scmp.ne.s32.totalorder %s38, %s41
    %p47 = scmp.eq.s32.totalorder %s14, 0
    %p48 = por %p46, %p47
    %p49 = scmp.ne.s32.totalorder %s38, %s41
    %p50 = scmp.eq.s32.totalorder %s19, 1
    %p51 = por %p49, %p50
    %p52 = scmp.ne.s32.totalorder %s41, %s42
    %p53 = scmp.eq.s32.totalorder %s19, 0
    %p54 = por %p52, %p53
    %p55 = scmp.ne.s32.totalorder %s41, %s42
    %p56 = scmp.eq.s32.totalorder %s20, 1
    %p57 = por %p55, %p56
    %p59 = scmp.ne.s32.totalorder %s42, %s58
    %p60 = scmp.eq.s32.totalorder %s20, 0
    %p61 = por %p59, %p60
    %s62 = ssub.s32 %s21, %s33
    %p63 = scmp.eq.s32.totalorder %s62, 0
    %s65 = sadd.s32 %s64, 1
    %s66 = scalar_select %p63, %s64, %s65
    %p69 = pneg %p63
    %p70 = scmp.eq.s32.totalorder %s14, 1
    %p71 = por %p69, %p70
    %p72 = scmp.ne.s32.totalorder %s64, %s67
    %p73 = scmp.eq.s32.totalorder %s14, 0
    %p74 = por %p72, %p73
    %p75 = scmp.ne.s32.totalorder %s64, %s67
    %p76 = scmp.eq.s32.totalorder %s19, 1
    %p77 = por %p75, %p76
    %p78 = scmp.ne.s32.totalorder %s67, %s68
    %p79 = scmp.eq.s32.totalorder %s19, 0
    %p80 = por %p78, %p79
    %p81 = scmp.ne.s32.totalorder %s67, %s68
    %p82 = scmp.eq.s32.totalorder %s20, 1
    %p83 = por %p81, %p82
    %p85 = scmp.ne.s32.totalorder %s68, %s84
    %p86 = scmp.eq.s32.totalorder %s20, 0
    %p87 = por %p85, %p86
    %s88 = ssub.s32 %s21, %s33
    %p89 = scmp.eq.s32.totalorder %s88, 0
    %s91 = sadd.s32 %s90, 1
    %s92 = scalar_select %p89, %s90, %s91
    %p95 = pneg %p89
    %p96 = scmp.eq.s32.totalorder %s14, 1
    %p97 = por %p95, %p96
    %p98 = scmp.ne.s32.totalorder %s90, %s93
    %p99 = scmp.eq.s32.totalorder %s14, 0
    %p100 = por %p98, %p99
    %p101 = scmp.ne.s32.totalorder %s90, %s93
    %p102 = scmp.eq.s32.totalorder %s19, 1
    %p103 = por %p101, %p102
    %p104 = scmp.ne.s32.totalorder %s93, %s94
    %p105 = scmp.eq.s32.totalorder %s19, 0
    %p106 = por %p104, %p105
    %p107 = scmp.ne.s32.totalorder %s93, %s94
    %p108 = scmp.eq.s32.totalorder %s20, 1
    %p109 = por %p107, %p108
    %p111 = scmp.ne.s32.totalorder %s94, %s110
    %p112 = scmp.eq.s32.totalorder %s20, 0
    %p113 = por %p111, %p112
    %s115 = sadd.s32 %s114, 1
    %p118 = scmp.eq.s32.totalorder %s14, 1
    %p119 = scmp.ne.s32.totalorder %s114, %s116
    %p120 = scmp.eq.s32.totalorder %s14, 0
    %p121 = por %p119, %p120
    %p122 = scmp.ne.s32.totalorder %s114, %s116
    %p123 = scmp.eq.s32.totalorder %s19, 1
    %p124 = por %p122, %p123
    %p125 = scmp.ne.s32.totalorder %s116, %s117
    %p126 = scmp.eq.s32.totalorder %s19, 0
    %p127 = por %p125, %p126
    %p128 = scmp.ne.s32.totalorder %s116, %s117
    %p129 = scmp.eq.s32.totalorder %s20, 1
    %p130 = por %p128, %p129
    %p132 = scmp.ne.s32.totalorder %s117, %s131
    %p133 = scmp.eq.s32.totalorder %s20, 0
    %p134 = por %p132, %p133
    %s136 = sadd.s32 %s135, 1
    %p139 = scmp.eq.s32.totalorder %s14, 1
    %p140 = scmp.ne.s32.totalorder %s135, %s137
    %p141 = scmp.eq.s32.totalorder %s14, 0
    %p142 = por %p140, %p141
    %p143 = scmp.ne.s32.totalorder %s135, %s137
    %p144 = scmp.eq.s32.totalorder %s19, 1
    %p145 = por %p143, %p144
    %p146 = scmp.ne.s32.totalorder %s137, %s138
    %p147 = scmp.eq.s32.totalorder %s19, 0
    %p148 = por %p146, %p147
    %p149 = scmp.ne.s32.totalorder %s137, %s138
    %p150 = scmp.eq.s32.totalorder %s20, 1
    %p151 = por %p149, %p150
    %p153 = scmp.ne.s32.totalorder %s138, %s152
    %p154 = scmp.eq.s32.totalorder %s20, 0
    %p155 = por %p153, %p154
    %s157 = sadd.s32 %s156, 1
    %p160 = scmp.eq.s32.totalorder %s14, 1
    %p161 = scmp.ne.s32.totalorder %s156, %s158
    %p162 = scmp.eq.s32.totalorder %s14, 0
    %p163 = por %p161, %p162
    %p164 = scmp.ne.s32.totalorder %s156, %s158
    %p165 = scmp.eq.s32.totalorder %s19, 1
    %p166 = por %p164, %p165
    %p167 = scmp.ne.s32.totalorder %s158, %s159
    %p168 = scmp.eq.s32.totalorder %s19, 0
    %p169 = por %p167, %p168
    %p170 = scmp.ne.s32.totalorder %s158, %s159
    %p171 = scmp.eq.s32.totalorder %s20, 1
    %p172 = por %p170, %p171
    %p174 = scmp.ne.s32.totalorder %s159, %s173
    %p175 = scmp.eq.s32.totalorder %s20, 0
    %p176 = por %p174, %p175
    %s178 = sadd.s32 %s177, 1
    %p181 = scmp.eq.s32.totalorder %s14, 1
    %p182 = scmp.ne.s32.totalorder %s177, %s179
    %p183 = scmp.eq.s32.totalorder %s14, 0
    %p184 = por %p182, %p183
    %p185 = scmp.ne.s32.totalorder %s177, %s179
    %p186 = scmp.eq.s32.totalorder %s19, 1
    %p187 = por %p185, %p186
    %p188 = scmp.ne.s32.totalorder %s179, %s180
    %p189 = scmp.eq.s32.totalorder %s19, 0
    %p190 = por %p188, %p189
    %p191 = scmp.ne.s32.totalorder %s179, %s180
    %p192 = scmp.eq.s32.totalorder %s20, 1
    %p193 = por %p191, %p192
    %p195 = scmp.ne.s32.totalorder %s180, %s194
    %p196 = scmp.eq.s32.totalorder %s20, 0
    %p197 = por %p195, %p196
    %s199 = sadd.s32 %s198, 1
    %p202 = scmp.eq.s32.totalorder %s14, 1
    %p203 = scmp.ne.s32.totalorder %s198, %s200
    %p204 = scmp.eq.s32.totalorder %s14, 0
    %p205 = por %p203, %p204
    %p206 = scmp.ne.s32.totalorder %s198, %s200
    %p207 = scmp.eq.s32.totalorder %s19, 1
    %p208 = por %p206, %p207
    %p209 = scmp.ne.s32.totalorder %s200, %s201
    %p210 = scmp.eq.s32.totalorder %s19, 0
    %p211 = por %p209, %p210
    %p212 = scmp.ne.s32.totalorder %s200, %s201
    %p213 = scmp.eq.s32.totalorder %s20, 1
    %p214 = por %p212, %p213
    %p216 = scmp.ne.s32.totalorder %s201, %s215
    %p217 = scmp.eq.s32.totalorder %s20, 0
    %p218 = por %p216, %p217
    %s219 = ssub.s32 %s21, %s33
    %s220 = ssub.s32 %s22, %s29
    %s221 = sor.u32 %s219, %s220
    %p222 = scmp.eq.s32.totalorder %s221, 0
    %s224 = sadd.s32 %s223, 1
    %s225 = scalar_select %p222, %s223, %s224
    %p228 = pneg %p222
    %p229 = scmp.eq.s32.totalorder %s14, 1
    %p230 = por %p228, %p229
    %p231 = scmp.ne.s32.totalorder %s223, %s226
    %p232 = scmp.eq.s32.totalorder %s14, 0
    %p233 = por %p231, %p232
    %p234 = scmp.ne.s32.totalorder %s223, %s226
    %p235 = scmp.eq.s32.totalorder %s19, 1
    %p236 = por %p234, %p235
    %p237 = scmp.ne.s32.totalorder %s226, %s227
    %p238 = scmp.eq.s32.totalorder %s19, 0
    %p239 = por %p237, %p238
    %p240 = scmp.ne.s32.totalorder %s226, %s227
    %p241 = scmp.eq.s32.totalorder %s20, 1
    %p242 = por %p240, %p241
    %p244 = scmp.ne.s32.totalorder %s227, %s243
    %p245 = scmp.eq.s32.totalorder %s20, 0
    %p246 = por %p244, %p245
    %p247 = scmp.le.s32.totalorder 1, %s14
    %p248 = scmp.lt.s32.totalorder %s14, 3
    %p249 = pnand %p247, %p248
    %p250 = pneg %p249
    // Predicated region
    $region9: #{plain_dyn_block2d_forward.1} parent=5 // pred_check
      _
    $region10: #{plain_dyn_block2d_forward.1} parent=5 // pred_check_branch
      %252 = sbr.rel (%p249) target = $region12
    $region11: #{plain_dyn_block2d_forward.1} parent=5 // pred_region
      %s253 = ssub.s32 %s14, 1
      // Predicated region
      $region13: #{plain_dyn_block2d_forward.1} parent=11 // pred_check
        %p254 = pneg %p127
      $region14: #{plain_dyn_block2d_forward.1} parent=11 // pred_check_branch
        %256 = sbr.rel (%p254) target = $region16
      $region15: #{plain_dyn_block2d_forward.1} parent=11 // pred_region
        _
      $region16: #{plain_dyn_block2d_forward.1} parent=11 // pred_fallthru
        _
      // Predicated region
      $region17: #{plain_dyn_block2d_forward.1} parent=11 // pred_check
        %p257 = pneg %p148
      $region18: #{plain_dyn_block2d_forward.1} parent=11 // pred_check_branch
        %259 = sbr.rel (%p257) target = $region20
      $region19: #{plain_dyn_block2d_forward.1} parent=11 // pred_region
        _
      $region20: #{plain_dyn_block2d_forward.1} parent=11 // pred_fallthru
        _
      // Predicated region
      $region21: #{plain_dyn_block2d_forward.1} parent=11 // pred_check
        %p260 = pneg %p169
      $region22: #{plain_dyn_block2d_forward.1} parent=11 // pred_check_branch
        %262 = sbr.rel (%p260) target = $region24
      $region23: #{plain_dyn_block2d_forward.1} parent=11 // pred_region
        _
      $region24: #{plain_dyn_block2d_forward.1} parent=11 // pred_fallthru
        _
      // Predicated region
      $region25: #{plain_dyn_block2d_forward.1} parent=11 // pred_check
        %p263 = pneg %p190
      $region26: #{plain_dyn_block2d_forward.1} parent=11 // pred_check_branch
        %265 = sbr.rel (%p263) target = $region28
      $region27: #{plain_dyn_block2d_forward.1} parent=11 // pred_region
        _
      $region28: #{plain_dyn_block2d_forward.1} parent=11 // pred_fallthru
        _
      // Predicated region
      $region29: #{plain_dyn_block2d_forward.1} parent=11 // pred_check
        %p266 = pneg %p211
      $region30: #{plain_dyn_block2d_forward.1} parent=11 // pred_check_branch
        %268 = sbr.rel (%p266) target = $region32
      $region31: #{plain_dyn_block2d_forward.1} parent=11 // pred_region
        _
      $region32: #{plain_dyn_block2d_forward.1} parent=11 // pred_fallthru
        _
    $region12: #{plain_dyn_block2d_forward.1} parent=5 // pred_fallthru
      _
    %p269 = scmp.lt.s32.totalorder %s14, 2
    // Predicated region
    $region33: #{plain_dyn_block2d_forward.1} parent=5 // pred_check
      %p270 = pneg %p269
    $region34: #{plain_dyn_block2d_forward.1} parent=5 // pred_check_branch
      %272 = sbr.rel (%p270) target = $region36
    $region35: #{plain_dyn_block2d_forward.1} parent=5 // pred_region
      // Predicated region
      $region37: #{plain_dyn_block2d_forward.1} parent=35 // pred_check
        %p273 = pneg %p48
      $region38: #{plain_dyn_block2d_forward.1} parent=35 // pred_check_branch
        %275 = sbr.rel (%p273) target = $region40
      $region39: #{plain_dyn_block2d_forward.1} parent=35 // pred_region
        %s276 = smul.u32 2, %s22
        %p277 = scmp.lt.s32.totalorder %s21, 1
        %s278 = scalar_select %p277, %s21, 1
        %p279 = scmp.lt.s32.totalorder %s276, 1
        %s280 = scalar_select %p279, %s276, 1
        %s281 = smul.addr %s278, 2
        %s282 = sadd.s32 %s280, %s281
        %s283 = smul.addr %s282, 8
        %s284 = scalar_lea.vmem %s0, %s283
        %s285 = smul.u32 2, %s22
      $region40: #{plain_dyn_block2d_forward.1} parent=35 // pred_fallthru
        _
      // Predicated region
      $region41: #{plain_dyn_block2d_forward.1} parent=35 // pred_check
        %p286 = pneg %p74
      $region42: #{plain_dyn_block2d_forward.1} parent=35 // pred_check_branch
        %288 = sbr.rel (%p286) target = $region44
      $region43: #{plain_dyn_block2d_forward.1} parent=35 // pred_region
        %p289 = scmp.lt.s32.totalorder %s21, 1
        %s290 = scalar_select %p289, %s21, 1
        %s291 = smul.addr %s290, 2
        %s292 = smul.addr %s291, 8
        %s293 = scalar_lea.vmem %s1, %s292
      $region44: #{plain_dyn_block2d_forward.1} parent=35 // pred_fallthru
        _
      // Predicated region
      $region45: #{plain_dyn_block2d_forward.1} parent=35 // pred_check
        %p294 = pneg %p100
      $region46: #{plain_dyn_block2d_forward.1} parent=35 // pred_check_branch
        %296 = sbr.rel (%p294) target = $region48
      $region47: #{plain_dyn_block2d_forward.1} parent=35 // pred_region
        %p297 = scmp.lt.s32.totalorder %s21, 1
        %s298 = scalar_select %p297, %s21, 1
        %s299 = scalar_lea.vmem %s2, %s298
      $region48: #{plain_dyn_block2d_forward.1} parent=35 // pred_fallthru
        _
    $region36: #{plain_dyn_block2d_forward.1} parent=5 // pred_fallthru
      _
    %p300 = scmp.le.s32.totalorder 1, %s14
    %p301 = scmp.lt.s32.totalorder %s14, 3
    %p302 = pnand %p300, %p301
    %p303 = pneg %p302
    // Predicated region
    $region49: #{plain_dyn_block2d_forward.1} parent=5 // pred_check
      _
    $region50: #{plain_dyn_block2d_forward.1} parent=5 // pred_check_branch
      %305 = sbr.rel (%p302) target = $region52
    $region51: #{plain_dyn_block2d_forward.1} parent=5 // pred_region
      %s306 = ssub.s32 %s14, 1
      %s307 = smul.u32 2, %s24
      %p308 = scmp.lt.s32.totalorder %s23, 1
      %s309 = scalar_select %p308, %s23, 1
      %p310 = scmp.lt.s32.totalorder %s307, 1
      %s311 = scalar_select %p310, %s307, 1
      %s312 = smul.addr %s309, 2
      %s313 = sadd.s32 %s311, %s312
      %s314 = smul.addr %s313, 8
      %s315 = scalar_lea.vmem %s0, %s314
      %p316 = pneg %p54
      %p317 = pneg %p51
      %p318 = scmp.lt.s32.totalorder %s23, 1
      %s319 = scalar_select %p318, %s23, 1
      %s320 = smul.addr %s319, 2
      %s321 = smul.addr %s320, 8
      %s322 = scalar_lea.vmem %s1, %s321
      %p323 = pneg %p80
      %p324 = pneg %p77
      %p325 = scmp.lt.s32.totalorder %s23, 1
      %s326 = scalar_select %p325, %s23, 1
      %s327 = scalar_lea.vmem %s2, %s326
      %p328 = pneg %p106
      %p329 = pneg %p103
      %p330 = pneg %p127
      %p331 = pneg %p124
      %p332 = pneg %p148
      %p333 = pneg %p145
      %p334 = pneg %p169
      %p335 = pneg %p166
      %p336 = pneg %p190
      %p337 = pneg %p187
      %p338 = pneg %p211
      %p339 = pneg %p208
      %p340 = pneg %p239
      %p341 = pneg %p236
      %s342 = smul.u32 2, %s24
      %p343 = scmp.lt.s32.totalorder %s23, 1
      %s344 = scalar_select %p343, %s23, 1
      %p345 = scmp.lt.s32.totalorder %s342, 1
      %s346 = scalar_select %p345, %s342, 1
      %s347 = smul.addr %s344, 2
      %s348 = sadd.s32 %s346, %s347
      %s349 = smul.addr %s348, 8
      %s350 = scalar_lea.vmem %s8, %s349
      %s351 = smul.u32 2, %s24
      %p352 = scmp.lt.s32.totalorder %s23, 1
      %s353 = scalar_select %p352, %s23, 1
      %p354 = scmp.lt.s32.totalorder %s351, 1
      %s355 = scalar_select %p354, %s351, 1
      %s356 = smul.addr %s353, 2
      %s357 = sadd.s32 %s355, %s356
      %s358 = smul.addr %s357, 8
      %s359 = scalar_lea.vmem %s0, %s358
      %s360 = smul.u32 2, %s24
      %p361 = scmp.lt.s32.totalorder %s23, 1
      %s362 = scalar_select %p361, %s23, 1
      %s363 = smul.addr %s362, 2
      %s364 = smul.addr %s363, 8
      %s365 = scalar_lea.vmem %s1, %s364
      %p366 = scmp.lt.s32.totalorder %s23, 1
      %s367 = scalar_select %p366, %s23, 1
      %s368 = scalar_lea.vmem %s2, %s367
      %s369 = smul.u32 2, %s24
      %p370 = scmp.lt.s32.totalorder %s23, 1
      %s371 = scalar_select %p370, %s23, 1
      %p372 = scmp.lt.s32.totalorder %s369, 1
      %s373 = scalar_select %p372, %s369, 1
      %s374 = smul.addr %s371, 2
      %s375 = sadd.s32 %s373, %s374
      %s376 = smul.addr %s375, 8
      %s377 = scalar_lea.vmem %s8, %s376
      %s378 = smul.u32 2, %s24
      %v379 = vld [vmem:[%s359] sm:$0xff]
      %v380 = vld [vmem:[%s359 + $0x8] sm:$0xff]
      %v381 = vld [vmem:[%s365] sm:$0xff]
      %v382 = vld [vmem:[%s365 + $0x8] sm:$0xff]
      %383 = vmatprep.subr.mxu0 0.0
      %384 = vmatpush1.xpose.msra.mxu0 %v381
      %385 = vmatprep.subr.mxu0 0.0
      %386 = vmatpush1.xpose.msra.mxu0 %v382
      %387 = vmatprep.subr.mxu0 0.0
      %388 = vmatpush1.xpose.msra.mxu0 0.0
      %389 = vmatprep.subr.mxu0 0.0
      %390 = vmatpush1.xpose.msra.mxu0 0.0
      %391 = vmatprep.subr.mxu0 0.0
      %392 = vmatpush1.xpose.msra.mxu0 0.0
      %393 = vmatprep.subr.mxu0 0.0
      %394 = vmatpush1.xpose.msra.mxu0 0.0
      %395 = vmatprep.subr.mxu0 0.0
      %396 = vmatpush1.xpose.msra.mxu0 0.0
      %397 = vmatprep.subr.mxu0 0.0
      %398 = vmatpush1.xpose.msra.mxu0 0.0
      %399 = vmatprep.subr.mxu0 0.0
      %400 = vmatpush1.xpose.msra.mxu0 0.0
      %401 = vmatprep.subr.mxu0 0.0
      %402 = vmatpush1.xpose.msra.mxu0 0.0
      %403 = vmatprep.subr.mxu0 0.0
      %404 = vmatpush1.xpose.msra.mxu0 0.0
      %405 = vmatprep.subr.mxu0 0.0
      %406 = vmatpush1.xpose.msra.mxu0 0.0
      %407 = vmatprep.subr.mxu0 0.0
      %408 = vmatpush1.xpose.msra.mxu0 0.0
      %409 = vmatprep.subr.mxu0 0.0
      %410 = vmatpush1.xpose.msra.mxu0 0.0
      %411 = vmatprep.subr.mxu0 0.0
      %412 = vmatpush1.xpose.msra.mxu0 0.0
      %413 = vmatprep.subr.mxu0 0.0
      %414 = vmatpush1.xpose.msra.mxu0 0.0
      %415 = vmatprep.subr.mxu0 0.0
      %416 = vmatpush1.xpose.msra.mxu0 0.0
      %417 = vmatprep.subr.mxu0 0.0
      %418 = vmatpush1.xpose.msra.mxu0 0.0
      %419 = vmatprep.subr.mxu0 0.0
      %420 = vmatpush1.xpose.msra.mxu0 0.0
      %421 = vmatprep.subr.mxu0 0.0
      %422 = vmatpush1.xpose.msra.mxu0 0.0
      %423 = vmatprep.subr.mxu0 0.0
      %424 = vmatpush1.xpose.msra.mxu0 0.0
      %425 = vmatprep.subr.mxu0 0.0
      %426 = vmatpush1.xpose.msra.mxu0 0.0
      %427 = vmatprep.subr.mxu0 0.0
      %428 = vmatpush1.xpose.msra.mxu0 0.0
      %429 = vmatprep.subr.mxu0 0.0
      %430 = vmatpush1.xpose.msra.mxu0 0.0
      %431 = vmatprep.subr.mxu0 0.0
      %432 = vmatpush1.xpose.msra.mxu0 0.0
      %433 = vmatprep.subr.mxu0 0.0
      %434 = vmatpush1.xpose.msra.mxu0 0.0
      %435 = vmatprep.subr.mxu0 0.0
      %436 = vmatpush1.xpose.msra.mxu0 0.0
      %437 = vmatprep.subr.mxu0 0.0
      %438 = vmatpush1.xpose.msra.mxu0 0.0
      %439 = vmatprep.subr.mxu0 0.0
      %440 = vmatpush1.xpose.msra.mxu0 0.0
      %441 = vmatprep.subr.mxu0 0.0
      %442 = vmatpush1.xpose.msra.mxu0 0.0
      %443 = vmatprep.subr.mxu0 0.0
      %444 = vmatpush1.xpose.msra.mxu0 0.0
      %445 = vmatprep.subr.mxu0 0.0
      %446 = vmatpush1.xpose.msra.mxu0 0.0
      %447 = vmatprep.mubr.f32.mxu0 0.0
      %448 = vmatmul.mubr.f32.gmra.mrb[0].mxu0 %v379
      %v449 = vpop.f32.mrb[0].mxu0
      %v450 = vadd.f32 0.0, %v449
      %v451 = vpop.f32.mrb[0].mxu0
      %452 = vmatprep.mubr.f32.mxu0 0.0
      %453 = vmatmul.mubr.f32.gmra.mrb[0].mxu0 %v380
      %v454 = vpop.f32.mrb[0].mxu0
      %v455 = vadd.f32 0.0, %v454
      %v456 = vpop.f32.mrb[0].mxu0
      %457 = vdwg.mxu0
      %v458 = vld [vmem:[%s368] sm:$0x1]
      %v459 = vmul.f32 %v450, 2.0
      %v460 = vmul.f32 %v455, 2.0
      %v462 = vlaneseq
      %v463 = vshrl.u32 %v462, 7
      %v464 = vsub.s32 0, %v463
      %v465 = vrot.slane %v458, %v464
      %v467 = vsub.f32 %v465, %v459
      %v468 = vsub.f32 %v465, %v460
      %v469 = vlaneseq
      %v470 = vand.u32 %v469, 127
      %v471 = vld [vmem:[%s5] sm:$0x1]
      %v472 = vld [vmem:[%s7] sm:$0x1]
      %v473 = vld [vmem:[%s6] sm:$0xff]
      %v474 = vld [vmem:[%s6 + $0x8] sm:$0xff]
      %v475 = vld [vmem:[%s6 + $0x10] sm:$0xff]
      %v476 = vld [vmem:[%s6 + $0x18] sm:$0xff]
      %v477 = vld [vmem:[%s6 + $0x20] sm:$0xff]
      %v478 = vld [vmem:[%s6 + $0x28] sm:$0xff]
      %v479 = vld [vmem:[%s6 + $0x30] sm:$0xff]
      %v480 = vld [vmem:[%s6 + $0x38] sm:$0xff]
      %v481 = vld [vmem:[%s6 + $0x40] sm:$0xff]
      %v482 = vld [vmem:[%s6 + $0x48] sm:$0xff]
      %v483 = vld [vmem:[%s6 + $0x50] sm:$0xff]
      %v484 = vld [vmem:[%s6 + $0x58] sm:$0xff]
      %v485 = vld [vmem:[%s6 + $0x60] sm:$0xff]
      %v486 = vld [vmem:[%s6 + $0x68] sm:$0xff]
      %v487 = vld [vmem:[%s6 + $0x70] sm:$0xff]
      %v488 = vld [vmem:[%s6 + $0x78] sm:$0xff]
      %v489 = vld [vmem:[%s3] sm:$0xff]
      %v490 = vld [vmem:[%s3 + $0x8] sm:$0xff]
      %v491 = vld [vmem:[%s3 + $0x10] sm:$0xff]
      %v492 = vld [vmem:[%s3 + $0x18] sm:$0xff]
      %v493 = vld [vmem:[%s3 + $0x20] sm:$0xff]
      %v494 = vld [vmem:[%s3 + $0x28] sm:$0xff]
      %v495 = vld [vmem:[%s3 + $0x30] sm:$0xff]
      %v496 = vld [vmem:[%s3 + $0x38] sm:$0xff]
      %v497 = vld [vmem:[%s3 + $0x40] sm:$0xff]
      %v498 = vld [vmem:[%s3 + $0x48] sm:$0xff]
      %v499 = vld [vmem:[%s3 + $0x50] sm:$0xff]
      %v500 = vld [vmem:[%s3 + $0x58] sm:$0xff]
      %v501 = vld [vmem:[%s3 + $0x60] sm:$0xff]
      %v502 = vld [vmem:[%s3 + $0x68] sm:$0xff]
      %v503 = vld [vmem:[%s3 + $0x70] sm:$0xff]
      %v504 = vld [vmem:[%s3 + $0x78] sm:$0xff]
      %v506 = vlaneseq
      %v507 = vshrl.u32 %v506, 7
      %v508 = vsub.s32 0, %v507
      %v509 = vrot.slane %v471, %v508
      %511 = vmatprep.subr.mxu0 0.0
      %512 = vmatpush1.msra.mxu0 %v489
      %513 = vmatprep.subr.mxu0 0.0
      %514 = vmatpush1.msra.mxu0 %v490
      %515 = vmatprep.subr.mxu0 0.0
      %516 = vmatpush1.msra.mxu0 %v491
      %517 = vmatprep.subr.mxu0 0.0
      %518 = vmatpush1.msra.mxu0 %v492
      %519 = vmatprep.subr.mxu0 0.0
      %520 = vmatpush1.msra.mxu0 %v493
      %521 = vmatprep.subr.mxu0 0.0
      %522 = vmatpush1.msra.mxu0 %v494
      %523 = vmatprep.subr.mxu0 0.0
      %524 = vmatpush1.msra.mxu0 %v495
      %525 = vmatprep.subr.mxu0 0.0
      %526 = vmatpush1.msra.mxu0 %v496
      %527 = vmatprep.subr.mxu0 0.0
      %528 = vmatpush1.msra.mxu0 %v497
      %529 = vmatprep.subr.mxu0 0.0
      %530 = vmatpush1.msra.mxu0 %v498
      %531 = vmatprep.subr.mxu0 0.0
      %532 = vmatpush1.msra.mxu0 %v499
      %533 = vmatprep.subr.mxu0 0.0
      %534 = vmatpush1.msra.mxu0 %v500
      %535 = vmatprep.subr.mxu0 0.0
      %536 = vmatpush1.msra.mxu0 %v501
      %537 = vmatprep.subr.mxu0 0.0
      %538 = vmatpush1.msra.mxu0 %v502
      %539 = vmatprep.subr.mxu0 0.0
      %540 = vmatpush1.msra.mxu0 %v503
      %541 = vmatprep.subr.mxu0 0.0
      %542 = vmatpush1.msra.mxu0 %v504
      %543 = vmatprep.subr.mxu0 0.0
      %544 = vmatpush1.msra.mxu0 0.0
      %545 = vmatprep.subr.mxu0 0.0
      %546 = vmatpush1.msra.mxu0 0.0
      %547 = vmatprep.subr.mxu0 0.0
      %548 = vmatpush1.msra.mxu0 0.0
      %549 = vmatprep.subr.mxu0 0.0
      %550 = vmatpush1.msra.mxu0 0.0
      %551 = vmatprep.subr.mxu0 0.0
      %552 = vmatpush1.msra.mxu0 0.0
      %553 = vmatprep.subr.mxu0 0.0
      %554 = vmatpush1.msra.mxu0 0.0
      %555 = vmatprep.subr.mxu0 0.0
      %556 = vmatpush1.msra.mxu0 0.0
      %557 = vmatprep.subr.mxu0 0.0
      %558 = vmatpush1.msra.mxu0 0.0
      %559 = vmatprep.subr.mxu0 0.0
      %560 = vmatpush1.msra.mxu0 0.0
      %561 = vmatprep.subr.mxu0 0.0
      %562 = vmatpush1.msra.mxu0 0.0
      %563 = vmatprep.subr.mxu0 0.0
      %564 = vmatpush1.msra.mxu0 0.0
      %565 = vmatprep.subr.mxu0 0.0
      %566 = vmatpush1.msra.mxu0 0.0
      %567 = vmatprep.subr.mxu0 0.0
      %568 = vmatpush1.msra.mxu0 0.0
      %569 = vmatprep.subr.mxu0 0.0
      %570 = vmatpush1.msra.mxu0 0.0
      %571 = vmatprep.subr.mxu0 0.0
      %572 = vmatpush1.msra.mxu0 0.0
      %573 = vmatprep.subr.mxu0 0.0
      %574 = vmatpush1.msra.mxu0 0.0
      %575 = vmatprep.mubr.f32.mxu0 0.0
      %576 = vmatmul.mubr.f32.gmra.mrb[0].mxu0 %v379
      %v577 = vpop.f32.mrb[0].mxu0
      %v578 = vadd.f32 %v509, %v577
      %v579 = vpop.f32.mrb[0].mxu0
      %580 = vmatprep.mubr.f32.mxu0 0.0
      %581 = vmatmul.mubr.f32.gmra.mrb[0].mxu0 %v380
      %v582 = vpop.f32.mrb[0].mxu0
      %v583 = vadd.f32 %v509, %v582
      %v584 = vpop.f32.mrb[0].mxu0
      %585 = vdwg.mxu0
      %v586 = vld [vmem:[%s4] sm:$0xff]
      %v587 = vld [vmem:[%s4 + $0x8] sm:$0xff]
      %v588 = vld [vmem:[%s4 + $0x10] sm:$0xff]
      %v589 = vld [vmem:[%s4 + $0x18] sm:$0xff]
      %v590 = vld [vmem:[%s4 + $0x20] sm:$0xff]
      %v591 = vld [vmem:[%s4 + $0x28] sm:$0xff]
      %v592 = vld [vmem:[%s4 + $0x30] sm:$0xff]
      %v593 = vld [vmem:[%s4 + $0x38] sm:$0xff]
      %v594 = vld [vmem:[%s4 + $0x40] sm:$0xff]
      %v595 = vld [vmem:[%s4 + $0x48] sm:$0xff]
      %v596 = vld [vmem:[%s4 + $0x50] sm:$0xff]
      %v597 = vld [vmem:[%s4 + $0x58] sm:$0xff]
      %v598 = vld [vmem:[%s4 + $0x60] sm:$0xff]
      %v599 = vld [vmem:[%s4 + $0x68] sm:$0xff]
      %v600 = vld [vmem:[%s4 + $0x70] sm:$0xff]
      %v601 = vld [vmem:[%s4 + $0x78] sm:$0xff]
      %602 = vmatprep.subr.mxu0 0.0
      %603 = vmatpush1.msra.mxu0 %v586
      %604 = vmatprep.subr.mxu0 0.0
      %605 = vmatpush1.msra.mxu0 %v587
      %606 = vmatprep.subr.mxu0 0.0
      %607 = vmatpush1.msra.mxu0 %v588
      %608 = vmatprep.subr.mxu0 0.0
      %609 = vmatpush1.msra.mxu0 %v589
      %610 = vmatprep.subr.mxu0 0.0
      %611 = vmatpush1.msra.mxu0 %v590
      %612 = vmatprep.subr.mxu0 0.0
      %613 = vmatpush1.msra.mxu0 %v591
      %614 = vmatprep.subr.mxu0 0.0
      %615 = vmatpush1.msra.mxu0 %v592
      %616 = vmatprep.subr.mxu0 0.0
      %617 = vmatpush1.msra.mxu0 %v593
      %618 = vmatprep.subr.mxu0 0.0
      %619 = vmatpush1.msra.mxu0 %v594
      %620 = vmatprep.subr.mxu0 0.0
      %621 = vmatpush1.msra.mxu0 %v595
      %622 = vmatprep.subr.mxu0 0.0
      %623 = vmatpush1.msra.mxu0 %v596
      %624 = vmatprep.subr.mxu0 0.0
      %625 = vmatpush1.msra.mxu0 %v597
      %626 = vmatprep.subr.mxu0 0.0
      %627 = vmatpush1.msra.mxu0 %v598
      %628 = vmatprep.subr.mxu0 0.0
      %629 = vmatpush1.msra.mxu0 %v599
      %630 = vmatprep.subr.mxu0 0.0
      %631 = vmatpush1.msra.mxu0 %v600
      %632 = vmatprep.subr.mxu0 0.0
      %633 = vmatpush1.msra.mxu0 %v601
      %634 = vmatprep.subr.mxu0 0.0
      %635 = vmatpush1.msra.mxu0 0.0
      %636 = vmatprep.subr.mxu0 0.0
      %637 = vmatpush1.msra.mxu0 0.0
      %638 = vmatprep.subr.mxu0 0.0
      %639 = vmatpush1.msra.mxu0 0.0
      %640 = vmatprep.subr.mxu0 0.0
      %641 = vmatpush1.msra.mxu0 0.0
      %642 = vmatprep.subr.mxu0 0.0
      %643 = vmatpush1.msra.mxu0 0.0
      %644 = vmatprep.subr.mxu0 0.0
      %645 = vmatpush1.msra.mxu0 0.0
      %646 = vmatprep.subr.mxu0 0.0
      %647 = vmatpush1.msra.mxu0 0.0
      %648 = vmatprep.subr.mxu0 0.0
      %649 = vmatpush1.msra.mxu0 0.0
      %650 = vmatprep.subr.mxu0 0.0
      %651 = vmatpush1.msra.mxu0 0.0
      %652 = vmatprep.subr.mxu0 0.0
      %653 = vmatpush1.msra.mxu0 0.0
      %654 = vmatprep.subr.mxu0 0.0
      %655 = vmatpush1.msra.mxu0 0.0
      %656 = vmatprep.subr.mxu0 0.0
      %657 = vmatpush1.msra.mxu0 0.0
      %658 = vmatprep.subr.mxu0 0.0
      %659 = vmatpush1.msra.mxu0 0.0
      %660 = vmatprep.subr.mxu0 0.0
      %661 = vmatpush1.msra.mxu0 0.0
      %662 = vmatprep.subr.mxu0 0.0
      %663 = vmatpush1.msra.mxu0 0.0
      %664 = vmatprep.subr.mxu0 0.0
      %665 = vmatpush1.msra.mxu0 0.0
      %666 = vmatprep.mubr.f32.mxu0 0.0
      %667 = vmatmul.mubr.f32.gmra.mrb[0].mxu0 %v381
      %v668 = vpop.f32.mrb[0].mxu0
      %v669 = vadd.f32 0.0, %v668
      %v670 = vpop.f32.mrb[0].mxu0
      %671 = vmatprep.mubr.f32.mxu0 0.0
      %672 = vmatmul.mubr.f32.gmra.mrb[0].mxu0 %v382
      %v673 = vpop.f32.mrb[0].mxu0
      %v674 = vadd.f32 0.0, %v673
      %v675 = vpop.f32.mrb[0].mxu0
      %676 = vdwg.mxu0
      %vm677 = vcmask 130048
      %v678 = vsel %vm677, %v467, inf
      %679 = vmin.xlane.f32.xlu0 %v678
      %v680 = vpop.xlane.xlu0 %679
      %v681 = vsel %vm677, %v468, inf
      %682 = vmin.xlane.f32.xlu0 %v681
      %v683 = vpop.xlane.xlu0 %682
      %vm684 = vcmp.le.f32.partialorder %v467, %v680
      %vm685 = vcmp.le.f32.partialorder %v468, %v683
      %v686 = vsel %vm684, %v470, 16
      %v687 = vsel %vm685, %v470, 16
      %v688 = vsel %vm677, %v686, 2147483647
      %v689 = vand.u32 %v688, 65535
      %v690 = vshra.s32 %v688, 16
      %v691 = vcvt.s32.f32 %v689
      %v692 = vcvt.s32.f32 %v690
      %693 = vmin.xlane.f32.xlu0 %v692
      %v694 = vpop.xlane.xlu0 %693
      %vm695 = vcmp.eq.f32.partialorder %v692, %v694
      %v696 = vsel %vm695, %v691, inf
      %697 = vmin.xlane.f32.xlu0 %v696
      %v698 = vpop.xlane.xlu0 %697
      %v699 = vcvt.f32.s32 %v698
      %v700 = vcvt.f32.s32 %v694
      %v701 = vshll.u32 %v700, 16
      %v702 = vadd.s32 %v701, %v699
      %v703 = vsel %vm677, %v687, 2147483647
      %v704 = vand.u32 %v703, 65535
      %v705 = vshra.s32 %v703, 16
      %v706 = vcvt.s32.f32 %v704
      %v707 = vcvt.s32.f32 %v705
      %708 = vmin.xlane.f32.xlu0 %v707
      %v709 = vpop.xlane.xlu0 %708
      %vm710 = vcmp.eq.f32.partialorder %v707, %v709
      %v711 = vsel %vm710, %v706, inf
      %712 = vmin.xlane.f32.xlu0 %v711
      %v713 = vpop.xlane.xlu0 %712
      %v714 = vcvt.f32.s32 %v713
      %v715 = vcvt.f32.s32 %v709
      %v716 = vshll.u32 %v715, 16
      %v717 = vadd.s32 %v716, %v714
      %vm718 = vcmp.eq.s32.totalorder %v470, %v702
      %vm719 = vcmp.eq.s32.totalorder %v470, %v717
      %v720 = vsel %vm718, inf, %v467
      %v721 = vsel %vm719, inf, %v468
      %v722 = vsel %vm718, 1, 0
      %v723 = vsel %vm719, 1, 0
      %v724 = vcvt.s32.f32 %v722
      %v725 = vcvt.s32.f32 %v723
      %v727 = vsel %vm677, %v724, 0
      %v730 = vsel %vm677, %v725, 0
      %732 = vmatprep.subr.mxu0 0.0
      %733 = vmatpush1.msra.mxu0 %v669
      %734 = vmatprep.subr.mxu0 0.0
      %735 = vmatpush1.msra.mxu0 %v674
      %736 = vmatprep.subr.mxu0 0.0
      %737 = vmatpush1.msra.mxu0 0.0
      %738 = vmatprep.subr.mxu0 0.0
      %739 = vmatpush1.msra.mxu0 0.0
      %740 = vmatprep.subr.mxu0 0.0
      %741 = vmatpush1.msra.mxu0 0.0
      %742 = vmatprep.subr.mxu0 0.0
      %743 = vmatpush1.msra.mxu0 0.0
      %744 = vmatprep.subr.mxu0 0.0
      %745 = vmatpush1.msra.mxu0 0.0
      %746 = vmatprep.subr.mxu0 0.0
      %747 = vmatpush1.msra.mxu0 0.0
      %748 = vmatprep.subr.mxu0 0.0
      %749 = vmatpush1.msra.mxu0 0.0
      %750 = vmatprep.subr.mxu0 0.0
      %751 = vmatpush1.msra.mxu0 0.0
      %752 = vmatprep.subr.mxu0 0.0
      %753 = vmatpush1.msra.mxu0 0.0
      %754 = vmatprep.subr.mxu0 0.0
      %755 = vmatpush1.msra.mxu0 0.0
      %756 = vmatprep.subr.mxu0 0.0
      %757 = vmatpush1.msra.mxu0 0.0
      %758 = vmatprep.subr.mxu0 0.0
      %759 = vmatpush1.msra.mxu0 0.0
      %760 = vmatprep.subr.mxu0 0.0
      %761 = vmatpush1.msra.mxu0 0.0
      %762 = vmatprep.subr.mxu0 0.0
      %763 = vmatpush1.msra.mxu0 0.0
      %764 = vmatprep.subr.mxu0 0.0
      %765 = vmatpush1.msra.mxu0 0.0
      %766 = vmatprep.subr.mxu0 0.0
      %767 = vmatpush1.msra.mxu0 0.0
      %768 = vmatprep.subr.mxu0 0.0
      %769 = vmatpush1.msra.mxu0 0.0
      %770 = vmatprep.subr.mxu0 0.0
      %771 = vmatpush1.msra.mxu0 0.0
      %772 = vmatprep.subr.mxu0 0.0
      %773 = vmatpush1.msra.mxu0 0.0
      %774 = vmatprep.subr.mxu0 0.0
      %775 = vmatpush1.msra.mxu0 0.0
      %776 = vmatprep.subr.mxu0 0.0
      %777 = vmatpush1.msra.mxu0 0.0
      %778 = vmatprep.subr.mxu0 0.0
      %779 = vmatpush1.msra.mxu0 0.0
      %780 = vmatprep.subr.mxu0 0.0
      %781 = vmatpush1.msra.mxu0 0.0
      %782 = vmatprep.subr.mxu0 0.0
      %783 = vmatpush1.msra.mxu0 0.0
      %784 = vmatprep.subr.mxu0 0.0
      %785 = vmatpush1.msra.mxu0 0.0
      %786 = vmatprep.subr.mxu0 0.0
      %787 = vmatpush1.msra.mxu0 0.0
      %788 = vmatprep.subr.mxu0 0.0
      %789 = vmatpush1.msra.mxu0 0.0
      %790 = vmatprep.subr.mxu0 0.0
      %791 = vmatpush1.msra.mxu0 0.0
      %792 = vmatprep.subr.mxu0 0.0
      %793 = vmatpush1.msra.mxu0 0.0
      %794 = vmatprep.subr.mxu0 0.0
      %795 = vmatpush1.msra.mxu0 0.0
      %796 = vmatprep.mubr.f32.mxu0 0.0
      %797 = vmatmul.mubr.f32.gmra.mrb[0].mxu0 %v727
      %v798 = vpop.f32.mrb[0].mxu0
      %v799 = vadd.f32 0.0, %v798
      %v800 = vpop.f32.mrb[0].mxu0
      %801 = vmatprep.mubr.f32.mxu0 0.0
      %802 = vmatmul.mubr.f32.gmra.mrb[0].mxu0 %v730
      %v803 = vpop.f32.mrb[0].mxu0
      %v804 = vadd.f32 0.0, %v803
      %v805 = vpop.f32.mrb[0].mxu0
      %806 = vdwg.mxu0
      %v807 = vadd.f32 %v578, %v799
      %v808 = vadd.f32 %v583, %v804
      %v809 = vmax.f32 %v807, 0.0
      %v810 = vmax.f32 %v808, 0.0
      %v812 = vlaneseq
      %v813 = vshrl.u32 %v812, 7
      %v814 = vsub.s32 0, %v813
      %v815 = vrot.slane %v472, %v814
      %817 = vmatprep.subr.mxu0 0.0
      %818 = vmatpush1.msra.mxu0 %v473
      %819 = vmatprep.subr.mxu0 0.0
      %820 = vmatpush1.msra.mxu0 %v474
      %821 = vmatprep.subr.mxu0 0.0
      %822 = vmatpush1.msra.mxu0 %v475
      %823 = vmatprep.subr.mxu0 0.0
      %824 = vmatpush1.msra.mxu0 %v476
      %825 = vmatprep.subr.mxu0 0.0
      %826 = vmatpush1.msra.mxu0 %v477
      %827 = vmatprep.subr.mxu0 0.0
      %828 = vmatpush1.msra.mxu0 %v478
      %829 = vmatprep.subr.mxu0 0.0
      %830 = vmatpush1.msra.mxu0 %v479
      %831 = vmatprep.subr.mxu0 0.0
      %832 = vmatpush1.msra.mxu0 %v480
      %833 = vmatprep.subr.mxu0 0.0
      %834 = vmatpush1.msra.mxu0 %v481
      %835 = vmatprep.subr.mxu0 0.0
      %836 = vmatpush1.msra.mxu0 %v482
      %837 = vmatprep.subr.mxu0 0.0
      %838 = vmatpush1.msra.mxu0 %v483
      %839 = vmatprep.subr.mxu0 0.0
      %840 = vmatpush1.msra.mxu0 %v484
      %841 = vmatprep.subr.mxu0 0.0
      %842 = vmatpush1.msra.mxu0 %v485
      %843 = vmatprep.subr.mxu0 0.0
      %844 = vmatpush1.msra.mxu0 %v486
      %845 = vmatprep.subr.mxu0 0.0
      %846 = vmatpush1.msra.mxu0 %v487
      %847 = vmatprep.subr.mxu0 0.0
      %848 = vmatpush1.msra.mxu0 %v488
      %849 = vmatprep.subr.mxu0 0.0
      %850 = vmatpush1.msra.mxu0 0.0
      %851 = vmatprep.subr.mxu0 0.0
      %852 = vmatpush1.msra.mxu0 0.0
      %853 = vmatprep.subr.mxu0 0.0
      %854 = vmatpush1.msra.mxu0 0.0
      %855 = vmatprep.subr.mxu0 0.0
      %856 = vmatpush1.msra.mxu0 0.0
      %857 = vmatprep.subr.mxu0 0.0
      %858 = vmatpush1.msra.mxu0 0.0
      %859 = vmatprep.subr.mxu0 0.0
      %860 = vmatpush1.msra.mxu0 0.0
      %861 = vmatprep.subr.mxu0 0.0
      %862 = vmatpush1.msra.mxu0 0.0
      %863 = vmatprep.subr.mxu0 0.0
      %864 = vmatpush1.msra.mxu0 0.0
      %865 = vmatprep.subr.mxu0 0.0
      %866 = vmatpush1.msra.mxu0 0.0
      %867 = vmatprep.subr.mxu0 0.0
      %868 = vmatpush1.msra.mxu0 0.0
      %869 = vmatprep.subr.mxu0 0.0
      %870 = vmatpush1.msra.mxu0 0.0
      %871 = vmatprep.subr.mxu0 0.0
      %872 = vmatpush1.msra.mxu0 0.0
      %873 = vmatprep.subr.mxu0 0.0
      %874 = vmatpush1.msra.mxu0 0.0
      %875 = vmatprep.subr.mxu0 0.0
      %876 = vmatpush1.msra.mxu0 0.0
      %877 = vmatprep.subr.mxu0 0.0
      %878 = vmatpush1.msra.mxu0 0.0
      %879 = vmatprep.subr.mxu0 0.0
      %880 = vmatpush1.msra.mxu0 0.0
      %881 = vmatprep.mubr.f32.mxu0 0.0
      %882 = vmatmul.mubr.f32.gmra.mrb[0].mxu0 %v809
      %v883 = vpop.f32.mrb[0].mxu0
      %v884 = vadd.f32 %v815, %v883
      %v885 = vpop.f32.mrb[0].mxu0
      %886 = vmatprep.mubr.f32.mxu0 0.0
      %887 = vmatmul.mubr.f32.gmra.mrb[0].mxu0 %v810
      %v888 = vpop.f32.mrb[0].mxu0
      %v889 = vadd.f32 %v815, %v888
      %v890 = vpop.f32.mrb[0].mxu0
      %891 = vdwg.mxu0
      %v892 = vmax.f32 %v884, 0.0
      %v893 = vmax.f32 %v889, 0.0
      %v894 = vmax.f32 %v892, 0.0
      %v895 = vmax.f32 %v893, 0.0
      %v896 = vsel %vm677, %v720, inf
      %897 = vmin.xlane.f32.xlu0 %v896
      %v898 = vpop.xlane.xlu0 %897
      %v899 = vsel %vm677, %v721, inf
      %900 = vmin.xlane.f32.xlu0 %v899
      %v901 = vpop.xlane.xlu0 %900
      %vm902 = vcmp.le.f32.partialorder %v720, %v898
      %vm903 = vcmp.le.f32.partialorder %v721, %v901
      %v904 = vsel %vm902, %v470, 16
      %v905 = vsel %vm903, %v470, 16
      %v906 = vsel %vm677, %v904, 2147483647
      %v907 = vand.u32 %v906, 65535
      %v908 = vshra.s32 %v906, 16
      %v909 = vcvt.s32.f32 %v907
      %v910 = vcvt.s32.f32 %v908
      %911 = vmin.xlane.f32.xlu0 %v910
      %v912 = vpop.xlane.xlu0 %911
      %vm913 = vcmp.eq.f32.partialorder %v910, %v912
      %v914 = vsel %vm913, %v909, inf
      %915 = vmin.xlane.f32.xlu0 %v914
      %v916 = vpop.xlane.xlu0 %915
      %v917 = vcvt.f32.s32 %v916
      %v918 = vcvt.f32.s32 %v912
      %v919 = vshll.u32 %v918, 16
      %v920 = vadd.s32 %v919, %v917
      %v921 = vsel %vm677, %v905, 2147483647
      %v922 = vand.u32 %v921, 65535
      %v923 = vshra.s32 %v921, 16
      %v924 = vcvt.s32.f32 %v922
      %v925 = vcvt.s32.f32 %v923
      %926 = vmin.xlane.f32.xlu0 %v925
      %v927 = vpop.xlane.xlu0 %926
      %vm928 = vcmp.eq.f32.partialorder %v925, %v927
      %v929 = vsel %vm928, %v924, inf
      %930 = vmin.xlane.f32.xlu0 %v929
      %v931 = vpop.xlane.xlu0 %930
      %v932 = vcvt.f32.s32 %v931
      %v933 = vcvt.f32.s32 %v927
      %v934 = vshll.u32 %v933, 16
      %v935 = vadd.s32 %v934, %v932
      %vm936 = vcmp.eq.s32.totalorder %v470, %v920
      %vm937 = vcmp.eq.s32.totalorder %v470, %v935
      %v938 = vsel %vm936, inf, %v720
      %v939 = vsel %vm937, inf, %v721
      %v940 = vsel %vm936, 1, 0
      %v941 = vsel %vm937, 1, 0
      %v942 = vcvt.s32.f32 %v940
      %v943 = vcvt.s32.f32 %v941
      %v945 = vsel %vm677, %v942, 0
      %v948 = vsel %vm677, %v943, 0
      %950 = vmatprep.subr.mxu0 0.0
      %951 = vmatpush1.msra.mxu0 %v669
      %952 = vmatprep.subr.mxu0 0.0
      %953 = vmatpush1.msra.mxu0 %v674
      %954 = vmatprep.subr.mxu0 0.0
      %955 = vmatpush1.msra.mxu0 0.0
      %956 = vmatprep.subr.mxu0 0.0
      %957 = vmatpush1.msra.mxu0 0.0
      %958 = vmatprep.subr.mxu0 0.0
      %959 = vmatpush1.msra.mxu0 0.0
      %960 = vmatprep.subr.mxu0 0.0
      %961 = vmatpush1.msra.mxu0 0.0
      %962 = vmatprep.subr.mxu0 0.0
      %963 = vmatpush1.msra.mxu0 0.0
      %964 = vmatprep.subr.mxu0 0.0
      %965 = vmatpush1.msra.mxu0 0.0
      %966 = vmatprep.subr.mxu0 0.0
      %967 = vmatpush1.msra.mxu0 0.0
      %968 = vmatprep.subr.mxu0 0.0
      %969 = vmatpush1.msra.mxu0 0.0
      %970 = vmatprep.subr.mxu0 0.0
      %971 = vmatpush1.msra.mxu0 0.0
      %972 = vmatprep.subr.mxu0 0.0
      %973 = vmatpush1.msra.mxu0 0.0
      %974 = vmatprep.subr.mxu0 0.0
      %975 = vmatpush1.msra.mxu0 0.0
      %976 = vmatprep.subr.mxu0 0.0
      %977 = vmatpush1.msra.mxu0 0.0
      %978 = vmatprep.subr.mxu0 0.0
      %979 = vmatpush1.msra.mxu0 0.0
      %980 = vmatprep.subr.mxu0 0.0
      %981 = vmatpush1.msra.mxu0 0.0
      %982 = vmatprep.subr.mxu0 0.0
      %983 = vmatpush1.msra.mxu0 0.0
      %984 = vmatprep.subr.mxu0 0.0
      %985 = vmatpush1.msra.mxu0 0.0
      %986 = vmatprep.subr.mxu0 0.0
      %987 = vmatpush1.msra.mxu0 0.0
      %988 = vmatprep.subr.mxu0 0.0
      %989 = vmatpush1.msra.mxu0 0.0
      %990 = vmatprep.subr.mxu0 0.0
      %991 = vmatpush1.msra.mxu0 0.0
      %992 = vmatprep.subr.mxu0 0.0
      %993 = vmatpush1.msra.mxu0 0.0
      %994 = vmatprep.subr.mxu0 0.0
      %995 = vmatpush1.msra.mxu0 0.0
      %996 = vmatprep.subr.mxu0 0.0
      %997 = vmatpush1.msra.mxu0 0.0
      %998 = vmatprep.subr.mxu0 0.0
      %999 = vmatpush1.msra.mxu0 0.0
      %1000 = vmatprep.subr.mxu0 0.0
      %1001 = vmatpush1.msra.mxu0 0.0
      %1002 = vmatprep.subr.mxu0 0.0
      %1003 = vmatpush1.msra.mxu0 0.0
      %1004 = vmatprep.subr.mxu0 0.0
      %1005 = vmatpush1.msra.mxu0 0.0
      %1006 = vmatprep.subr.mxu0 0.0
      %1007 = vmatpush1.msra.mxu0 0.0
      %1008 = vmatprep.subr.mxu0 0.0
      %1009 = vmatpush1.msra.mxu0 0.0
      %1010 = vmatprep.subr.mxu0 0.0
      %1011 = vmatpush1.msra.mxu0 0.0
      %1012 = vmatprep.subr.mxu0 0.0
      %1013 = vmatpush1.msra.mxu0 0.0
      %1014 = vmatprep.mubr.f32.mxu0 0.0
      %1015 = vmatmul.mubr.f32.gmra.mrb[0].mxu0 %v945
      %v1016 = vpop.f32.mrb[0].mxu0
      %v1017 = vadd.f32 0.0, %v1016
      %v1018 = vpop.f32.mrb[0].mxu0
      %1019 = vmatprep.mubr.f32.mxu0 0.0
      %1020 = vmatmul.mubr.f32.gmra.mrb[0].mxu0 %v948
      %v1021 = vpop.f32.mrb[0].mxu0
      %v1022 = vadd.f32 0.0, %v1021
      %v1023 = vpop.f32.mrb[0].mxu0
      %1024 = vdwg.mxu0
      %v1025 = vadd.f32 %v578, %v1017
      %v1026 = vadd.f32 %v583, %v1022
      %v1027 = vmax.f32 %v1025, 0.0
      %v1028 = vmax.f32 %v1026, 0.0
      %1029 = vmatprep.subr.mxu0 0.0
      %1030 = vmatpush1.msra.mxu0 %v473
      %1031 = vmatprep.subr.mxu0 0.0
      %1032 = vmatpush1.msra.mxu0 %v474
      %1033 = vmatprep.subr.mxu0 0.0
      %1034 = vmatpush1.msra.mxu0 %v475
      %1035 = vmatprep.subr.mxu0 0.0
      %1036 = vmatpush1.msra.mxu0 %v476
      %1037 = vmatprep.subr.mxu0 0.0
      %1038 = vmatpush1.msra.mxu0 %v477
      %1039 = vmatprep.subr.mxu0 0.0
      %1040 = vmatpush1.msra.mxu0 %v478
      %1041 = vmatprep.subr.mxu0 0.0
      %1042 = vmatpush1.msra.mxu0 %v479
      %1043 = vmatprep.subr.mxu0 0.0
      %1044 = vmatpush1.msra.mxu0 %v480
      %1045 = vmatprep.subr.mxu0 0.0
      %1046 = vmatpush1.msra.mxu0 %v481
      %1047 = vmatprep.subr.mxu0 0.0
      %1048 = vmatpush1.msra.mxu0 %v482
      %1049 = vmatprep.subr.mxu0 0.0
      %1050 = vmatpush1.msra.mxu0 %v483
      %1051 = vmatprep.subr.mxu0 0.0
      %1052 = vmatpush1.msra.mxu0 %v484
      %1053 = vmatprep.subr.mxu0 0.0
      %1054 = vmatpush1.msra.mxu0 %v485
      %1055 = vmatprep.subr.mxu0 0.0
      %1056 = vmatpush1.msra.mxu0 %v486
      %1057 = vmatprep.subr.mxu0 0.0
      %1058 = vmatpush1.msra.mxu0 %v487
      %1059 = vmatprep.subr.mxu0 0.0
      %1060 = vmatpush1.msra.mxu0 %v488
      %1061 = vmatprep.subr.mxu0 0.0
      %1062 = vmatpush1.msra.mxu0 0.0
      %1063 = vmatprep.subr.mxu0 0.0
      %1064 = vmatpush1.msra.mxu0 0.0
      %1065 = vmatprep.subr.mxu0 0.0
      %1066 = vmatpush1.msra.mxu0 0.0
      %1067 = vmatprep.subr.mxu0 0.0
      %1068 = vmatpush1.msra.mxu0 0.0
      %1069 = vmatprep.subr.mxu0 0.0
      %1070 = vmatpush1.msra.mxu0 0.0
      %1071 = vmatprep.subr.mxu0 0.0
      %1072 = vmatpush1.msra.mxu0 0.0
      %1073 = vmatprep.subr.mxu0 0.0
      %1074 = vmatpush1.msra.mxu0 0.0
      %1075 = vmatprep.subr.mxu0 0.0
      %1076 = vmatpush1.msra.mxu0 0.0
      %1077 = vmatprep.subr.mxu0 0.0
      %1078 = vmatpush1.msra.mxu0 0.0
      %1079 = vmatprep.subr.mxu0 0.0
      %1080 = vmatpush1.msra.mxu0 0.0
      %1081 = vmatprep.subr.mxu0 0.0
      %1082 = vmatpush1.msra.mxu0 0.0
      %1083 = vmatprep.subr.mxu0 0.0
      %1084 = vmatpush1.msra.mxu0 0.0
      %1085 = vmatprep.subr.mxu0 0.0
      %1086 = vmatpush1.msra.mxu0 0.0
      %1087 = vmatprep.subr.mxu0 0.0
      %1088 = vmatpush1.msra.mxu0 0.0
      %1089 = vmatprep.subr.mxu0 0.0
      %1090 = vmatpush1.msra.mxu0 0.0
      %1091 = vmatprep.subr.mxu0 0.0
      %1092 = vmatpush1.msra.mxu0 0.0
      %1093 = vmatprep.mubr.f32.mxu0 0.0
      %1094 = vmatmul.mubr.f32.gmra.mrb[0].mxu0 %v1027
      %v1095 = vpop.f32.mrb[0].mxu0
      %v1096 = vadd.f32 %v815, %v1095
      %v1097 = vpop.f32.mrb[0].mxu0
      %1098 = vmatprep.mubr.f32.mxu0 0.0
      %1099 = vmatmul.mubr.f32.gmra.mrb[0].mxu0 %v1028
      %v1100 = vpop.f32.mrb[0].mxu0
      %v1101 = vadd.f32 %v815, %v1100
      %v1102 = vpop.f32.mrb[0].mxu0
      %1103 = vdwg.mxu0
      %v1104 = vmax.f32 %v1096, 0.0
      %v1105 = vmax.f32 %v1101, 0.0
      %v1106 = vmax.f32 %v894, %v1104
      %v1107 = vmax.f32 %v895, %v1105
      %v1108 = vsel %vm677, %v938, inf
      %1109 = vmin.xlane.f32.xlu0 %v1108
      %v1110 = vpop.xlane.xlu0 %1109
      %v1111 = vsel %vm677, %v939, inf
      %1112 = vmin.xlane.f32.xlu0 %v1111
      %v1113 = vpop.xlane.xlu0 %1112
      %vm1114 = vcmp.le.f32.partialorder %v938, %v1110
      %vm1115 = vcmp.le.f32.partialorder %v939, %v1113
      %v1116 = vsel %vm1114, %v470, 16
      %v1117 = vsel %vm1115, %v470, 16
      %v1118 = vsel %vm677, %v1116, 2147483647
      %v1119 = vand.u32 %v1118, 65535
      %v1120 = vshra.s32 %v1118, 16
      %v1121 = vcvt.s32.f32 %v1119
      %v1122 = vcvt.s32.f32 %v1120
      %1123 = vmin.xlane.f32.xlu0 %v1122
      %v1124 = vpop.xlane.xlu0 %1123
      %vm1125 = vcmp.eq.f32.partialorder %v1122, %v1124
      %v1126 = vsel %vm1125, %v1121, inf
      %1127 = vmin.xlane.f32.xlu0 %v1126
      %v1128 = vpop.xlane.xlu0 %1127
      %v1129 = vcvt.f32.s32 %v1128
      %v1130 = vcvt.f32.s32 %v1124
      %v1131 = vshll.u32 %v1130, 16
      %v1132 = vadd.s32 %v1131, %v1129
      %v1133 = vsel %vm677, %v1117, 2147483647
      %v1134 = vand.u32 %v1133, 65535
      %v1135 = vshra.s32 %v1133, 16
      %v1136 = vcvt.s32.f32 %v1134
      %v1137 = vcvt.s32.f32 %v1135
      %1138 = vmin.xlane.f32.xlu0 %v1137
      %v1139 = vpop.xlane.xlu0 %1138
      %vm1140 = vcmp.eq.f32.partialorder %v1137, %v1139
      %v1141 = vsel %vm1140, %v1136, inf
      %1142 = vmin.xlane.f32.xlu0 %v1141
      %v1143 = vpop.xlane.xlu0 %1142
      %v1144 = vcvt.f32.s32 %v1143
      %v1145 = vcvt.f32.s32 %v1139
      %v1146 = vshll.u32 %v1145, 16
      %v1147 = vadd.s32 %v1146, %v1144
      %vm1148 = vcmp.eq.s32.totalorder %v470, %v1132
      %vm1149 = vcmp.eq.s32.totalorder %v470, %v1147
      %v1150 = vsel %vm1148, inf, %v938
      %v1151 = vsel %vm1149, inf, %v939
      %v1152 = vsel %vm1148, 1, 0
      %v1153 = vsel %vm1149, 1, 0
      %v1154 = vcvt.s32.f32 %v1152
      %v1155 = vcvt.s32.f32 %v1153
      %v1157 = vsel %vm677, %v1154, 0
      %v1160 = vsel %vm677, %v1155, 0
      %1162 = vmatprep.subr.mxu0 0.0
      %1163 = vmatpush1.msra.mxu0 %v669
      %1164 = vmatprep.subr.mxu0 0.0
      %1165 = vmatpush1.msra.mxu0 %v674
      %1166 = vmatprep.subr.mxu0 0.0
      %1167 = vmatpush1.msra.mxu0 0.0
      %1168 = vmatprep.subr.mxu0 0.0
      %1169 = vmatpush1.msra.mxu0 0.0
      %1170 = vmatprep.subr.mxu0 0.0
      %1171 = vmatpush1.msra.mxu0 0.0
      %1172 = vmatprep.subr.mxu0 0.0
      %1173 = vmatpush1.msra.mxu0 0.0
      %1174 = vmatprep.subr.mxu0 0.0
      %1175 = vmatpush1.msra.mxu0 0.0
      %1176 = vmatprep.subr.mxu0 0.0
      %1177 = vmatpush1.msra.mxu0 0.0
      %1178 = vmatprep.subr.mxu0 0.0
      %1179 = vmatpush1.msra.mxu0 0.0
      %1180 = vmatprep.subr.mxu0 0.0
      %1181 = vmatpush1.msra.mxu0 0.0
      %1182 = vmatprep.subr.mxu0 0.0
      %1183 = vmatpush1.msra.mxu0 0.0
      %1184 = vmatprep.subr.mxu0 0.0
      %1185 = vmatpush1.msra.mxu0 0.0
      %1186 = vmatprep.subr.mxu0 0.0
      %1187 = vmatpush1.msra.mxu0 0.0
      %1188 = vmatprep.subr.mxu0 0.0
      %1189 = vmatpush1.msra.mxu0 0.0
      %1190 = vmatprep.subr.mxu0 0.0
      %1191 = vmatpush1.msra.mxu0 0.0
      %1192 = vmatprep.subr.mxu0 0.0
      %1193 = vmatpush1.msra.mxu0 0.0
      %1194 = vmatprep.subr.mxu0 0.0
      %1195 = vmatpush1.msra.mxu0 0.0
      %1196 = vmatprep.subr.mxu0 0.0
      %1197 = vmatpush1.msra.mxu0 0.0
      %1198 = vmatprep.subr.mxu0 0.0
      %1199 = vmatpush1.msra.mxu0 0.0
      %1200 = vmatprep.subr.mxu0 0.0
      %1201 = vmatpush1.msra.mxu0 0.0
      %1202 = vmatprep.subr.mxu0 0.0
      %1203 = vmatpush1.msra.mxu0 0.0
      %1204 = vmatprep.subr.mxu0 0.0
      %1205 = vmatpush1.msra.mxu0 0.0
      %1206 = vmatprep.subr.mxu0 0.0
      %1207 = vmatpush1.msra.mxu0 0.0
      %1208 = vmatprep.subr.mxu0 0.0
      %1209 = vmatpush1.msra.mxu0 0.0
      %1210 = vmatprep.subr.mxu0 0.0
      %1211 = vmatpush1.msra.mxu0 0.0
      %1212 = vmatprep.subr.mxu0 0.0
      %1213 = vmatpush1.msra.mxu0 0.0
      %1214 = vmatprep.subr.mxu0 0.0
      %1215 = vmatpush1.msra.mxu0 0.0
      %1216 = vmatprep.subr.mxu0 0.0
      %1217 = vmatpush1.msra.mxu0 0.0
      %1218 = vmatprep.subr.mxu0 0.0
      %1219 = vmatpush1.msra.mxu0 0.0
      %1220 = vmatprep.subr.mxu0 0.0
      %1221 = vmatpush1.msra.mxu0 0.0
      %1222 = vmatprep.subr.mxu0 0.0
      %1223 = vmatpush1.msra.mxu0 0.0
      %1224 = vmatprep.subr.mxu0 0.0
      %1225 = vmatpush1.msra.mxu0 0.0
      %1226 = vmatprep.mubr.f32.mxu0 0.0
      %1227 = vmatmul.mubr.f32.gmra.mrb[0].mxu0 %v1157
      %v1228 = vpop.f32.mrb[0].mxu0
      %v1229 = vadd.f32 0.0, %v1228
      %v1230 = vpop.f32.mrb[0].mxu0
      %1231 = vmatprep.mubr.f32.mxu0 0.0
      %1232 = vmatmul.mubr.f32.gmra.mrb[0].mxu0 %v1160
      %v1233 = vpop.f32.mrb[0].mxu0
      %v1234 = vadd.f32 0.0, %v1233
      %v1235 = vpop.f32.mrb[0].mxu0
      %1236 = vdwg.mxu0
      %v1237 = vadd.f32 %v578, %v1229
      %v1238 = vadd.f32 %v583, %v1234
      %v1239 = vmax.f32 %v1237, 0.0
      %v1240 = vmax.f32 %v1238, 0.0
      %1241 = vmatprep.subr.mxu0 0.0
      %1242 = vmatpush1.msra.mxu0 %v473
      %1243 = vmatprep.subr.mxu0 0.0
      %1244 = vmatpush1.msra.mxu0 %v474
      %1245 = vmatprep.subr.mxu0 0.0
      %1246 = vmatpush1.msra.mxu0 %v475
      %1247 = vmatprep.subr.mxu0 0.0
      %1248 = vmatpush1.msra.mxu0 %v476
      %1249 = vmatprep.subr.mxu0 0.0
      %1250 = vmatpush1.msra.mxu0 %v477
      %1251 = vmatprep.subr.mxu0 0.0
      %1252 = vmatpush1.msra.mxu0 %v478
      %1253 = vmatprep.subr.mxu0 0.0
      %1254 = vmatpush1.msra.mxu0 %v479
      %1255 = vmatprep.subr.mxu0 0.0
      %1256 = vmatpush1.msra.mxu0 %v480
      %1257 = vmatprep.subr.mxu0 0.0
      %1258 = vmatpush1.msra.mxu0 %v481
      %1259 = vmatprep.subr.mxu0 0.0
      %1260 = vmatpush1.msra.mxu0 %v482
      %1261 = vmatprep.subr.mxu0 0.0
      %1262 = vmatpush1.msra.mxu0 %v483
      %1263 = vmatprep.subr.mxu0 0.0
      %1264 = vmatpush1.msra.mxu0 %v484
      %1265 = vmatprep.subr.mxu0 0.0
      %1266 = vmatpush1.msra.mxu0 %v485
      %1267 = vmatprep.subr.mxu0 0.0
      %1268 = vmatpush1.msra.mxu0 %v486
      %1269 = vmatprep.subr.mxu0 0.0
      %1270 = vmatpush1.msra.mxu0 %v487
      %1271 = vmatprep.subr.mxu0 0.0
      %1272 = vmatpush1.msra.mxu0 %v488
      %1273 = vmatprep.subr.mxu0 0.0
      %1274 = vmatpush1.msra.mxu0 0.0
      %1275 = vmatprep.subr.mxu0 0.0
      %1276 = vmatpush1.msra.mxu0 0.0
      %1277 = vmatprep.subr.mxu0 0.0
      %1278 = vmatpush1.msra.mxu0 0.0
      %1279 = vmatprep.subr.mxu0 0.0
      %1280 = vmatpush1.msra.mxu0 0.0
      %1281 = vmatprep.subr.mxu0 0.0
      %1282 = vmatpush1.msra.mxu0 0.0
      %1283 = vmatprep.subr.mxu0 0.0
      %1284 = vmatpush1.msra.mxu0 0.0
      %1285 = vmatprep.subr.mxu0 0.0
      %1286 = vmatpush1.msra.mxu0 0.0
      %1287 = vmatprep.subr.mxu0 0.0
      %1288 = vmatpush1.msra.mxu0 0.0
      %1289 = vmatprep.subr.mxu0 0.0
      %1290 = vmatpush1.msra.mxu0 0.0
      %1291 = vmatprep.subr.mxu0 0.0
      %1292 = vmatpush1.msra.mxu0 0.0
      %1293 = vmatprep.subr.mxu0 0.0
      %1294 = vmatpush1.msra.mxu0 0.0
      %1295 = vmatprep.subr.mxu0 0.0
      %1296 = vmatpush1.msra.mxu0 0.0
      %1297 = vmatprep.subr.mxu0 0.0
      %1298 = vmatpush1.msra.mxu0 0.0
      %1299 = vmatprep.subr.mxu0 0.0
      %1300 = vmatpush1.msra.mxu0 0.0
      %1301 = vmatprep.subr.mxu0 0.0
      %1302 = vmatpush1.msra.mxu0 0.0
      %1303 = vmatprep.subr.mxu0 0.0
      %1304 = vmatpush1.msra.mxu0 0.0
      %1305 = vmatprep.mubr.f32.mxu0 0.0
      %1306 = vmatmul.mubr.f32.gmra.mrb[0].mxu0 %v1239
      %v1307 = vpop.f32.mrb[0].mxu0
      %v1308 = vadd.f32 %v815, %v1307
      %v1309 = vpop.f32.mrb[0].mxu0
      %1310 = vmatprep.mubr.f32.mxu0 0.0
      %1311 = vmatmul.mubr.f32.gmra.mrb[0].mxu0 %v1240
      %v1312 = vpop.f32.mrb[0].mxu0
      %v1313 = vadd.f32 %v815, %v1312
      %v1314 = vpop.f32.mrb[0].mxu0
      %1315 = vdwg.mxu0
      %v1316 = vmax.f32 %v1308, 0.0
      %v1317 = vmax.f32 %v1313, 0.0
      %v1318 = vmax.f32 %v1106, %v1316
      %v1319 = vmax.f32 %v1107, %v1317
      %v1320 = vsel %vm677, %v1150, inf
      %1321 = vmin.xlane.f32.xlu0 %v1320
      %v1322 = vpop.xlane.xlu0 %1321
      %v1323 = vsel %vm677, %v1151, inf
      %1324 = vmin.xlane.f32.xlu0 %v1323
      %v1325 = vpop.xlane.xlu0 %1324
      %vm1326 = vcmp.le.f32.partialorder %v1150, %v1322
      %vm1327 = vcmp.le.f32.partialorder %v1151, %v1325
      %v1328 = vsel %vm1326, %v470, 16
      %v1329 = vsel %vm1327, %v470, 16
      %v1330 = vsel %vm677, %v1328, 2147483647
      %v1331 = vand.u32 %v1330, 65535
      %v1332 = vshra.s32 %v1330, 16
      %v1333 = vcvt.s32.f32 %v1331
      %v1334 = vcvt.s32.f32 %v1332
      %1335 = vmin.xlane.f32.xlu0 %v1334
      %v1336 = vpop.xlane.xlu0 %1335
      %vm1337 = vcmp.eq.f32.partialorder %v1334, %v1336
      %v1338 = vsel %vm1337, %v1333, inf
      %1339 = vmin.xlane.f32.xlu0 %v1338
      %v1340 = vpop.xlane.xlu0 %1339
      %v1341 = vcvt.f32.s32 %v1340
      %v1342 = vcvt.f32.s32 %v1336
      %v1343 = vshll.u32 %v1342, 16
      %v1344 = vadd.s32 %v1343, %v1341
      %v1345 = vsel %vm677, %v1329, 2147483647
      %v1346 = vand.u32 %v1345, 65535
      %v1347 = vshra.s32 %v1345, 16
      %v1348 = vcvt.s32.f32 %v1346
      %v1349 = vcvt.s32.f32 %v1347
      %1350 = vmin.xlane.f32.xlu0 %v1349
      %v1351 = vpop.xlane.xlu0 %1350
      %vm1352 = vcmp.eq.f32.partialorder %v1349, %v1351
      %v1353 = vsel %vm1352, %v1348, inf
      %1354 = vmin.xlane.f32.xlu0 %v1353
      %v1355 = vpop.xlane.xlu0 %1354
      %v1356 = vcvt.f32.s32 %v1355
      %v1357 = vcvt.f32.s32 %v1351
      %v1358 = vshll.u32 %v1357, 16
      %v1359 = vadd.s32 %v1358, %v1356
      %vm1360 = vcmp.eq.s32.totalorder %v470, %v1344
      %vm1361 = vcmp.eq.s32.totalorder %v470, %v1359
      %v1362 = vsel %vm1360, inf, %v1150
      %v1363 = vsel %vm1361, inf, %v1151
      %v1364 = vsel %vm1360, 1, 0
      %v1365 = vsel %vm1361, 1, 0
      %v1366 = vcvt.s32.f32 %v1364
      %v1367 = vcvt.s32.f32 %v1365
      %v1369 = vsel %vm677, %v1366, 0
      %v1372 = vsel %vm677, %v1367, 0
      %1374 = vmatprep.subr.mxu0 0.0
      %1375 = vmatpush1.msra.mxu0 %v669
      %1376 = vmatprep.subr.mxu0 0.0
      %1377 = vmatpush1.msra.mxu0 %v674
      %1378 = vmatprep.subr.mxu0 0.0
      %1379 = vmatpush1.msra.mxu0 0.0
      %1380 = vmatprep.subr.mxu0 0.0
      %1381 = vmatpush1.msra.mxu0 0.0
      %1382 = vmatprep.subr.mxu0 0.0
      %1383 = vmatpush1.msra.mxu0 0.0
      %1384 = vmatprep.subr.mxu0 0.0
      %1385 = vmatpush1.msra.mxu0 0.0
      %1386 = vmatprep.subr.mxu0 0.0
      %1387 = vmatpush1.msra.mxu0 0.0
      %1388 = vmatprep.subr.mxu0 0.0
      %1389 = vmatpush1.msra.mxu0 0.0
      %1390 = vmatprep.subr.mxu0 0.0
      %1391 = vmatpush1.msra.mxu0 0.0
      %1392 = vmatprep.subr.mxu0 0.0
      %1393 = vmatpush1.msra.mxu0 0.0
      %1394 = vmatprep.subr.mxu0 0.0
      %1395 = vmatpush1.msra.mxu0 0.0
      %1396 = vmatprep.subr.mxu0 0.0
      %1397 = vmatpush1.msra.mxu0 0.0
      %1398 = vmatprep.subr.mxu0 0.0
      %1399 = vmatpush1.msra.mxu0 0.0
      %1400 = vmatprep.subr.mxu0 0.0
      %1401 = vmatpush1.msra.mxu0 0.0
      %1402 = vmatprep.subr.mxu0 0.0
      %1403 = vmatpush1.msra.mxu0 0.0
      %1404 = vmatprep.subr.mxu0 0.0
      %1405 = vmatpush1.msra.mxu0 0.0
      %1406 = vmatprep.subr.mxu0 0.0
      %1407 = vmatpush1.msra.mxu0 0.0
      %1408 = vmatprep.subr.mxu0 0.0
      %1409 = vmatpush1.msra.mxu0 0.0
      %1410 = vmatprep.subr.mxu0 0.0
      %1411 = vmatpush1.msra.mxu0 0.0
      %1412 = vmatprep.subr.mxu0 0.0
      %1413 = vmatpush1.msra.mxu0 0.0
      %1414 = vmatprep.subr.mxu0 0.0
      %1415 = vmatpush1.msra.mxu0 0.0
      %1416 = vmatprep.subr.mxu0 0.0
      %1417 = vmatpush1.msra.mxu0 0.0
      %1418 = vmatprep.subr.mxu0 0.0
      %1419 = vmatpush1.msra.mxu0 0.0
      %1420 = vmatprep.subr.mxu0 0.0
      %1421 = vmatpush1.msra.mxu0 0.0
      %1422 = vmatprep.subr.mxu0 0.0
      %1423 = vmatpush1.msra.mxu0 0.0
      %1424 = vmatprep.subr.mxu0 0.0
      %1425 = vmatpush1.msra.mxu0 0.0
      %1426 = vmatprep.subr.mxu0 0.0
      %1427 = vmatpush1.msra.mxu0 0.0
      %1428 = vmatprep.subr.mxu0 0.0
      %1429 = vmatpush1.msra.mxu0 0.0
      %1430 = vmatprep.subr.mxu0 0.0
      %1431 = vmatpush1.msra.mxu0 0.0
      %1432 = vmatprep.subr.mxu0 0.0
      %1433 = vmatpush1.msra.mxu0 0.0
      %1434 = vmatprep.subr.mxu0 0.0
      %1435 = vmatpush1.msra.mxu0 0.0
      %1436 = vmatprep.subr.mxu0 0.0
      %1437 = vmatpush1.msra.mxu0 0.0
      %1438 = vmatprep.mubr.f32.mxu0 0.0
      %1439 = vmatmul.mubr.f32.gmra.mrb[0].mxu0 %v1369
      %v1440 = vpop.f32.mrb[0].mxu0
      %v1441 = vadd.f32 0.0, %v1440
      %v1442 = vpop.f32.mrb[0].mxu0
      %1443 = vmatprep.mubr.f32.mxu0 0.0
      %1444 = vmatmul.mubr.f32.gmra.mrb[0].mxu0 %v1372
      %v1445 = vpop.f32.mrb[0].mxu0
      %v1446 = vadd.f32 0.0, %v1445
      %v1447 = vpop.f32.mrb[0].mxu0
      %1448 = vdwg.mxu0
      %v1449 = vadd.f32 %v578, %v1441
      %v1450 = vadd.f32 %v583, %v1446
      %v1451 = vmax.f32 %v1449, 0.0
      %v1452 = vmax.f32 %v1450, 0.0
      %1453 = vmatprep.subr.mxu0 0.0
      %1454 = vmatpush1.msra.mxu0 %v473
      %1455 = vmatprep.subr.mxu0 0.0
      %1456 = vmatpush1.msra.mxu0 %v474
      %1457 = vmatprep.subr.mxu0 0.0
      %1458 = vmatpush1.msra.mxu0 %v475
      %1459 = vmatprep.subr.mxu0 0.0
      %1460 = vmatpush1.msra.mxu0 %v476
      %1461 = vmatprep.subr.mxu0 0.0
      %1462 = vmatpush1.msra.mxu0 %v477
      %1463 = vmatprep.subr.mxu0 0.0
      %1464 = vmatpush1.msra.mxu0 %v478
      %1465 = vmatprep.subr.mxu0 0.0
      %1466 = vmatpush1.msra.mxu0 %v479
      %1467 = vmatprep.subr.mxu0 0.0
      %1468 = vmatpush1.msra.mxu0 %v480
      %1469 = vmatprep.subr.mxu0 0.0
      %1470 = vmatpush1.msra.mxu0 %v481
      %1471 = vmatprep.subr.mxu0 0.0
      %1472 = vmatpush1.msra.mxu0 %v482
      %1473 = vmatprep.subr.mxu0 0.0
      %1474 = vmatpush1.msra.mxu0 %v483
      %1475 = vmatprep.subr.mxu0 0.0
      %1476 = vmatpush1.msra.mxu0 %v484
      %1477 = vmatprep.subr.mxu0 0.0
      %1478 = vmatpush1.msra.mxu0 %v485
      %1479 = vmatprep.subr.mxu0 0.0
      %1480 = vmatpush1.msra.mxu0 %v486
      %1481 = vmatprep.subr.mxu0 0.0
      %1482 = vmatpush1.msra.mxu0 %v487
      %1483 = vmatprep.subr.mxu0 0.0
      %1484 = vmatpush1.msra.mxu0 %v488
      %1485 = vmatprep.subr.mxu0 0.0
      %1486 = vmatpush1.msra.mxu0 0.0
      %1487 = vmatprep.subr.mxu0 0.0
      %1488 = vmatpush1.msra.mxu0 0.0
      %1489 = vmatprep.subr.mxu0 0.0
      %1490 = vmatpush1.msra.mxu0 0.0
      %1491 = vmatprep.subr.mxu0 0.0
      %1492 = vmatpush1.msra.mxu0 0.0
      %1493 = vmatprep.subr.mxu0 0.0
      %1494 = vmatpush1.msra.mxu0 0.0
      %1495 = vmatprep.subr.mxu0 0.0
      %1496 = vmatpush1.msra.mxu0 0.0
      %1497 = vmatprep.subr.mxu0 0.0
      %1498 = vmatpush1.msra.mxu0 0.0
      %1499 = vmatprep.subr.mxu0 0.0
      %1500 = vmatpush1.msra.mxu0 0.0
      %1501 = vmatprep.subr.mxu0 0.0
      %1502 = vmatpush1.msra.mxu0 0.0
      %1503 = vmatprep.subr.mxu0 0.0
      %1504 = vmatpush1.msra.mxu0 0.0
      %1505 = vmatprep.subr.mxu0 0.0
      %1506 = vmatpush1.msra.mxu0 0.0
      %1507 = vmatprep.subr.mxu0 0.0
      %1508 = vmatpush1.msra.mxu0 0.0
      %1509 = vmatprep.subr.mxu0 0.0
      %1510 = vmatpush1.msra.mxu0 0.0
      %1511 = vmatprep.subr.mxu0 0.0
      %1512 = vmatpush1.msra.mxu0 0.0
      %1513 = vmatprep.subr.mxu0 0.0
      %1514 = vmatpush1.msra.mxu0 0.0
      %1515 = vmatprep.subr.mxu0 0.0
      %1516 = vmatpush1.msra.mxu0 0.0
      %1517 = vmatprep.mubr.f32.mxu0 0.0
      %1518 = vmatmul.mubr.f32.gmra.mrb[0].mxu0 %v1451
      %v1519 = vpop.f32.mrb[0].mxu0
      %v1520 = vadd.f32 %v815, %v1519
      %v1521 = vpop.f32.mrb[0].mxu0
      %1522 = vmatprep.mubr.f32.mxu0 0.0
      %1523 = vmatmul.mubr.f32.gmra.mrb[0].mxu0 %v1452
      %v1524 = vpop.f32.mrb[0].mxu0
      %v1525 = vadd.f32 %v815, %v1524
      %v1526 = vpop.f32.mrb[0].mxu0
      %1527 = vdwg.mxu0
      %v1528 = vmax.f32 %v1520, 0.0
      %v1529 = vmax.f32 %v1525, 0.0
      %v1530 = vmax.f32 %v1318, %v1528
      %v1531 = vmax.f32 %v1319, %v1529
      %v1532 = vsel %vm677, %v1362, inf
      %1533 = vmin.xlane.f32.xlu0 %v1532
      %v1534 = vpop.xlane.xlu0 %1533
      %v1535 = vsel %vm677, %v1363, inf
      %1536 = vmin.xlane.f32.xlu0 %v1535
      %v1537 = vpop.xlane.xlu0 %1536
      %vm1538 = vcmp.le.f32.partialorder %v1362, %v1534
      %vm1539 = vcmp.le.f32.partialorder %v1363, %v1537
      %v1540 = vsel %vm1538, %v470, 16
      %v1541 = vsel %vm1539, %v470, 16
      %v1542 = vsel %vm677, %v1540, 2147483647
      %v1543 = vand.u32 %v1542, 65535
      %v1544 = vshra.s32 %v1542, 16
      %v1545 = vcvt.s32.f32 %v1543
      %v1546 = vcvt.s32.f32 %v1544
      %1547 = vmin.xlane.f32.xlu0 %v1546
      %v1548 = vpop.xlane.xlu0 %1547
      %vm1549 = vcmp.eq.f32.partialorder %v1546, %v1548
      %v1550 = vsel %vm1549, %v1545, inf
      %1551 = vmin.xlane.f32.xlu0 %v1550
      %v1552 = vpop.xlane.xlu0 %1551
      %v1553 = vcvt.f32.s32 %v1552
      %v1554 = vcvt.f32.s32 %v1548
      %v1555 = vshll.u32 %v1554, 16
      %v1556 = vadd.s32 %v1555, %v1553
      %v1557 = vsel %vm677, %v1541, 2147483647
      %v1558 = vand.u32 %v1557, 65535
      %v1559 = vshra.s32 %v1557, 16
      %v1560 = vcvt.s32.f32 %v1558
      %v1561 = vcvt.s32.f32 %v1559
      %1562 = vmin.xlane.f32.xlu0 %v1561
      %v1563 = vpop.xlane.xlu0 %1562
      %vm1564 = vcmp.eq.f32.partialorder %v1561, %v1563
      %v1565 = vsel %vm1564, %v1560, inf
      %1566 = vmin.xlane.f32.xlu0 %v1565
      %v1567 = vpop.xlane.xlu0 %1566
      %v1568 = vcvt.f32.s32 %v1567
      %v1569 = vcvt.f32.s32 %v1563
      %v1570 = vshll.u32 %v1569, 16
      %v1571 = vadd.s32 %v1570, %v1568
      %vm1572 = vcmp.eq.s32.totalorder %v470, %v1556
      %vm1573 = vcmp.eq.s32.totalorder %v470, %v1571
      %v1574 = vsel %vm1572, inf, %v1362
      %v1575 = vsel %vm1573, inf, %v1363
      %v1576 = vsel %vm1572, 1, 0
      %v1577 = vsel %vm1573, 1, 0
      %v1578 = vcvt.s32.f32 %v1576
      %v1579 = vcvt.s32.f32 %v1577
      %v1581 = vsel %vm677, %v1578, 0
      %v1584 = vsel %vm677, %v1579, 0
      %1586 = vmatprep.subr.mxu0 0.0
      %1587 = vmatpush1.msra.mxu0 %v669
      %1588 = vmatprep.subr.mxu0 0.0
      %1589 = vmatpush1.msra.mxu0 %v674
      %1590 = vmatprep.subr.mxu0 0.0
      %1591 = vmatpush1.msra.mxu0 0.0
      %1592 = vmatprep.subr.mxu0 0.0
      %1593 = vmatpush1.msra.mxu0 0.0
      %1594 = vmatprep.subr.mxu0 0.0
      %1595 = vmatpush1.msra.mxu0 0.0
      %1596 = vmatprep.subr.mxu0 0.0
      %1597 = vmatpush1.msra.mxu0 0.0
      %1598 = vmatprep.subr.mxu0 0.0
      %1599 = vmatpush1.msra.mxu0 0.0
      %1600 = vmatprep.subr.mxu0 0.0
      %1601 = vmatpush1.msra.mxu0 0.0
      %1602 = vmatprep.subr.mxu0 0.0
      %1603 = vmatpush1.msra.mxu0 0.0
      %1604 = vmatprep.subr.mxu0 0.0
      %1605 = vmatpush1.msra.mxu0 0.0
      %1606 = vmatprep.subr.mxu0 0.0
      %1607 = vmatpush1.msra.mxu0 0.0
      %1608 = vmatprep.subr.mxu0 0.0
      %1609 = vmatpush1.msra.mxu0 0.0
      %1610 = vmatprep.subr.mxu0 0.0
      %1611 = vmatpush1.msra.mxu0 0.0
      %1612 = vmatprep.subr.mxu0 0.0
      %1613 = vmatpush1.msra.mxu0 0.0
      %1614 = vmatprep.subr.mxu0 0.0
      %1615 = vmatpush1.msra.mxu0 0.0
      %1616 = vmatprep.subr.mxu0 0.0
      %1617 = vmatpush1.msra.mxu0 0.0
      %1618 = vmatprep.subr.mxu0 0.0
      %1619 = vmatpush1.msra.mxu0 0.0
      %1620 = vmatprep.subr.mxu0 0.0
      %1621 = vmatpush1.msra.mxu0 0.0
      %1622 = vmatprep.subr.mxu0 0.0
      %1623 = vmatpush1.msra.mxu0 0.0
      %1624 = vmatprep.subr.mxu0 0.0
      %1625 = vmatpush1.msra.mxu0 0.0
      %1626 = vmatprep.subr.mxu0 0.0
      %1627 = vmatpush1.msra.mxu0 0.0
      %1628 = vmatprep.subr.mxu0 0.0
      %1629 = vmatpush1.msra.mxu0 0.0
      %1630 = vmatprep.subr.mxu0 0.0
      %1631 = vmatpush1.msra.mxu0 0.0
      %1632 = vmatprep.subr.mxu0 0.0
      %1633 = vmatpush1.msra.mxu0 0.0
      %1634 = vmatprep.subr.mxu0 0.0
      %1635 = vmatpush1.msra.mxu0 0.0
      %1636 = vmatprep.subr.mxu0 0.0
      %1637 = vmatpush1.msra.mxu0 0.0
      %1638 = vmatprep.subr.mxu0 0.0
      %1639 = vmatpush1.msra.mxu0 0.0
      %1640 = vmatprep.subr.mxu0 0.0
      %1641 = vmatpush1.msra.mxu0 0.0
      %1642 = vmatprep.subr.mxu0 0.0
      %1643 = vmatpush1.msra.mxu0 0.0
      %1644 = vmatprep.subr.mxu0 0.0
      %1645 = vmatpush1.msra.mxu0 0.0
      %1646 = vmatprep.subr.mxu0 0.0
      %1647 = vmatpush1.msra.mxu0 0.0
      %1648 = vmatprep.subr.mxu0 0.0
      %1649 = vmatpush1.msra.mxu0 0.0
      %1650 = vmatprep.mubr.f32.mxu0 0.0
      %1651 = vmatmul.mubr.f32.gmra.mrb[0].mxu0 %v1581
      %v1652 = vpop.f32.mrb[0].mxu0
      %v1653 = vadd.f32 0.0, %v1652
      %v1654 = vpop.f32.mrb[0].mxu0
      %1655 = vmatprep.mubr.f32.mxu0 0.0
      %1656 = vmatmul.mubr.f32.gmra.mrb[0].mxu0 %v1584
      %v1657 = vpop.f32.mrb[0].mxu0
      %v1658 = vadd.f32 0.0, %v1657
      %v1659 = vpop.f32.mrb[0].mxu0
      %1660 = vdwg.mxu0
      %v1661 = vadd.f32 %v578, %v1653
      %v1662 = vadd.f32 %v583, %v1658
      %v1663 = vmax.f32 %v1661, 0.0
      %v1664 = vmax.f32 %v1662, 0.0
      %1665 = vmatprep.subr.mxu0 0.0
      %1666 = vmatpush1.msra.mxu0 %v473
      %1667 = vmatprep.subr.mxu0 0.0
      %1668 = vmatpush1.msra.mxu0 %v474
      %1669 = vmatprep.subr.mxu0 0.0
      %1670 = vmatpush1.msra.mxu0 %v475
      %1671 = vmatprep.subr.mxu0 0.0
      %1672 = vmatpush1.msra.mxu0 %v476
      %1673 = vmatprep.subr.mxu0 0.0
      %1674 = vmatpush1.msra.mxu0 %v477
      %1675 = vmatprep.subr.mxu0 0.0
      %1676 = vmatpush1.msra.mxu0 %v478
      %1677 = vmatprep.subr.mxu0 0.0
      %1678 = vmatpush1.msra.mxu0 %v479
      %1679 = vmatprep.subr.mxu0 0.0
      %1680 = vmatpush1.msra.mxu0 %v480
      %1681 = vmatprep.subr.mxu0 0.0
      %1682 = vmatpush1.msra.mxu0 %v481
      %1683 = vmatprep.subr.mxu0 0.0
      %1684 = vmatpush1.msra.mxu0 %v482
      %1685 = vmatprep.subr.mxu0 0.0
      %1686 = vmatpush1.msra.mxu0 %v483
      %1687 = vmatprep.subr.mxu0 0.0
      %1688 = vmatpush1.msra.mxu0 %v484
      %1689 = vmatprep.subr.mxu0 0.0
      %1690 = vmatpush1.msra.mxu0 %v485
      %1691 = vmatprep.subr.mxu0 0.0
      %1692 = vmatpush1.msra.mxu0 %v486
      %1693 = vmatprep.subr.mxu0 0.0
      %1694 = vmatpush1.msra.mxu0 %v487
      %1695 = vmatprep.subr.mxu0 0.0
      %1696 = vmatpush1.msra.mxu0 %v488
      %1697 = vmatprep.subr.mxu0 0.0
      %1698 = vmatpush1.msra.mxu0 0.0
      %1699 = vmatprep.subr.mxu0 0.0
      %1700 = vmatpush1.msra.mxu0 0.0
      %1701 = vmatprep.subr.mxu0 0.0
      %1702 = vmatpush1.msra.mxu0 0.0
      %1703 = vmatprep.subr.mxu0 0.0
      %1704 = vmatpush1.msra.mxu0 0.0
      %1705 = vmatprep.subr.mxu0 0.0
      %1706 = vmatpush1.msra.mxu0 0.0
      %1707 = vmatprep.subr.mxu0 0.0
      %1708 = vmatpush1.msra.mxu0 0.0
      %1709 = vmatprep.subr.mxu0 0.0
      %1710 = vmatpush1.msra.mxu0 0.0
      %1711 = vmatprep.subr.mxu0 0.0
      %1712 = vmatpush1.msra.mxu0 0.0
      %1713 = vmatprep.subr.mxu0 0.0
      %1714 = vmatpush1.msra.mxu0 0.0
      %1715 = vmatprep.subr.mxu0 0.0
      %1716 = vmatpush1.msra.mxu0 0.0
      %1717 = vmatprep.subr.mxu0 0.0
      %1718 = vmatpush1.msra.mxu0 0.0
      %1719 = vmatprep.subr.mxu0 0.0
      %1720 = vmatpush1.msra.mxu0 0.0
      %1721 = vmatprep.subr.mxu0 0.0
      %1722 = vmatpush1.msra.mxu0 0.0
      %1723 = vmatprep.subr.mxu0 0.0
      %1724 = vmatpush1.msra.mxu0 0.0
      %1725 = vmatprep.subr.mxu0 0.0
      %1726 = vmatpush1.msra.mxu0 0.0
      %1727 = vmatprep.subr.mxu0 0.0
      %1728 = vmatpush1.msra.mxu0 0.0
      %1729 = vmatprep.mubr.f32.mxu0 0.0
      %1730 = vmatmul.mubr.f32.gmra.mrb[0].mxu0 %v1663
      %v1731 = vpop.f32.mrb[0].mxu0
      %v1732 = vadd.f32 %v815, %v1731
      %v1733 = vpop.f32.mrb[0].mxu0
      %1734 = vmatprep.mubr.f32.mxu0 0.0
      %1735 = vmatmul.mubr.f32.gmra.mrb[0].mxu0 %v1664
      %v1736 = vpop.f32.mrb[0].mxu0
      %v1737 = vadd.f32 %v815, %v1736
      %v1738 = vpop.f32.mrb[0].mxu0
      %1739 = vdwg.mxu0
      %v1740 = vmax.f32 %v1732, 0.0
      %v1741 = vmax.f32 %v1737, 0.0
      %v1742 = vmax.f32 %v1530, %v1740
      %v1743 = vmax.f32 %v1531, %v1741
      %v1744 = vsel %vm677, %v1574, inf
      %1745 = vmin.xlane.f32.xlu0 %v1744
      %v1746 = vpop.xlane.xlu0 %1745
      %v1747 = vsel %vm677, %v1575, inf
      %1748 = vmin.xlane.f32.xlu0 %v1747
      %v1749 = vpop.xlane.xlu0 %1748
      %vm1750 = vcmp.le.f32.partialorder %v1574, %v1746
      %vm1751 = vcmp.le.f32.partialorder %v1575, %v1749
      %v1752 = vsel %vm1750, %v470, 16
      %v1753 = vsel %vm1751, %v470, 16
      %v1754 = vsel %vm677, %v1752, 2147483647
      %v1755 = vand.u32 %v1754, 65535
      %v1756 = vshra.s32 %v1754, 16
      %v1757 = vcvt.s32.f32 %v1755
      %v1758 = vcvt.s32.f32 %v1756
      %1759 = vmin.xlane.f32.xlu0 %v1758
      %v1760 = vpop.xlane.xlu0 %1759
      %vm1761 = vcmp.eq.f32.partialorder %v1758, %v1760
      %v1762 = vsel %vm1761, %v1757, inf
      %1763 = vmin.xlane.f32.xlu0 %v1762
      %v1764 = vpop.xlane.xlu0 %1763
      %v1765 = vcvt.f32.s32 %v1764
      %v1766 = vcvt.f32.s32 %v1760
      %v1767 = vshll.u32 %v1766, 16
      %v1768 = vadd.s32 %v1767, %v1765
      %v1769 = vsel %vm677, %v1753, 2147483647
      %v1770 = vand.u32 %v1769, 65535
      %v1771 = vshra.s32 %v1769, 16
      %v1772 = vcvt.s32.f32 %v1770
      %v1773 = vcvt.s32.f32 %v1771
      %1774 = vmin.xlane.f32.xlu0 %v1773
      %v1775 = vpop.xlane.xlu0 %1774
      %vm1776 = vcmp.eq.f32.partialorder %v1773, %v1775
      %v1777 = vsel %vm1776, %v1772, inf
      %1778 = vmin.xlane.f32.xlu0 %v1777
      %v1779 = vpop.xlane.xlu0 %1778
      %v1780 = vcvt.f32.s32 %v1779
      %v1781 = vcvt.f32.s32 %v1775
      %v1782 = vshll.u32 %v1781, 16
      %v1783 = vadd.s32 %v1782, %v1780
      %vm1784 = vcmp.eq.s32.totalorder %v470, %v1768
      %vm1785 = vcmp.eq.s32.totalorder %v470, %v1783
      %v1786 = vsel %vm1784, inf, %v1574
      %v1787 = vsel %vm1785, inf, %v1575
      %v1788 = vsel %vm1784, 1, 0
      %v1789 = vsel %vm1785, 1, 0
      %v1790 = vcvt.s32.f32 %v1788
      %v1791 = vcvt.s32.f32 %v1789
      %v1793 = vsel %vm677, %v1790, 0
      %v1796 = vsel %vm677, %v1791, 0
      %1798 = vmatprep.subr.mxu0 0.0
      %1799 = vmatpush1.msra.mxu0 %v669
      %1800 = vmatprep.subr.mxu0 0.0
      %1801 = vmatpush1.msra.mxu0 %v674
      %1802 = vmatprep.subr.mxu0 0.0
      %1803 = vmatpush1.msra.mxu0 0.0
      %1804 = vmatprep.subr.mxu0 0.0
      %1805 = vmatpush1.msra.mxu0 0.0
      %1806 = vmatprep.subr.mxu0 0.0
      %1807 = vmatpush1.msra.mxu0 0.0
      %1808 = vmatprep.subr.mxu0 0.0
      %1809 = vmatpush1.msra.mxu0 0.0
      %1810 = vmatprep.subr.mxu0 0.0
      %1811 = vmatpush1.msra.mxu0 0.0
      %1812 = vmatprep.subr.mxu0 0.0
      %1813 = vmatpush1.msra.mxu0 0.0
      %1814 = vmatprep.subr.mxu0 0.0
      %1815 = vmatpush1.msra.mxu0 0.0
      %1816 = vmatprep.subr.mxu0 0.0
      %1817 = vmatpush1.msra.mxu0 0.0
      %1818 = vmatprep.subr.mxu0 0.0
      %1819 = vmatpush1.msra.mxu0 0.0
      %1820 = vmatprep.subr.mxu0 0.0
      %1821 = vmatpush1.msra.mxu0 0.0
      %1822 = vmatprep.subr.mxu0 0.0
      %1823 = vmatpush1.msra.mxu0 0.0
      %1824 = vmatprep.subr.mxu0 0.0
      %1825 = vmatpush1.msra.mxu0 0.0
      %1826 = vmatprep.subr.mxu0 0.0
      %1827 = vmatpush1.msra.mxu0 0.0
      %1828 = vmatprep.subr.mxu0 0.0
      %1829 = vmatpush1.msra.mxu0 0.0
      %1830 = vmatprep.subr.mxu0 0.0
      %1831 = vmatpush1.msra.mxu0 0.0
      %1832 = vmatprep.subr.mxu0 0.0
      %1833 = vmatpush1.msra.mxu0 0.0
      %1834 = vmatprep.subr.mxu0 0.0
      %1835 = vmatpush1.msra.mxu0 0.0
      %1836 = vmatprep.subr.mxu0 0.0
      %1837 = vmatpush1.msra.mxu0 0.0
      %1838 = vmatprep.subr.mxu0 0.0
      %1839 = vmatpush1.msra.mxu0 0.0
      %1840 = vmatprep.subr.mxu0 0.0
      %1841 = vmatpush1.msra.mxu0 0.0
      %1842 = vmatprep.subr.mxu0 0.0
      %1843 = vmatpush1.msra.mxu0 0.0
      %1844 = vmatprep.subr.mxu0 0.0
      %1845 = vmatpush1.msra.mxu0 0.0
      %1846 = vmatprep.subr.mxu0 0.0
      %1847 = vmatpush1.msra.mxu0 0.0
      %1848 = vmatprep.subr.mxu0 0.0
      %1849 = vmatpush1.msra.mxu0 0.0
      %1850 = vmatprep.subr.mxu0 0.0
      %1851 = vmatpush1.msra.mxu0 0.0
      %1852 = vmatprep.subr.mxu0 0.0
      %1853 = vmatpush1.msra.mxu0 0.0
      %1854 = vmatprep.subr.mxu0 0.0
      %1855 = vmatpush1.msra.mxu0 0.0
      %1856 = vmatprep.subr.mxu0 0.0
      %1857 = vmatpush1.msra.mxu0 0.0
      %1858 = vmatprep.subr.mxu0 0.0
      %1859 = vmatpush1.msra.mxu0 0.0
      %1860 = vmatprep.subr.mxu0 0.0
      %1861 = vmatpush1.msra.mxu0 0.0
      %1862 = vmatprep.mubr.f32.mxu0 0.0
      %1863 = vmatmul.mubr.f32.gmra.mrb[0].mxu0 %v1793
      %v1864 = vpop.f32.mrb[0].mxu0
      %v1865 = vadd.f32 0.0, %v1864
      %v1866 = vpop.f32.mrb[0].mxu0
      %1867 = vmatprep.mubr.f32.mxu0 0.0
      %1868 = vmatmul.mubr.f32.gmra.mrb[0].mxu0 %v1796
      %v1869 = vpop.f32.mrb[0].mxu0
      %v1870 = vadd.f32 0.0, %v1869
      %v1871 = vpop.f32.mrb[0].mxu0
      %1872 = vdwg.mxu0
      %v1873 = vadd.f32 %v578, %v1865
      %v1874 = vadd.f32 %v583, %v1870
      %v1875 = vmax.f32 %v1873, 0.0
      %v1876 = vmax.f32 %v1874, 0.0
      %1877 = vmatprep.subr.mxu0 0.0
      %1878 = vmatpush1.msra.mxu0 %v473
      %1879 = vmatprep.subr.mxu0 0.0
      %1880 = vmatpush1.msra.mxu0 %v474
      %1881 = vmatprep.subr.mxu0 0.0
      %1882 = vmatpush1.msra.mxu0 %v475
      %1883 = vmatprep.subr.mxu0 0.0
      %1884 = vmatpush1.msra.mxu0 %v476
      %1885 = vmatprep.subr.mxu0 0.0
      %1886 = vmatpush1.msra.mxu0 %v477
      %1887 = vmatprep.subr.mxu0 0.0
      %1888 = vmatpush1.msra.mxu0 %v478
      %1889 = vmatprep.subr.mxu0 0.0
      %1890 = vmatpush1.msra.mxu0 %v479
      %1891 = vmatprep.subr.mxu0 0.0
      %1892 = vmatpush1.msra.mxu0 %v480
      %1893 = vmatprep.subr.mxu0 0.0
      %1894 = vmatpush1.msra.mxu0 %v481
      %1895 = vmatprep.subr.mxu0 0.0
      %1896 = vmatpush1.msra.mxu0 %v482
      %1897 = vmatprep.subr.mxu0 0.0
      %1898 = vmatpush1.msra.mxu0 %v483
      %1899 = vmatprep.subr.mxu0 0.0
      %1900 = vmatpush1.msra.mxu0 %v484
      %1901 = vmatprep.subr.mxu0 0.0
      %1902 = vmatpush1.msra.mxu0 %v485
      %1903 = vmatprep.subr.mxu0 0.0
      %1904 = vmatpush1.msra.mxu0 %v486
      %1905 = vmatprep.subr.mxu0 0.0
      %1906 = vmatpush1.msra.mxu0 %v487
      %1907 = vmatprep.subr.mxu0 0.0
      %1908 = vmatpush1.msra.mxu0 %v488
      %1909 = vmatprep.subr.mxu0 0.0
      %1910 = vmatpush1.msra.mxu0 0.0
      %1911 = vmatprep.subr.mxu0 0.0
      %1912 = vmatpush1.msra.mxu0 0.0
      %1913 = vmatprep.subr.mxu0 0.0
      %1914 = vmatpush1.msra.mxu0 0.0
      %1915 = vmatprep.subr.mxu0 0.0
      %1916 = vmatpush1.msra.mxu0 0.0
      %1917 = vmatprep.subr.mxu0 0.0
      %1918 = vmatpush1.msra.mxu0 0.0
      %1919 = vmatprep.subr.mxu0 0.0
      %1920 = vmatpush1.msra.mxu0 0.0
      %1921 = vmatprep.subr.mxu0 0.0
      %1922 = vmatpush1.msra.mxu0 0.0
      %1923 = vmatprep.subr.mxu0 0.0
      %1924 = vmatpush1.msra.mxu0 0.0
      %1925 = vmatprep.subr.mxu0 0.0
      %1926 = vmatpush1.msra.mxu0 0.0
      %1927 = vmatprep.subr.mxu0 0.0
      %1928 = vmatpush1.msra.mxu0 0.0
      %1929 = vmatprep.subr.mxu0 0.0
      %1930 = vmatpush1.msra.mxu0 0.0
      %1931 = vmatprep.subr.mxu0 0.0
      %1932 = vmatpush1.msra.mxu0 0.0
      %1933 = vmatprep.subr.mxu0 0.0
      %1934 = vmatpush1.msra.mxu0 0.0
      %1935 = vmatprep.subr.mxu0 0.0
      %1936 = vmatpush1.msra.mxu0 0.0
      %1937 = vmatprep.subr.mxu0 0.0
      %1938 = vmatpush1.msra.mxu0 0.0
      %1939 = vmatprep.subr.mxu0 0.0
      %1940 = vmatpush1.msra.mxu0 0.0
      %1941 = vmatprep.mubr.f32.mxu0 0.0
      %1942 = vmatmul.mubr.f32.gmra.mrb[0].mxu0 %v1875
      %v1943 = vpop.f32.mrb[0].mxu0
      %v1944 = vadd.f32 %v815, %v1943
      %v1945 = vpop.f32.mrb[0].mxu0
      %1946 = vmatprep.mubr.f32.mxu0 0.0
      %1947 = vmatmul.mubr.f32.gmra.mrb[0].mxu0 %v1876
      %v1948 = vpop.f32.mrb[0].mxu0
      %v1949 = vadd.f32 %v815, %v1948
      %v1950 = vpop.f32.mrb[0].mxu0
      %1951 = vdwg.mxu0
      %v1952 = vmax.f32 %v1944, 0.0
      %v1953 = vmax.f32 %v1949, 0.0
      %v1954 = vmax.f32 %v1742, %v1952
      %v1955 = vmax.f32 %v1743, %v1953
      %v1956 = vsel %vm677, %v1786, inf
      %1957 = vmin.xlane.f32.xlu0 %v1956
      %v1958 = vpop.xlane.xlu0 %1957
      %v1959 = vsel %vm677, %v1787, inf
      %1960 = vmin.xlane.f32.xlu0 %v1959
      %v1961 = vpop.xlane.xlu0 %1960
      %vm1962 = vcmp.le.f32.partialorder %v1786, %v1958
      %vm1963 = vcmp.le.f32.partialorder %v1787, %v1961
      %v1964 = vsel %vm1962, %v470, 16
      %v1965 = vsel %vm1963, %v470, 16
      %v1966 = vsel %vm677, %v1964, 2147483647
      %v1967 = vand.u32 %v1966, 65535
      %v1968 = vshra.s32 %v1966, 16
      %v1969 = vcvt.s32.f32 %v1967
      %v1970 = vcvt.s32.f32 %v1968
      %1971 = vmin.xlane.f32.xlu0 %v1970
      %v1972 = vpop.xlane.xlu0 %1971
      %vm1973 = vcmp.eq.f32.partialorder %v1970, %v1972
      %v1974 = vsel %vm1973, %v1969, inf
      %1975 = vmin.xlane.f32.xlu0 %v1974
      %v1976 = vpop.xlane.xlu0 %1975
      %v1977 = vcvt.f32.s32 %v1976
      %v1978 = vcvt.f32.s32 %v1972
      %v1979 = vshll.u32 %v1978, 16
      %v1980 = vadd.s32 %v1979, %v1977
      %v1981 = vsel %vm677, %v1965, 2147483647
      %v1982 = vand.u32 %v1981, 65535
      %v1983 = vshra.s32 %v1981, 16
      %v1984 = vcvt.s32.f32 %v1982
      %v1985 = vcvt.s32.f32 %v1983
      %1986 = vmin.xlane.f32.xlu0 %v1985
      %v1987 = vpop.xlane.xlu0 %1986
      %vm1988 = vcmp.eq.f32.partialorder %v1985, %v1987
      %v1989 = vsel %vm1988, %v1984, inf
      %1990 = vmin.xlane.f32.xlu0 %v1989
      %v1991 = vpop.xlane.xlu0 %1990
      %v1992 = vcvt.f32.s32 %v1991
      %v1993 = vcvt.f32.s32 %v1987
      %v1994 = vshll.u32 %v1993, 16
      %v1995 = vadd.s32 %v1994, %v1992
      %vm1996 = vcmp.eq.s32.totalorder %v470, %v1980
      %vm1997 = vcmp.eq.s32.totalorder %v470, %v1995
      %v1998 = vsel %vm1996, inf, %v1786
      %v1999 = vsel %vm1997, inf, %v1787
      %v2000 = vsel %vm1996, 1, 0
      %v2001 = vsel %vm1997, 1, 0
      %v2002 = vcvt.s32.f32 %v2000
      %v2003 = vcvt.s32.f32 %v2001
      %v2005 = vsel %vm677, %v2002, 0
      %v2008 = vsel %vm677, %v2003, 0
      %2010 = vmatprep.subr.mxu0 0.0
      %2011 = vmatpush1.msra.mxu0 %v669
      %2012 = vmatprep.subr.mxu0 0.0
      %2013 = vmatpush1.msra.mxu0 %v674
      %2014 = vmatprep.subr.mxu0 0.0
      %2015 = vmatpush1.msra.mxu0 0.0
      %2016 = vmatprep.subr.mxu0 0.0
      %2017 = vmatpush1.msra.mxu0 0.0
      %2018 = vmatprep.subr.mxu0 0.0
      %2019 = vmatpush1.msra.mxu0 0.0
      %2020 = vmatprep.subr.mxu0 0.0
      %2021 = vmatpush1.msra.mxu0 0.0
      %2022 = vmatprep.subr.mxu0 0.0
      %2023 = vmatpush1.msra.mxu0 0.0
      %2024 = vmatprep.subr.mxu0 0.0
      %2025 = vmatpush1.msra.mxu0 0.0
      %2026 = vmatprep.subr.mxu0 0.0
      %2027 = vmatpush1.msra.mxu0 0.0
      %2028 = vmatprep.subr.mxu0 0.0
      %2029 = vmatpush1.msra.mxu0 0.0
      %2030 = vmatprep.subr.mxu0 0.0
      %2031 = vmatpush1.msra.mxu0 0.0
      %2032 = vmatprep.subr.mxu0 0.0
      %2033 = vmatpush1.msra.mxu0 0.0
      %2034 = vmatprep.subr.mxu0 0.0
      %2035 = vmatpush1.msra.mxu0 0.0
      %2036 = vmatprep.subr.mxu0 0.0
      %2037 = vmatpush1.msra.mxu0 0.0
      %2038 = vmatprep.subr.mxu0 0.0
      %2039 = vmatpush1.msra.mxu0 0.0
      %2040 = vmatprep.subr.mxu0 0.0
      %2041 = vmatpush1.msra.mxu0 0.0
      %2042 = vmatprep.subr.mxu0 0.0
      %2043 = vmatpush1.msra.mxu0 0.0
      %2044 = vmatprep.subr.mxu0 0.0
      %2045 = vmatpush1.msra.mxu0 0.0
      %2046 = vmatprep.subr.mxu0 0.0
      %2047 = vmatpush1.msra.mxu0 0.0
      %2048 = vmatprep.subr.mxu0 0.0
      %2049 = vmatpush1.msra.mxu0 0.0
      %2050 = vmatprep.subr.mxu0 0.0
      %2051 = vmatpush1.msra.mxu0 0.0
      %2052 = vmatprep.subr.mxu0 0.0
      %2053 = vmatpush1.msra.mxu0 0.0
      %2054 = vmatprep.subr.mxu0 0.0
      %2055 = vmatpush1.msra.mxu0 0.0
      %2056 = vmatprep.subr.mxu0 0.0
      %2057 = vmatpush1.msra.mxu0 0.0
      %2058 = vmatprep.subr.mxu0 0.0
      %2059 = vmatpush1.msra.mxu0 0.0
      %2060 = vmatprep.subr.mxu0 0.0
      %2061 = vmatpush1.msra.mxu0 0.0
      %2062 = vmatprep.subr.mxu0 0.0
      %2063 = vmatpush1.msra.mxu0 0.0
      %2064 = vmatprep.subr.mxu0 0.0
      %2065 = vmatpush1.msra.mxu0 0.0
      %2066 = vmatprep.subr.mxu0 0.0
      %2067 = vmatpush1.msra.mxu0 0.0
      %2068 = vmatprep.subr.mxu0 0.0
      %2069 = vmatpush1.msra.mxu0 0.0
      %2070 = vmatprep.subr.mxu0 0.0
      %2071 = vmatpush1.msra.mxu0 0.0
      %2072 = vmatprep.subr.mxu0 0.0
      %2073 = vmatpush1.msra.mxu0 0.0
      %2074 = vmatprep.mubr.f32.mxu0 0.0
      %2075 = vmatmul.mubr.f32.gmra.mrb[0].mxu0 %v2005
      %v2076 = vpop.f32.mrb[0].mxu0
      %v2077 = vadd.f32 0.0, %v2076
      %v2078 = vpop.f32.mrb[0].mxu0
      %2079 = vmatprep.mubr.f32.mxu0 0.0
      %2080 = vmatmul.mubr.f32.gmra.mrb[0].mxu0 %v2008
      %v2081 = vpop.f32.mrb[0].mxu0
      %v2082 = vadd.f32 0.0, %v2081
      %v2083 = vpop.f32.mrb[0].mxu0
      %2084 = vdwg.mxu0
      %v2085 = vadd.f32 %v578, %v2077
      %v2086 = vadd.f32 %v583, %v2082
      %v2087 = vmax.f32 %v2085, 0.0
      %v2088 = vmax.f32 %v2086, 0.0
      %2089 = vmatprep.subr.mxu0 0.0
      %2090 = vmatpush1.msra.mxu0 %v473
      %2091 = vmatprep.subr.mxu0 0.0
      %2092 = vmatpush1.msra.mxu0 %v474
      %2093 = vmatprep.subr.mxu0 0.0
      %2094 = vmatpush1.msra.mxu0 %v475
      %2095 = vmatprep.subr.mxu0 0.0
      %2096 = vmatpush1.msra.mxu0 %v476
      %2097 = vmatprep.subr.mxu0 0.0
      %2098 = vmatpush1.msra.mxu0 %v477
      %2099 = vmatprep.subr.mxu0 0.0
      %2100 = vmatpush1.msra.mxu0 %v478
      %2101 = vmatprep.subr.mxu0 0.0
      %2102 = vmatpush1.msra.mxu0 %v479
      %2103 = vmatprep.subr.mxu0 0.0
      %2104 = vmatpush1.msra.mxu0 %v480
      %2105 = vmatprep.subr.mxu0 0.0
      %2106 = vmatpush1.msra.mxu0 %v481
      %2107 = vmatprep.subr.mxu0 0.0
      %2108 = vmatpush1.msra.mxu0 %v482
      %2109 = vmatprep.subr.mxu0 0.0
      %2110 = vmatpush1.msra.mxu0 %v483
      %2111 = vmatprep.subr.mxu0 0.0
      %2112 = vmatpush1.msra.mxu0 %v484
      %2113 = vmatprep.subr.mxu0 0.0
      %2114 = vmatpush1.msra.mxu0 %v485
      %2115 = vmatprep.subr.mxu0 0.0
      %2116 = vmatpush1.msra.mxu0 %v486
      %2117 = vmatprep.subr.mxu0 0.0
      %2118 = vmatpush1.msra.mxu0 %v487
      %2119 = vmatprep.subr.mxu0 0.0
      %2120 = vmatpush1.msra.mxu0 %v488
      %2121 = vmatprep.subr.mxu0 0.0
      %2122 = vmatpush1.msra.mxu0 0.0
      %2123 = vmatprep.subr.mxu0 0.0
      %2124 = vmatpush1.msra.mxu0 0.0
      %2125 = vmatprep.subr.mxu0 0.0
      %2126 = vmatpush1.msra.mxu0 0.0
      %2127 = vmatprep.subr.mxu0 0.0
      %2128 = vmatpush1.msra.mxu0 0.0
      %2129 = vmatprep.subr.mxu0 0.0
      %2130 = vmatpush1.msra.mxu0 0.0
      %2131 = vmatprep.subr.mxu0 0.0
      %2132 = vmatpush1.msra.mxu0 0.0
      %2133 = vmatprep.subr.mxu0 0.0
      %2134 = vmatpush1.msra.mxu0 0.0
      %2135 = vmatprep.subr.mxu0 0.0
      %2136 = vmatpush1.msra.mxu0 0.0
      %2137 = vmatprep.subr.mxu0 0.0
      %2138 = vmatpush1.msra.mxu0 0.0
      %2139 = vmatprep.subr.mxu0 0.0
      %2140 = vmatpush1.msra.mxu0 0.0
      %2141 = vmatprep.subr.mxu0 0.0
      %2142 = vmatpush1.msra.mxu0 0.0
      %2143 = vmatprep.subr.mxu0 0.0
      %2144 = vmatpush1.msra.mxu0 0.0
      %2145 = vmatprep.subr.mxu0 0.0
      %2146 = vmatpush1.msra.mxu0 0.0
      %2147 = vmatprep.subr.mxu0 0.0
      %2148 = vmatpush1.msra.mxu0 0.0
      %2149 = vmatprep.subr.mxu0 0.0
      %2150 = vmatpush1.msra.mxu0 0.0
      %2151 = vmatprep.subr.mxu0 0.0
      %2152 = vmatpush1.msra.mxu0 0.0
      %2153 = vmatprep.mubr.f32.mxu0 0.0
      %2154 = vmatmul.mubr.f32.gmra.mrb[0].mxu0 %v2087
      %v2155 = vpop.f32.mrb[0].mxu0
      %v2156 = vadd.f32 %v815, %v2155
      %v2157 = vpop.f32.mrb[0].mxu0
      %2158 = vmatprep.mubr.f32.mxu0 0.0
      %2159 = vmatmul.mubr.f32.gmra.mrb[0].mxu0 %v2088
      %v2160 = vpop.f32.mrb[0].mxu0
      %v2161 = vadd.f32 %v815, %v2160
      %v2162 = vpop.f32.mrb[0].mxu0
      %2163 = vdwg.mxu0
      %v2164 = vmax.f32 %v2156, 0.0
      %v2165 = vmax.f32 %v2161, 0.0
      %v2166 = vmax.f32 %v1954, %v2164
      %v2167 = vmax.f32 %v1955, %v2165
      %v2168 = vsel %vm677, %v1998, inf
      %2169 = vmin.xlane.f32.xlu0 %v2168
      %v2170 = vpop.xlane.xlu0 %2169
      %v2171 = vsel %vm677, %v1999, inf
      %2172 = vmin.xlane.f32.xlu0 %v2171
      %v2173 = vpop.xlane.xlu0 %2172
      %vm2174 = vcmp.le.f32.partialorder %v1998, %v2170
      %vm2175 = vcmp.le.f32.partialorder %v1999, %v2173
      %v2176 = vsel %vm2174, %v470, 16
      %v2177 = vsel %vm2175, %v470, 16
      %v2178 = vsel %vm677, %v2176, 2147483647
      %v2179 = vand.u32 %v2178, 65535
      %v2180 = vshra.s32 %v2178, 16
      %v2181 = vcvt.s32.f32 %v2179
      %v2182 = vcvt.s32.f32 %v2180
      %2183 = vmin.xlane.f32.xlu0 %v2182
      %v2184 = vpop.xlane.xlu0 %2183
      %vm2185 = vcmp.eq.f32.partialorder %v2182, %v2184
      %v2186 = vsel %vm2185, %v2181, inf
      %2187 = vmin.xlane.f32.xlu0 %v2186
      %v2188 = vpop.xlane.xlu0 %2187
      %v2189 = vcvt.f32.s32 %v2188
      %v2190 = vcvt.f32.s32 %v2184
      %v2191 = vshll.u32 %v2190, 16
      %v2192 = vadd.s32 %v2191, %v2189
      %v2193 = vsel %vm677, %v2177, 2147483647
      %v2194 = vand.u32 %v2193, 65535
      %v2195 = vshra.s32 %v2193, 16
      %v2196 = vcvt.s32.f32 %v2194
      %v2197 = vcvt.s32.f32 %v2195
      %2198 = vmin.xlane.f32.xlu0 %v2197
      %v2199 = vpop.xlane.xlu0 %2198
      %vm2200 = vcmp.eq.f32.partialorder %v2197, %v2199
      %v2201 = vsel %vm2200, %v2196, inf
      %2202 = vmin.xlane.f32.xlu0 %v2201
      %v2203 = vpop.xlane.xlu0 %2202
      %v2204 = vcvt.f32.s32 %v2203
      %v2205 = vcvt.f32.s32 %v2199
      %v2206 = vshll.u32 %v2205, 16
      %v2207 = vadd.s32 %v2206, %v2204
      %vm2208 = vcmp.eq.s32.totalorder %v470, %v2192
      %vm2209 = vcmp.eq.s32.totalorder %v470, %v2207
      %v2210 = vsel %vm2208, inf, %v1998
      %v2211 = vsel %vm2209, inf, %v1999
      %v2212 = vsel %vm2208, 1, 0
      %v2213 = vsel %vm2209, 1, 0
      %v2214 = vcvt.s32.f32 %v2212
      %v2215 = vcvt.s32.f32 %v2213
      %v2217 = vsel %vm677, %v2214, 0
      %v2220 = vsel %vm677, %v2215, 0
      %2222 = vmatprep.subr.mxu0 0.0
      %2223 = vmatpush1.msra.mxu0 %v669
      %2224 = vmatprep.subr.mxu0 0.0
      %2225 = vmatpush1.msra.mxu0 %v674
      %2226 = vmatprep.subr.mxu0 0.0
      %2227 = vmatpush1.msra.mxu0 0.0
      %2228 = vmatprep.subr.mxu0 0.0
      %2229 = vmatpush1.msra.mxu0 0.0
      %2230 = vmatprep.subr.mxu0 0.0
      %2231 = vmatpush1.msra.mxu0 0.0
      %2232 = vmatprep.subr.mxu0 0.0
      %2233 = vmatpush1.msra.mxu0 0.0
      %2234 = vmatprep.subr.mxu0 0.0
      %2235 = vmatpush1.msra.mxu0 0.0
      %2236 = vmatprep.subr.mxu0 0.0
      %2237 = vmatpush1.msra.mxu0 0.0
      %2238 = vmatprep.subr.mxu0 0.0
      %2239 = vmatpush1.msra.mxu0 0.0
      %2240 = vmatprep.subr.mxu0 0.0
      %2241 = vmatpush1.msra.mxu0 0.0
      %2242 = vmatprep.subr.mxu0 0.0
      %2243 = vmatpush1.msra.mxu0 0.0
      %2244 = vmatprep.subr.mxu0 0.0
      %2245 = vmatpush1.msra.mxu0 0.0
      %2246 = vmatprep.subr.mxu0 0.0
      %2247 = vmatpush1.msra.mxu0 0.0
      %2248 = vmatprep.subr.mxu0 0.0
      %2249 = vmatpush1.msra.mxu0 0.0
      %2250 = vmatprep.subr.mxu0 0.0
      %2251 = vmatpush1.msra.mxu0 0.0
      %2252 = vmatprep.subr.mxu0 0.0
      %2253 = vmatpush1.msra.mxu0 0.0
      %2254 = vmatprep.subr.mxu0 0.0
      %2255 = vmatpush1.msra.mxu0 0.0
      %2256 = vmatprep.subr.mxu0 0.0
      %2257 = vmatpush1.msra.mxu0 0.0
      %2258 = vmatprep.subr.mxu0 0.0
      %2259 = vmatpush1.msra.mxu0 0.0
      %2260 = vmatprep.subr.mxu0 0.0
      %2261 = vmatpush1.msra.mxu0 0.0
      %2262 = vmatprep.subr.mxu0 0.0
      %2263 = vmatpush1.msra.mxu0 0.0
      %2264 = vmatprep.subr.mxu0 0.0
      %2265 = vmatpush1.msra.mxu0 0.0
      %2266 = vmatprep.subr.mxu0 0.0
      %2267 = vmatpush1.msra.mxu0 0.0
      %2268 = vmatprep.subr.mxu0 0.0
      %2269 = vmatpush1.msra.mxu0 0.0
      %2270 = vmatprep.subr.mxu0 0.0
      %2271 = vmatpush1.msra.mxu0 0.0
      %2272 = vmatprep.subr.mxu0 0.0
      %2273 = vmatpush1.msra.mxu0 0.0
      %2274 = vmatprep.subr.mxu0 0.0
      %2275 = vmatpush1.msra.mxu0 0.0
      %2276 = vmatprep.subr.mxu0 0.0
      %2277 = vmatpush1.msra.mxu0 0.0
      %2278 = vmatprep.subr.mxu0 0.0
      %2279 = vmatpush1.msra.mxu0 0.0
      %2280 = vmatprep.subr.mxu0 0.0
      %2281 = vmatpush1.msra.mxu0 0.0
      %2282 = vmatprep.subr.mxu0 0.0
      %2283 = vmatpush1.msra.mxu0 0.0
      %2284 = vmatprep.subr.mxu0 0.0
      %2285 = vmatpush1.msra.mxu0 0.0
      %2286 = vmatprep.mubr.f32.mxu0 0.0
      %2287 = vmatmul.mubr.f32.gmra.mrb[0].mxu0 %v2217
      %v2288 = vpop.f32.mrb[0].mxu0
      %v2289 = vadd.f32 0.0, %v2288
      %v2290 = vpop.f32.mrb[0].mxu0
      %2291 = vmatprep.mubr.f32.mxu0 0.0
      %2292 = vmatmul.mubr.f32.gmra.mrb[0].mxu0 %v2220
      %v2293 = vpop.f32.mrb[0].mxu0
      %v2294 = vadd.f32 0.0, %v2293
      %v2295 = vpop.f32.mrb[0].mxu0
      %2296 = vdwg.mxu0
      %v2297 = vadd.f32 %v578, %v2289
      %v2298 = vadd.f32 %v583, %v2294
      %v2299 = vmax.f32 %v2297, 0.0
      %v2300 = vmax.f32 %v2298, 0.0
      %2301 = vmatprep.subr.mxu0 0.0
      %2302 = vmatpush1.msra.mxu0 %v473
      %2303 = vmatprep.subr.mxu0 0.0
      %2304 = vmatpush1.msra.mxu0 %v474
      %2305 = vmatprep.subr.mxu0 0.0
      %2306 = vmatpush1.msra.mxu0 %v475
      %2307 = vmatprep.subr.mxu0 0.0
      %2308 = vmatpush1.msra.mxu0 %v476
      %2309 = vmatprep.subr.mxu0 0.0
      %2310 = vmatpush1.msra.mxu0 %v477
      %2311 = vmatprep.subr.mxu0 0.0
      %2312 = vmatpush1.msra.mxu0 %v478
      %2313 = vmatprep.subr.mxu0 0.0
      %2314 = vmatpush1.msra.mxu0 %v479
      %2315 = vmatprep.subr.mxu0 0.0
      %2316 = vmatpush1.msra.mxu0 %v480
      %2317 = vmatprep.subr.mxu0 0.0
      %2318 = vmatpush1.msra.mxu0 %v481
      %2319 = vmatprep.subr.mxu0 0.0
      %2320 = vmatpush1.msra.mxu0 %v482
      %2321 = vmatprep.subr.mxu0 0.0
      %2322 = vmatpush1.msra.mxu0 %v483
      %2323 = vmatprep.subr.mxu0 0.0
      %2324 = vmatpush1.msra.mxu0 %v484
      %2325 = vmatprep.subr.mxu0 0.0
      %2326 = vmatpush1.msra.mxu0 %v485
      %2327 = vmatprep.subr.mxu0 0.0
      %2328 = vmatpush1.msra.mxu0 %v486
      %2329 = vmatprep.subr.mxu0 0.0
      %2330 = vmatpush1.msra.mxu0 %v487
      %2331 = vmatprep.subr.mxu0 0.0
      %2332 = vmatpush1.msra.mxu0 %v488
      %2333 = vmatprep.subr.mxu0 0.0
      %2334 = vmatpush1.msra.mxu0 0.0
      %2335 = vmatprep.subr.mxu0 0.0
      %2336 = vmatpush1.msra.mxu0 0.0
      %2337 = vmatprep.subr.mxu0 0.0
      %2338 = vmatpush1.msra.mxu0 0.0
      %2339 = vmatprep.subr.mxu0 0.0
      %2340 = vmatpush1.msra.mxu0 0.0
      %2341 = vmatprep.subr.mxu0 0.0
      %2342 = vmatpush1.msra.mxu0 0.0
      %2343 = vmatprep.subr.mxu0 0.0
      %2344 = vmatpush1.msra.mxu0 0.0
      %2345 = vmatprep.subr.mxu0 0.0
      %2346 = vmatpush1.msra.mxu0 0.0
      %2347 = vmatprep.subr.mxu0 0.0
      %2348 = vmatpush1.msra.mxu0 0.0
      %2349 = vmatprep.subr.mxu0 0.0
      %2350 = vmatpush1.msra.mxu0 0.0
      %2351 = vmatprep.subr.mxu0 0.0
      %2352 = vmatpush1.msra.mxu0 0.0
      %2353 = vmatprep.subr.mxu0 0.0
      %2354 = vmatpush1.msra.mxu0 0.0
      %2355 = vmatprep.subr.mxu0 0.0
      %2356 = vmatpush1.msra.mxu0 0.0
      %2357 = vmatprep.subr.mxu0 0.0
      %2358 = vmatpush1.msra.mxu0 0.0
      %2359 = vmatprep.subr.mxu0 0.0
      %2360 = vmatpush1.msra.mxu0 0.0
      %2361 = vmatprep.subr.mxu0 0.0
      %2362 = vmatpush1.msra.mxu0 0.0
      %2363 = vmatprep.subr.mxu0 0.0
      %2364 = vmatpush1.msra.mxu0 0.0
      %2365 = vmatprep.mubr.f32.mxu0 0.0
      %2366 = vmatmul.mubr.f32.gmra.mrb[0].mxu0 %v2299
      %v2367 = vpop.f32.mrb[0].mxu0
      %v2368 = vadd.f32 %v815, %v2367
      %v2369 = vpop.f32.mrb[0].mxu0
      %2370 = vmatprep.mubr.f32.mxu0 0.0
      %2371 = vmatmul.mubr.f32.gmra.mrb[0].mxu0 %v2300
      %v2372 = vpop.f32.mrb[0].mxu0
      %v2373 = vadd.f32 %v815, %v2372
      %v2374 = vpop.f32.mrb[0].mxu0
      %2375 = vdwg.mxu0
      %v2376 = vmax.f32 %v2368, 0.0
      %v2377 = vmax.f32 %v2373, 0.0
      %v2378 = vmax.f32 %v2166, %v2376
      %v2379 = vmax.f32 %v2167, %v2377
      %v2380 = vsel %vm677, %v2210, inf
      %2381 = vmin.xlane.f32.xlu0 %v2380
      %v2382 = vpop.xlane.xlu0 %2381
      %v2383 = vsel %vm677, %v2211, inf
      %2384 = vmin.xlane.f32.xlu0 %v2383
      %v2385 = vpop.xlane.xlu0 %2384
      %vm2386 = vcmp.le.f32.partialorder %v2210, %v2382
      %vm2387 = vcmp.le.f32.partialorder %v2211, %v2385
      %v2388 = vsel %vm2386, %v470, 16
      %v2389 = vsel %vm2387, %v470, 16
      %v2390 = vsel %vm677, %v2388, 2147483647
      %v2391 = vand.u32 %v2390, 65535
      %v2392 = vshra.s32 %v2390, 16
      %v2393 = vcvt.s32.f32 %v2391
      %v2394 = vcvt.s32.f32 %v2392
      %2395 = vmin.xlane.f32.xlu0 %v2394
      %v2396 = vpop.xlane.xlu0 %2395
      %vm2397 = vcmp.eq.f32.partialorder %v2394, %v2396
      %v2398 = vsel %vm2397, %v2393, inf
      %2399 = vmin.xlane.f32.xlu0 %v2398
      %v2400 = vpop.xlane.xlu0 %2399
      %v2401 = vcvt.f32.s32 %v2400
      %v2402 = vcvt.f32.s32 %v2396
      %v2403 = vshll.u32 %v2402, 16
      %v2404 = vadd.s32 %v2403, %v2401
      %v2405 = vsel %vm677, %v2389, 2147483647
      %v2406 = vand.u32 %v2405, 65535
      %v2407 = vshra.s32 %v2405, 16
      %v2408 = vcvt.s32.f32 %v2406
      %v2409 = vcvt.s32.f32 %v2407
      %2410 = vmin.xlane.f32.xlu0 %v2409
      %v2411 = vpop.xlane.xlu0 %2410
      %vm2412 = vcmp.eq.f32.partialorder %v2409, %v2411
      %v2413 = vsel %vm2412, %v2408, inf
      %2414 = vmin.xlane.f32.xlu0 %v2413
      %v2415 = vpop.xlane.xlu0 %2414
      %v2416 = vcvt.f32.s32 %v2415
      %v2417 = vcvt.f32.s32 %v2411
      %v2418 = vshll.u32 %v2417, 16
      %v2419 = vadd.s32 %v2418, %v2416
      %vm2420 = vcmp.eq.s32.totalorder %v470, %v2404
      %vm2421 = vcmp.eq.s32.totalorder %v470, %v2419
      %v2422 = vsel %vm2420, 1, 0
      %v2423 = vsel %vm2421, 1, 0
      %v2424 = vcvt.s32.f32 %v2422
      %v2425 = vcvt.s32.f32 %v2423
      %v2427 = vsel %vm677, %v2424, 0
      %v2430 = vsel %vm677, %v2425, 0
      %2432 = vmatprep.subr.mxu0 0.0
      %2433 = vmatpush1.msra.mxu0 %v669
      %2434 = vmatprep.subr.mxu0 0.0
      %2435 = vmatpush1.msra.mxu0 %v674
      %2436 = vmatprep.subr.mxu0 0.0
      %2437 = vmatpush1.msra.mxu0 0.0
      %2438 = vmatprep.subr.mxu0 0.0
      %2439 = vmatpush1.msra.mxu0 0.0
      %2440 = vmatprep.subr.mxu0 0.0
      %2441 = vmatpush1.msra.mxu0 0.0
      %2442 = vmatprep.subr.mxu0 0.0
      %2443 = vmatpush1.msra.mxu0 0.0
      %2444 = vmatprep.subr.mxu0 0.0
      %2445 = vmatpush1.msra.mxu0 0.0
      %2446 = vmatprep.subr.mxu0 0.0
      %2447 = vmatpush1.msra.mxu0 0.0
      %2448 = vmatprep.subr.mxu0 0.0
      %2449 = vmatpush1.msra.mxu0 0.0
      %2450 = vmatprep.subr.mxu0 0.0
      %2451 = vmatpush1.msra.mxu0 0.0
      %2452 = vmatprep.subr.mxu0 0.0
      %2453 = vmatpush1.msra.mxu0 0.0
      %2454 = vmatprep.subr.mxu0 0.0
      %2455 = vmatpush1.msra.mxu0 0.0
      %2456 = vmatprep.subr.mxu0 0.0
      %2457 = vmatpush1.msra.mxu0 0.0
      %2458 = vmatprep.subr.mxu0 0.0
      %2459 = vmatpush1.msra.mxu0 0.0
      %2460 = vmatprep.subr.mxu0 0.0
      %2461 = vmatpush1.msra.mxu0 0.0
      %2462 = vmatprep.subr.mxu0 0.0
      %2463 = vmatpush1.msra.mxu0 0.0
      %2464 = vmatprep.subr.mxu0 0.0
      %2465 = vmatpush1.msra.mxu0 0.0
      %2466 = vmatprep.subr.mxu0 0.0
      %2467 = vmatpush1.msra.mxu0 0.0
      %2468 = vmatprep.subr.mxu0 0.0
      %2469 = vmatpush1.msra.mxu0 0.0
      %2470 = vmatprep.subr.mxu0 0.0
      %2471 = vmatpush1.msra.mxu0 0.0
      %2472 = vmatprep.subr.mxu0 0.0
      %2473 = vmatpush1.msra.mxu0 0.0
      %2474 = vmatprep.subr.mxu0 0.0
      %2475 = vmatpush1.msra.mxu0 0.0
      %2476 = vmatprep.subr.mxu0 0.0
      %2477 = vmatpush1.msra.mxu0 0.0
      %2478 = vmatprep.subr.mxu0 0.0
      %2479 = vmatpush1.msra.mxu0 0.0
      %2480 = vmatprep.subr.mxu0 0.0
      %2481 = vmatpush1.msra.mxu0 0.0
      %2482 = vmatprep.subr.mxu0 0.0
      %2483 = vmatpush1.msra.mxu0 0.0
      %2484 = vmatprep.subr.mxu0 0.0
      %2485 = vmatpush1.msra.mxu0 0.0
      %2486 = vmatprep.subr.mxu0 0.0
      %2487 = vmatpush1.msra.mxu0 0.0
      %2488 = vmatprep.subr.mxu0 0.0
      %2489 = vmatpush1.msra.mxu0 0.0
      %2490 = vmatprep.subr.mxu0 0.0
      %2491 = vmatpush1.msra.mxu0 0.0
      %2492 = vmatprep.subr.mxu0 0.0
      %2493 = vmatpush1.msra.mxu0 0.0
      %2494 = vmatprep.subr.mxu0 0.0
      %2495 = vmatpush1.msra.mxu0 0.0
      %2496 = vmatprep.mubr.f32.mxu0 0.0
      %2497 = vmatmul.mubr.f32.gmra.mrb[0].mxu0 %v2427
      %v2498 = vpop.f32.mrb[0].mxu0
      %v2499 = vadd.f32 0.0, %v2498
      %v2500 = vpop.f32.mrb[0].mxu0
      %2501 = vmatprep.mubr.f32.mxu0 0.0
      %2502 = vmatmul.mubr.f32.gmra.mrb[0].mxu0 %v2430
      %v2503 = vpop.f32.mrb[0].mxu0
      %v2504 = vadd.f32 0.0, %v2503
      %v2505 = vpop.f32.mrb[0].mxu0
      %2506 = vdwg.mxu0
      %v2507 = vadd.f32 %v578, %v2499
      %v2508 = vadd.f32 %v583, %v2504
      %v2509 = vmax.f32 %v2507, 0.0
      %v2510 = vmax.f32 %v2508, 0.0
      %2511 = vmatprep.subr.mxu0 0.0
      %2512 = vmatpush1.msra.mxu0 %v473
      %2513 = vmatprep.subr.mxu0 0.0
      %2514 = vmatpush1.msra.mxu0 %v474
      %2515 = vmatprep.subr.mxu0 0.0
      %2516 = vmatpush1.msra.mxu0 %v475
      %2517 = vmatprep.subr.mxu0 0.0
      %2518 = vmatpush1.msra.mxu0 %v476
      %2519 = vmatprep.subr.mxu0 0.0
      %2520 = vmatpush1.msra.mxu0 %v477
      %2521 = vmatprep.subr.mxu0 0.0
      %2522 = vmatpush1.msra.mxu0 %v478
      %2523 = vmatprep.subr.mxu0 0.0
      %2524 = vmatpush1.msra.mxu0 %v479
      %2525 = vmatprep.subr.mxu0 0.0
      %2526 = vmatpush1.msra.mxu0 %v480
      %2527 = vmatprep.subr.mxu0 0.0
      %2528 = vmatpush1.msra.mxu0 %v481
      %2529 = vmatprep.subr.mxu0 0.0
      %2530 = vmatpush1.msra.mxu0 %v482
      %2531 = vmatprep.subr.mxu0 0.0
      %2532 = vmatpush1.msra.mxu0 %v483
      %2533 = vmatprep.subr.mxu0 0.0
      %2534 = vmatpush1.msra.mxu0 %v484
      %2535 = vmatprep.subr.mxu0 0.0
      %2536 = vmatpush1.msra.mxu0 %v485
      %2537 = vmatprep.subr.mxu0 0.0
      %2538 = vmatpush1.msra.mxu0 %v486
      %2539 = vmatprep.subr.mxu0 0.0
      %2540 = vmatpush1.msra.mxu0 %v487
      %2541 = vmatprep.subr.mxu0 0.0
      %2542 = vmatpush1.msra.mxu0 %v488
      %2543 = vmatprep.subr.mxu0 0.0
      %2544 = vmatpush1.msra.mxu0 0.0
      %2545 = vmatprep.subr.mxu0 0.0
      %2546 = vmatpush1.msra.mxu0 0.0
      %2547 = vmatprep.subr.mxu0 0.0
      %2548 = vmatpush1.msra.mxu0 0.0
      %2549 = vmatprep.subr.mxu0 0.0
      %2550 = vmatpush1.msra.mxu0 0.0
      %2551 = vmatprep.subr.mxu0 0.0
      %2552 = vmatpush1.msra.mxu0 0.0
      %2553 = vmatprep.subr.mxu0 0.0
      %2554 = vmatpush1.msra.mxu0 0.0
      %2555 = vmatprep.subr.mxu0 0.0
      %2556 = vmatpush1.msra.mxu0 0.0
      %2557 = vmatprep.subr.mxu0 0.0
      %2558 = vmatpush1.msra.mxu0 0.0
      %2559 = vmatprep.subr.mxu0 0.0
      %2560 = vmatpush1.msra.mxu0 0.0
      %2561 = vmatprep.subr.mxu0 0.0
      %2562 = vmatpush1.msra.mxu0 0.0
      %2563 = vmatprep.subr.mxu0 0.0
      %2564 = vmatpush1.msra.mxu0 0.0
      %2565 = vmatprep.subr.mxu0 0.0
      %2566 = vmatpush1.msra.mxu0 0.0
      %2567 = vmatprep.subr.mxu0 0.0
      %2568 = vmatpush1.msra.mxu0 0.0
      %2569 = vmatprep.subr.mxu0 0.0
      %2570 = vmatpush1.msra.mxu0 0.0
      %2571 = vmatprep.subr.mxu0 0.0
      %2572 = vmatpush1.msra.mxu0 0.0
      %2573 = vmatprep.subr.mxu0 0.0
      %2574 = vmatpush1.msra.mxu0 0.0
      %2575 = vmatprep.mubr.f32.mxu0 0.0
      %2576 = vmatmul.mubr.f32.gmra.mrb[0].mxu0 %v2509
      %v2577 = vpop.f32.mrb[0].mxu0
      %v2578 = vadd.f32 %v815, %v2577
      %v2579 = vpop.f32.mrb[0].mxu0
      %2580 = vmatprep.mubr.f32.mxu0 0.0
      %2581 = vmatmul.mubr.f32.gmra.mrb[0].mxu0 %v2510
      %v2582 = vpop.f32.mrb[0].mxu0
      %v2583 = vadd.f32 %v815, %v2582
      %v2584 = vpop.f32.mrb[0].mxu0
      %2585 = vdwg.mxu0
      %v2586 = vmax.f32 %v2578, 0.0
      %v2587 = vmax.f32 %v2583, 0.0
      %v2588 = vmax.f32 %v2378, %v2586
      %v2589 = vmax.f32 %v2379, %v2587
      %2590 = vst [vmem:[%s377] sm:$0xff] %v2588
      %2591 = vst [vmem:[%s377 + $0x8] sm:$0xff] %v2589
      %s2592 = smul.u32 2, %s24
      %p2593 = scmp.lt.s32.totalorder %s23, 1
      %s2594 = scalar_select %p2593, %s23, 1
      %p2595 = scmp.lt.s32.totalorder %s2592, 1
      %s2596 = scalar_select %p2595, %s2592, 1
      %s2597 = smul.addr %s2594, 2
      %s2598 = sadd.s32 %s2596, %s2597
      %s2599 = smul.addr %s2598, 8
      %s2600 = scalar_lea.vmem %s8, %s2599
      // Predicated region
      $region53: #{plain_dyn_block2d_forward.1} parent=51 // pred_check
        %p2601 = pneg %p236
      $region54: #{plain_dyn_block2d_forward.1} parent=51 // pred_check_branch
        %2603 = sbr.rel (%p2601) target = $region56
      $region55: #{plain_dyn_block2d_forward.1} parent=51 // pred_region
        %s2604 = smul.u32 2, %s24
      $region56: #{plain_dyn_block2d_forward.1} parent=51 // pred_fallthru
        _
    $region52: #{plain_dyn_block2d_forward.1} parent=5 // pred_fallthru
      _
    %p2605 = scmp.le.s32.totalorder 2, %s14
    // Predicated region
    $region57: #{plain_dyn_block2d_forward.1} parent=5 // pred_check
      %p2606 = pneg %p2605
    $region58: #{plain_dyn_block2d_forward.1} parent=5 // pred_check_branch
      %2608 = sbr.rel (%p2606) target = $region60
    $region59: #{plain_dyn_block2d_forward.1} parent=5 // pred_region
      %s2609 = ssub.s32 %s14, 2
      // Predicated region
      $region61: #{plain_dyn_block2d_forward.1} parent=59 // pred_check
        %p2610 = pneg %p242
      $region62: #{plain_dyn_block2d_forward.1} parent=59 // pred_check_branch
        %2612 = sbr.rel (%p2610) target = $region64
      $region63: #{plain_dyn_block2d_forward.1} parent=59 // pred_region
        %s2613 = smul.u32 2, %s26
        %p2614 = scmp.lt.s32.totalorder %s25, 1
        %s2615 = scalar_select %p2614, %s25, 1
        %p2616 = scmp.lt.s32.totalorder %s2613, 1
        %s2617 = scalar_select %p2616, %s2613, 1
        %s2618 = smul.addr %s2615, 2
        %s2619 = sadd.s32 %s2617, %s2618
        %s2620 = smul.addr %s2619, 8
        %s2621 = scalar_lea.vmem %s8, %s2620
      $region64: #{plain_dyn_block2d_forward.1} parent=59 // pred_fallthru
        _
    $region60: #{plain_dyn_block2d_forward.1} parent=5 // pred_fallthru
      _
  $region6: #{plain_dyn_block2d_forward.1} parent=0 // loop_footer
    %s18 = sadd.s32 1, %s14
  $region7: #{plain_dyn_block2d_forward.1} parent=0 // loop_footer_branch
    %13 = sbr.rel target = $region3
  $region8: #{plain_dyn_block2d_forward.1} parent=0 // loop_exit
    _

</llo_original>
